<compile_context>
chip_gen: v6e
topology: v6e:2x2x1
jax: 0.10.0
libtpu: 0.0.40
codegen_flags: <defaults>
</compile_context>

<pallas_src>
import functools
import math

import jax
import jax.numpy as jnp
from jax.experimental import pallas as pl
from jax.experimental.pallas import tpu as pltpu  # noqa: F401  (kept for TPU backend)

# ----------------------------- model dims ----------------------------------
B = 2          # batch
S = 8          # sequence length
D_MODEL = 32   # layer.size
N_HEADS = 4
D_K = D_MODEL // N_HEADS
D_FF = 64
N_LAYERS = 2   # "N" of Encoder (small for the demo)
EPS = 1e-6

# 128-lane-aligned offsets inside the packed matrix slab [L, D_MODEL, WBIG_W]:
#   [0 : 3D)         fused Wqkv   (96 lanes)
#   [128 : 128+D)    Wo           (32 lanes)
#   [256 : 256+D_FF) W1           (64 lanes)
OFF_WQKV = 0
OFF_WO = 128
OFF_W1 = 256
WBIG_W = 384
assert OFF_WQKV + 3 * D_MODEL <= OFF_WO
assert OFF_WO + D_MODEL <= OFF_W1
assert OFF_W1 + D_FF <= WBIG_W

# Rows of the bias/LN slab [L, 8, 128]:
ROW_LN1_G, ROW_LN1_B, ROW_BO, ROW_LN2_G, ROW_LN2_B, ROW_B2, ROW_B1, ROW_BQKV = range(8)
VEC_W = 128


# ----------------------------- fused encoder kernel ------------------------
def _encoder_kernel(x_ref, mask_ref, wbig_ref, w2_ref, vecs_ref, ngb_ref, o_ref,
                    *, n_layers, batch, seq, n_heads, d_k, d_ff, eps):
    d_model = n_heads * d_k

    def layer_norm(x, g, b):
        mean = jnp.mean(x, axis=-1, keepdims=True)
        xc = x - mean
        # torch.std(-1) is Bessel-corrected (ddof = 1); the module computes
        # a_2 * (x-mean) / sqrt(std^2 + eps) + b_2  ==  g * xc * rsqrt(var+eps) + b.
        var = jnp.sum(xc * xc, axis=-1, keepdims=True) * (1.0 / (x.shape[-1] - 1))
        return g * xc * jax.lax.rsqrt(var + eps) + b

    x = x_ref[...]                     # residual stream, [B*S, D] (register value)
    madd_all = mask_ref[...]           # [B, S] additive mask (0 / -1e9)
    ngb = ngb_ref[...]                 # [2, D] final-norm gamma/beta

    for layer in range(n_layers):      # static unroll (grid collapsed)
        wb = wbig_ref[layer]           # [D, WBIG_W]
        vv = vecs_ref[layer]           # [8, 128]

        wqkv = wb[:, OFF_WQKV:OFF_WQKV + 3 * d_model]      # [D, 3D] (Wq pre-scaled)
        wo = wb[:, OFF_WO:OFF_WO + d_model]                # [D, D]
        w1 = wb[:, OFF_W1:OFF_W1 + d_ff]                   # [D, D_FF]
        w2 = w2_ref[layer]                                 # [D_FF, D]

        ln1_g = vv[ROW_LN1_G:ROW_LN1_G + 1, :d_model]
        ln1_b = vv[ROW_LN1_B:ROW_LN1_B + 1, :d_model]
        bo = vv[ROW_BO:ROW_BO + 1, :d_model]
        ln2_g = vv[ROW_LN2_G:ROW_LN2_G + 1, :d_model]
        ln2_b = vv[ROW_LN2_B:ROW_LN2_B + 1, :d_model]
        b2 = vv[ROW_B2:ROW_B2 + 1, :d_model]
        b1 = vv[ROW_B1:ROW_B1 + 1, :d_ff]
        bqkv = vv[ROW_BQKV:ROW_BQKV + 1, :3 * d_model]

        # ------------- sublayer 1: x + SelfAttn(LN1(x), mask) ---------------
        xn = layer_norm(x, ln1_g, ln1_b)
        # Fused Q/K/V projection: a single [B*S, D] @ [D, 3D] MXU pass.
        # (1/sqrt(d_k) already folded into the Wq/bq columns at pack time.)
        qkv = jnp.dot(xn, wqkv, preferred_element_type=jnp.float32) + bqkv  # [B*S, 3D]

        rows = []
        for b in range(batch):                                  # static unroll
            madd = madd_all[b:b + 1, :]                         # [1, S]
            qkv_b = qkv[b * seq:(b + 1) * seq, :]               # [S, 3D]
            heads = []
            for h in range(n_heads):                            # static unroll
                q = qkv_b[:, h * d_k:(h + 1) * d_k]
                k = qkv_b[:, d_model + h * d_k:d_model + (h + 1) * d_k]
                v = qkv_b[:, 2 * d_model + h * d_k:2 * d_model + (h + 1) * d_k]
                # q @ k^T without an explicit transpose (contract last dims).
                s = jax.lax.dot_general(q, k, (((1,), (1,)), ((), ())),
                                        preferred_element_type=jnp.float32)
                s = s + madd                                    # additive mask
                s = s - jnp.max(s, axis=-1, keepdims=True)
                p = jnp.exp(s)
                p = p * pl.reciprocal(jnp.sum(p, axis=-1, keepdims=True),
                                      approx=False)
                heads.append(jnp.dot(p, v, preferred_element_type=jnp.float32))
            # Concatenate heads and do ONE [S, D] @ [D, D] output projection.
            o_cat = jnp.concatenate(heads, axis=-1)             # [S, D]
            attn = jnp.dot(o_cat, wo, preferred_element_type=jnp.float32) + bo
            rows.append(x[b * seq:(b + 1) * seq, :] + attn)
        x = jnp.concatenate(rows, axis=0)                       # [B*S, D]

        # ------------- sublayer 2: x + FFN(LN2(x)) ---------------------------
        xn2 = layer_norm(x, ln2_g, ln2_b)
        h1 = jnp.dot(xn2, w1, preferred_element_type=jnp.float32) + b1
        h1 = jnp.maximum(h1, 0.0)
        x = x + jnp.dot(h1, w2, preferred_element_type=jnp.float32) + b2

    # ------------- final Encoder.norm, single HBM writeback ------------------
    o_ref[...] = layer_norm(x, ngb[0:1, :], ngb[1:2, :])


# ----------------------------- wrapper --------------------------------------
@jax.jit
def encoder_forward(packed, x, mask):
    """x: [B, S, D]; mask: [B, 1, S] (1 = attend, 0 = masked)."""
    b, s, d = x.shape
    n_layers = packed["wbig"].shape[0]
    d_ff = packed["w2"].shape[1]
    x2d = x.reshape(b * s, d)
    # Additive mask, computed once: 0 where attended, -1e9 where masked.
    madd = jnp.where(mask[:, 0, :] > 0, 0.0, -1e9).astype(jnp.float32)  # [B, S]

    kernel = functools.partial(
        _encoder_kernel, n_layers=n_layers, batch=b, seq=s,
        n_heads=N_HEADS, d_k=D_K, d_ff=d_ff, eps=EPS)

    # No grid: the whole (tiny) problem runs as a single kernel invocation;
    # all 6 inputs are whole-array VMEM blocks (one DMA each).
    out2d = pl.pallas_call(
        kernel,
        out_shape=jax.ShapeDtypeStruct((b * s, d), jnp.float32),
    )(x2d, madd, packed["wbig"], packed["w2"], packed["vecs"], packed["norm_gb"])
    return out2d.reshape(b, s, d)


# ----------------------------- parameters -----------------------------------
def init_params(key):
    def dense(k, dout, din):
        bound = 1.0 / jnp.sqrt(jnp.float32(din))
        kw, kb = jax.random.split(k)
        w = jax.random.uniform(kw, (dout, din), jnp.float32, -bound, bound)
        b = jax.random.uniform(kb, (dout,), jnp.float32, -bound, bound)
        return w, b

    layers = []
    for _ in range(N_LAYERS):
        key, *ks = jax.random.split(key, 7)
        wq, bq = dense(ks[0], D_MODEL, D_MODEL)
        wk, bk = dense(ks[1], D_MODEL, D_MODEL)
        wv, bv = dense(ks[2], D_MODEL, D_MODEL)
        wo, bo = dense(ks[3], D_MODEL, D_MODEL)
        w1, b1 = dense(ks[4], D_FF, D_MODEL)
        w2, b2 = dense(ks[5], D_MODEL, D_FF)
        layers.append(dict(
            ln1_g=jnp.ones((D_MODEL,), jnp.float32),
            ln1_b=jnp.zeros((D_MODEL,), jnp.float32),
            wq=wq, bq=bq, wk=wk, bk=bk, wv=wv, bv=bv, wo=wo, bo=bo,
            ln2_g=jnp.ones((D_MODEL,), jnp.float32),
            ln2_b=jnp.zeros((D_MODEL,), jnp.float32),
            w1=w1, b1=b1, w2=w2, b2=b2,
        ))
    return dict(
        layers=layers,
        norm_g=jnp.ones((D_MODEL,), jnp.float32),   # Encoder.norm.a_2
        norm_b=jnp.zeros((D_MODEL,), jnp.float32),  # Encoder.norm.b_2
    )


def pack_params(params):
    """One-time packing:
       * stack per-layer params with a leading layer axis,
       * pre-transpose all weights to [din, dout],
       * fuse Q/K/V and fold the 1/sqrt(d_k) scale into Wq / bq,
       * pack matrices into a 128-lane-aligned slab and biases/LN into one
         [L, 8, 128] slab (few DMA descriptors, no lane-offset slices)."""
    layers = params["layers"]
    n = len(layers)
    scale = 1.0 / math.sqrt(D_K)

    wbig = jnp.zeros((n, D_MODEL, WBIG_W), jnp.float32)
    w2 = jnp.zeros((n, D_FF, D_MODEL), jnp.float32)
    vecs = jnp.zeros((n, 8, VEC_W), jnp.float32)

    for i, lp in enumerate(layers):
        wqkv = jnp.concatenate(
            [lp["wq"].T * scale, lp["wk"].T, lp["wv"].T], axis=1)     # [D, 3D]
        wbig = wbig.at[i, :, OFF_WQKV:OFF_WQKV + 3 * D_MODEL].set(wqkv)
        wbig = wbig.at[i, :, OFF_WO:OFF_WO + D_MODEL].set(lp["wo"].T)
        wbig = wbig.at[i, :, OFF_W1:OFF_W1 + D_FF].set(lp["w1"].T)
        w2 = w2.at[i].set(lp["w2"].T)                                  # [D_FF, D]

        vecs = vecs.at[i, ROW_LN1_G, :D_MODEL].set(lp["ln1_g"])
        vecs = vecs.at[i, ROW_LN1_B, :D_MODEL].set(lp["ln1_b"])
        vecs = vecs.at[i, ROW_BO, :D_MODEL].set(lp["bo"])
        vecs = vecs.at[i, ROW_LN2_G, :D_MODEL].set(lp["ln2_g"])
        vecs = vecs.at[i, ROW_LN2_B, :D_MODEL].set(lp["ln2_b"])
        vecs = vecs.at[i, ROW_B2, :D_MODEL].set(lp["b2"])
        vecs = vecs.at[i, ROW_B1, :D_FF].set(lp["b1"])
        vecs = vecs.at[i, ROW_BQKV, :3 * D_MODEL].set(
            jnp.concatenate([lp["bq"] * scale, lp["bk"], lp["bv"]]))

    norm_gb = jnp.stack([params["norm_g"], params["norm_b"]])          # [2, D]
    return dict(wbig=wbig, w2=w2, vecs=vecs, norm_gb=norm_gb)


# ----------------------------- pure-JAX reference ---------------------------
def encoder_reference(params, x, mask):
    def ln(t, g, b):
        mean = t.mean(-1, keepdims=True)
        var = ((t - mean) ** 2).sum(-1, keepdims=True) / (t.shape[-1] - 1)
        return g * (t - mean) / jnp.sqrt(var + EPS) + b

    bsz, s, d = x.shape
    for lp in params["layers"]:
        xn = ln(x, lp["ln1_g"], lp["ln1_b"])
        def proj(w, b_):
            return (xn @ w.T + b_).reshape(bsz, s, N_HEADS, D_K).transpose(0, 2, 1, 3)
        q, k, v = proj(lp["wq"], lp["bq"]), proj(lp["wk"], lp["bk"]), proj(lp["wv"], lp["bv"])
        scores = jnp.einsum("bhqd,bhkd->bhqk", q, k) / math.sqrt(D_K)
        scores = jnp.where(mask[:, None, :, :] == 0, -1e9, scores)
        p = jax.nn.softmax(scores, axis=-1)
        attn = jnp.einsum("bhqk,bhkd->bhqd", p, v).transpose(0, 2, 1, 3).reshape(bsz, s, d)
        x = x + attn @ lp["wo"].T + lp["bo"]
        xn = ln(x, lp["ln2_g"], lp["ln2_b"])
        h = jnp.maximum(xn @ lp["w1"].T + lp["b1"], 0.0)
        x = x + h @ lp["w2"].T + lp["b2"]
    return ln(x, params["norm_g"], params["norm_b"])


# ----------------------------- demo ------------------------------------------
if __name__ == "__main__":
    key = jax.random.PRNGKey(0)
    kp, kx = jax.random.split(key)
    params = init_params(kp)
    packed = pack_params(params)

    x = jax.random.normal(kx, (B, S, D_MODEL), jnp.float32)
    mask = jnp.ones((B, 1, S), jnp.float32)
    mask = mask.at[1, 0, 6:].set(0.0)        # mask last 2 key positions of batch 1

    out = encoder_forward(packed, x, mask)
    out = jax.block_until_ready(out)

    assert out.shape == (B, S, D_MODEL)
    assert bool(jnp.all(jnp.isfinite(out)))

    # Cross-check the fused kernel against a pure-JAX reference of the module.
    ref = encoder_reference(params, x, mask)
    err = float(jnp.max(jnp.abs(out - ref)))
    assert err < 5e-2, f"max abs error vs reference: {err}"

    print("KERNEL_OK")
</pallas_src>

<mosaic_0001>
module attributes {stable_mosaic.version = 11 : i64} {
  func.func @_encoder_kernel(%arg0: memref<16x32xf32, #tpu.memory_space<vmem>>, %arg1: memref<2x8xf32, #tpu.memory_space<vmem>>, %arg2: memref<2x32x384xf32, #tpu.memory_space<vmem>>, %arg3: memref<2x64x32xf32, #tpu.memory_space<vmem>>, %arg4: memref<2x8x128xf32, #tpu.memory_space<vmem>>, %arg5: memref<2x32xf32, #tpu.memory_space<vmem>>, %arg6: memref<16x32xf32, #tpu.memory_space<vmem>>) attributes {dimension_semantics = [], scalar_prefetch = 0 : i64, scratch_operands = 0 : i64, tpu.core_type = #tpu.core_type<tc>} {
    %c0 = arith.constant 0 : index
    %c0_0 = arith.constant 0 : index
    %0 = vector.load %arg0[%c0, %c0_0] : memref<16x32xf32, #tpu.memory_space<vmem>>, vector<16x32xf32>
    %c0_1 = arith.constant 0 : index
    %c0_2 = arith.constant 0 : index
    %1 = vector.load %arg1[%c0_1, %c0_2] : memref<2x8xf32, #tpu.memory_space<vmem>>, vector<2x8xf32>
    %c0_3 = arith.constant 0 : index
    %c0_4 = arith.constant 0 : index
    %2 = vector.load %arg5[%c0_3, %c0_4] : memref<2x32xf32, #tpu.memory_space<vmem>>, vector<2x32xf32>
    %c0_5 = arith.constant 0 : index
    %c0_6 = arith.constant 0 : index
    %c0_7 = arith.constant 0 : index
    %3 = vector.load %arg2[%c0_5, %c0_6, %c0_7] : memref<2x32x384xf32, #tpu.memory_space<vmem>>, vector<1x32x384xf32>
    %4 = vector.shape_cast %3 : vector<1x32x384xf32> to vector<32x384xf32>
    %c0_8 = arith.constant 0 : index
    %c0_9 = arith.constant 0 : index
    %c0_10 = arith.constant 0 : index
    %5 = vector.load %arg4[%c0_8, %c0_9, %c0_10] : memref<2x8x128xf32, #tpu.memory_space<vmem>>, vector<1x8x128xf32>
    %6 = vector.shape_cast %5 : vector<1x8x128xf32> to vector<8x128xf32>
    %7 = vector.extract_strided_slice %4 {offsets = [0, 0], sizes = [32, 96], strides = [1, 1]} : vector<32x384xf32> to vector<32x96xf32>
    %8 = vector.extract_strided_slice %4 {offsets = [0, 128], sizes = [32, 32], strides = [1, 1]} : vector<32x384xf32> to vector<32x32xf32>
    %9 = vector.extract_strided_slice %4 {offsets = [0, 256], sizes = [32, 64], strides = [1, 1]} : vector<32x384xf32> to vector<32x64xf32>
    %c0_11 = arith.constant 0 : index
    %c0_12 = arith.constant 0 : index
    %c0_13 = arith.constant 0 : index
    %10 = vector.load %arg3[%c0_11, %c0_12, %c0_13] : memref<2x64x32xf32, #tpu.memory_space<vmem>>, vector<1x64x32xf32>
    %11 = vector.shape_cast %10 : vector<1x64x32xf32> to vector<64x32xf32>
    %12 = vector.extract_strided_slice %6 {offsets = [0, 0], sizes = [1, 32], strides = [1, 1]} : vector<8x128xf32> to vector<1x32xf32>
    %13 = vector.extract_strided_slice %6 {offsets = [1, 0], sizes = [1, 32], strides = [1, 1]} : vector<8x128xf32> to vector<1x32xf32>
    %14 = vector.extract_strided_slice %6 {offsets = [2, 0], sizes = [1, 32], strides = [1, 1]} : vector<8x128xf32> to vector<1x32xf32>
    %15 = vector.extract_strided_slice %6 {offsets = [3, 0], sizes = [1, 32], strides = [1, 1]} : vector<8x128xf32> to vector<1x32xf32>
    %16 = vector.extract_strided_slice %6 {offsets = [4, 0], sizes = [1, 32], strides = [1, 1]} : vector<8x128xf32> to vector<1x32xf32>
    %17 = vector.extract_strided_slice %6 {offsets = [5, 0], sizes = [1, 32], strides = [1, 1]} : vector<8x128xf32> to vector<1x32xf32>
    %18 = vector.extract_strided_slice %6 {offsets = [6, 0], sizes = [1, 64], strides = [1, 1]} : vector<8x128xf32> to vector<1x64xf32>
    %19 = vector.extract_strided_slice %6 {offsets = [7, 0], sizes = [1, 96], strides = [1, 1]} : vector<8x128xf32> to vector<1x96xf32>
    %cst = arith.constant dense<0.000000e+00> : vector<16xf32>
    %20 = vector.multi_reduction <add>, %0, %cst [1] : vector<16x32xf32> to vector<16xf32>
    %21 = vector.shape_cast %20 : vector<16xf32> to vector<16x1xf32>
    %cst_14 = arith.constant 3.200000e+01 : f32
    %22 = vector.broadcast %cst_14 : f32 to vector<16x1xf32>
    %23 = arith.divf %21, %22 : vector<16x1xf32>
    %24 = vector.broadcast %23 : vector<16x1xf32> to vector<16x32xf32>
    %25 = arith.subf %0, %24 : vector<16x32xf32>
    %26 = arith.mulf %25, %25 : vector<16x32xf32>
    %cst_15 = arith.constant dense<0.000000e+00> : vector<16xf32>
    %27 = vector.multi_reduction <add>, %26, %cst_15 [1] : vector<16x32xf32> to vector<16xf32>
    %28 = vector.shape_cast %27 : vector<16xf32> to vector<16x1xf32>
    %cst_16 = arith.constant 0.0322580636 : f32
    %29 = vector.broadcast %cst_16 : f32 to vector<16x1xf32>
    %30 = arith.mulf %28, %29 : vector<16x1xf32>
    %31 = vector.broadcast %12 : vector<1x32xf32> to vector<16x32xf32>
    %32 = arith.mulf %31, %25 : vector<16x32xf32>
    %cst_17 = arith.constant 9.99999997E-7 : f32
    %33 = vector.broadcast %cst_17 : f32 to vector<16x1xf32>
    %34 = arith.addf %30, %33 : vector<16x1xf32>
    %35 = math.rsqrt %34 : vector<16x1xf32>
    %36 = vector.broadcast %35 : vector<16x1xf32> to vector<16x32xf32>
    %37 = arith.mulf %32, %36 : vector<16x32xf32>
    %38 = vector.broadcast %13 : vector<1x32xf32> to vector<16x32xf32>
    %39 = arith.addf %37, %38 : vector<16x32xf32>
    %cst_18 = arith.constant dense<0.000000e+00> : vector<16x96xf32>
    %40 = tpu.matmul %39, %7, %cst_18 {dimension_numbers = #tpu.dot_dimension_numbers<[1], [0], [0], [1], [0, 0, 1, 1], [], []>} : vector<16x32xf32>, vector<32x96xf32>, vector<16x96xf32> -> vector<16x96xf32>
    %41 = vector.broadcast %19 : vector<1x96xf32> to vector<16x96xf32>
    %42 = arith.addf %40, %41 : vector<16x96xf32>
    %43 = vector.extract_strided_slice %1 {offsets = [0, 0], sizes = [1, 8], strides = [1, 1]} : vector<2x8xf32> to vector<1x8xf32>
    %44 = vector.extract_strided_slice %42 {offsets = [0, 0], sizes = [8, 96], strides = [1, 1]} : vector<16x96xf32> to vector<8x96xf32>
    %45 = vector.extract_strided_slice %44 {offsets = [0, 0], sizes = [8, 8], strides = [1, 1]} : vector<8x96xf32> to vector<8x8xf32>
    %46 = vector.extract_strided_slice %44 {offsets = [0, 32], sizes = [8, 8], strides = [1, 1]} : vector<8x96xf32> to vector<8x8xf32>
    %47 = vector.extract_strided_slice %44 {offsets = [0, 64], sizes = [8, 8], strides = [1, 1]} : vector<8x96xf32> to vector<8x8xf32>
    %cst_19 = arith.constant dense<0.000000e+00> : vector<8x8xf32>
    %48 = tpu.matmul %45, %46, %cst_19 {dimension_numbers = #tpu.dot_dimension_numbers<[1], [1], [0], [0], [0, 0, 1, 0], [], []>} : vector<8x8xf32>, vector<8x8xf32>, vector<8x8xf32> -> vector<8x8xf32>
    %49 = vector.broadcast %43 : vector<1x8xf32> to vector<8x8xf32>
    %50 = arith.addf %48, %49 : vector<8x8xf32>
    %cst_20 = arith.constant dense<0xFF800000> : vector<8xf32>
    %51 = vector.multi_reduction <maximumf>, %50, %cst_20 [1] : vector<8x8xf32> to vector<8xf32>
    %52 = vector.shape_cast %51 : vector<8xf32> to vector<8x1xf32>
    %53 = vector.broadcast %52 : vector<8x1xf32> to vector<8x8xf32>
    %54 = arith.subf %50, %53 : vector<8x8xf32>
    %55 = math.exp %54 : vector<8x8xf32>
    %cst_21 = arith.constant dense<0.000000e+00> : vector<8xf32>
    %56 = vector.multi_reduction <add>, %55, %cst_21 [1] : vector<8x8xf32> to vector<8xf32>
    %57 = vector.shape_cast %56 : vector<8xf32> to vector<8x1xf32>
    %58 = tpu.reciprocal %57 : vector<8x1xf32> -> vector<8x1xf32>
    %59 = vector.broadcast %58 : vector<8x1xf32> to vector<8x8xf32>
    %60 = arith.mulf %55, %59 : vector<8x8xf32>
    %cst_22 = arith.constant dense<0.000000e+00> : vector<8x8xf32>
    %61 = tpu.matmul %60, %47, %cst_22 {dimension_numbers = #tpu.dot_dimension_numbers<[1], [0], [0], [1], [0, 0, 1, 1], [], []>} : vector<8x8xf32>, vector<8x8xf32>, vector<8x8xf32> -> vector<8x8xf32>
    %62 = vector.extract_strided_slice %44 {offsets = [0, 8], sizes = [8, 8], strides = [1, 1]} : vector<8x96xf32> to vector<8x8xf32>
    %63 = vector.extract_strided_slice %44 {offsets = [0, 40], sizes = [8, 8], strides = [1, 1]} : vector<8x96xf32> to vector<8x8xf32>
    %64 = vector.extract_strided_slice %44 {offsets = [0, 72], sizes = [8, 8], strides = [1, 1]} : vector<8x96xf32> to vector<8x8xf32>
    %cst_23 = arith.constant dense<0.000000e+00> : vector<8x8xf32>
    %65 = tpu.matmul %62, %63, %cst_23 {dimension_numbers = #tpu.dot_dimension_numbers<[1], [1], [0], [0], [0, 0, 1, 0], [], []>} : vector<8x8xf32>, vector<8x8xf32>, vector<8x8xf32> -> vector<8x8xf32>
    %66 = vector.broadcast %43 : vector<1x8xf32> to vector<8x8xf32>
    %67 = arith.addf %65, %66 : vector<8x8xf32>
    %cst_24 = arith.constant dense<0xFF800000> : vector<8xf32>
    %68 = vector.multi_reduction <maximumf>, %67, %cst_24 [1] : vector<8x8xf32> to vector<8xf32>
    %69 = vector.shape_cast %68 : vector<8xf32> to vector<8x1xf32>
    %70 = vector.broadcast %69 : vector<8x1xf32> to vector<8x8xf32>
    %71 = arith.subf %67, %70 : vector<8x8xf32>
    %72 = math.exp %71 : vector<8x8xf32>
    %cst_25 = arith.constant dense<0.000000e+00> : vector<8xf32>
    %73 = vector.multi_reduction <add>, %72, %cst_25 [1] : vector<8x8xf32> to vector<8xf32>
    %74 = vector.shape_cast %73 : vector<8xf32> to vector<8x1xf32>
    %75 = tpu.reciprocal %74 : vector<8x1xf32> -> vector<8x1xf32>
    %76 = vector.broadcast %75 : vector<8x1xf32> to vector<8x8xf32>
    %77 = arith.mulf %72, %76 : vector<8x8xf32>
    %cst_26 = arith.constant dense<0.000000e+00> : vector<8x8xf32>
    %78 = tpu.matmul %77, %64, %cst_26 {dimension_numbers = #tpu.dot_dimension_numbers<[1], [0], [0], [1], [0, 0, 1, 1], [], []>} : vector<8x8xf32>, vector<8x8xf32>, vector<8x8xf32> -> vector<8x8xf32>
    %79 = vector.extract_strided_slice %44 {offsets = [0, 16], sizes = [8, 8], strides = [1, 1]} : vector<8x96xf32> to vector<8x8xf32>
    %80 = vector.extract_strided_slice %44 {offsets = [0, 48], sizes = [8, 8], strides = [1, 1]} : vector<8x96xf32> to vector<8x8xf32>
    %81 = vector.extract_strided_slice %44 {offsets = [0, 80], sizes = [8, 8], strides = [1, 1]} : vector<8x96xf32> to vector<8x8xf32>
    %cst_27 = arith.constant dense<0.000000e+00> : vector<8x8xf32>
    %82 = tpu.matmul %79, %80, %cst_27 {dimension_numbers = #tpu.dot_dimension_numbers<[1], [1], [0], [0], [0, 0, 1, 0], [], []>} : vector<8x8xf32>, vector<8x8xf32>, vector<8x8xf32> -> vector<8x8xf32>
    %83 = vector.broadcast %43 : vector<1x8xf32> to vector<8x8xf32>
    %84 = arith.addf %82, %83 : vector<8x8xf32>
    %cst_28 = arith.constant dense<0xFF800000> : vector<8xf32>
    %85 = vector.multi_reduction <maximumf>, %84, %cst_28 [1] : vector<8x8xf32> to vector<8xf32>
    %86 = vector.shape_cast %85 : vector<8xf32> to vector<8x1xf32>
    %87 = vector.broadcast %86 : vector<8x1xf32> to vector<8x8xf32>
    %88 = arith.subf %84, %87 : vector<8x8xf32>
    %89 = math.exp %88 : vector<8x8xf32>
    %cst_29 = arith.constant dense<0.000000e+00> : vector<8xf32>
    %90 = vector.multi_reduction <add>, %89, %cst_29 [1] : vector<8x8xf32> to vector<8xf32>
    %91 = vector.shape_cast %90 : vector<8xf32> to vector<8x1xf32>
    %92 = tpu.reciprocal %91 : vector<8x1xf32> -> vector<8x1xf32>
    %93 = vector.broadcast %92 : vector<8x1xf32> to vector<8x8xf32>
    %94 = arith.mulf %89, %93 : vector<8x8xf32>
    %cst_30 = arith.constant dense<0.000000e+00> : vector<8x8xf32>
    %95 = tpu.matmul %94, %81, %cst_30 {dimension_numbers = #tpu.dot_dimension_numbers<[1], [0], [0], [1], [0, 0, 1, 1], [], []>} : vector<8x8xf32>, vector<8x8xf32>, vector<8x8xf32> -> vector<8x8xf32>
    %96 = vector.extract_strided_slice %44 {offsets = [0, 24], sizes = [8, 8], strides = [1, 1]} : vector<8x96xf32> to vector<8x8xf32>
    %97 = vector.extract_strided_slice %44 {offsets = [0, 56], sizes = [8, 8], strides = [1, 1]} : vector<8x96xf32> to vector<8x8xf32>
    %98 = vector.extract_strided_slice %44 {offsets = [0, 88], sizes = [8, 8], strides = [1, 1]} : vector<8x96xf32> to vector<8x8xf32>
    %cst_31 = arith.constant dense<0.000000e+00> : vector<8x8xf32>
    %99 = tpu.matmul %96, %97, %cst_31 {dimension_numbers = #tpu.dot_dimension_numbers<[1], [1], [0], [0], [0, 0, 1, 0], [], []>} : vector<8x8xf32>, vector<8x8xf32>, vector<8x8xf32> -> vector<8x8xf32>
    %100 = vector.broadcast %43 : vector<1x8xf32> to vector<8x8xf32>
    %101 = arith.addf %99, %100 : vector<8x8xf32>
    %cst_32 = arith.constant dense<0xFF800000> : vector<8xf32>
    %102 = vector.multi_reduction <maximumf>, %101, %cst_32 [1] : vector<8x8xf32> to vector<8xf32>
    %103 = vector.shape_cast %102 : vector<8xf32> to vector<8x1xf32>
    %104 = vector.broadcast %103 : vector<8x1xf32> to vector<8x8xf32>
    %105 = arith.subf %101, %104 : vector<8x8xf32>
    %106 = math.exp %105 : vector<8x8xf32>
    %cst_33 = arith.constant dense<0.000000e+00> : vector<8xf32>
    %107 = vector.multi_reduction <add>, %106, %cst_33 [1] : vector<8x8xf32> to vector<8xf32>
    %108 = vector.shape_cast %107 : vector<8xf32> to vector<8x1xf32>
    %109 = tpu.reciprocal %108 : vector<8x1xf32> -> vector<8x1xf32>
    %110 = vector.broadcast %109 : vector<8x1xf32> to vector<8x8xf32>
    %111 = arith.mulf %106, %110 : vector<8x8xf32>
    %cst_34 = arith.constant dense<0.000000e+00> : vector<8x8xf32>
    %112 = tpu.matmul %111, %98, %cst_34 {dimension_numbers = #tpu.dot_dimension_numbers<[1], [0], [0], [1], [0, 0, 1, 1], [], []>} : vector<8x8xf32>, vector<8x8xf32>, vector<8x8xf32> -> vector<8x8xf32>
    %113 = tpu.concatenate %61, %78, %95, %112 in 1 : vector<8x8xf32>, vector<8x8xf32>, vector<8x8xf32>, vector<8x8xf32> -> vector<8x32xf32>
    %cst_35 = arith.constant dense<0.000000e+00> : vector<8x32xf32>
    %114 = tpu.matmul %113, %8, %cst_35 {dimension_numbers = #tpu.dot_dimension_numbers<[1], [0], [0], [1], [0, 0, 1, 1], [], []>} : vector<8x32xf32>, vector<32x32xf32>, vector<8x32xf32> -> vector<8x32xf32>
    %115 = vector.broadcast %14 : vector<1x32xf32> to vector<8x32xf32>
    %116 = arith.addf %114, %115 : vector<8x32xf32>
    %117 = vector.extract_strided_slice %0 {offsets = [0, 0], sizes = [8, 32], strides = [1, 1]} : vector<16x32xf32> to vector<8x32xf32>
    %118 = arith.addf %117, %116 : vector<8x32xf32>
    %119 = vector.extract_strided_slice %1 {offsets = [1, 0], sizes = [1, 8], strides = [1, 1]} : vector<2x8xf32> to vector<1x8xf32>
    %120 = vector.extract_strided_slice %42 {offsets = [8, 0], sizes = [8, 96], strides = [1, 1]} : vector<16x96xf32> to vector<8x96xf32>
    %121 = vector.extract_strided_slice %120 {offsets = [0, 0], sizes = [8, 8], strides = [1, 1]} : vector<8x96xf32> to vector<8x8xf32>
    %122 = vector.extract_strided_slice %120 {offsets = [0, 32], sizes = [8, 8], strides = [1, 1]} : vector<8x96xf32> to vector<8x8xf32>
    %123 = vector.extract_strided_slice %120 {offsets = [0, 64], sizes = [8, 8], strides = [1, 1]} : vector<8x96xf32> to vector<8x8xf32>
    %cst_36 = arith.constant dense<0.000000e+00> : vector<8x8xf32>
    %124 = tpu.matmul %121, %122, %cst_36 {dimension_numbers = #tpu.dot_dimension_numbers<[1], [1], [0], [0], [0, 0, 1, 0], [], []>} : vector<8x8xf32>, vector<8x8xf32>, vector<8x8xf32> -> vector<8x8xf32>
    %125 = vector.broadcast %119 : vector<1x8xf32> to vector<8x8xf32>
    %126 = arith.addf %124, %125 : vector<8x8xf32>
    %cst_37 = arith.constant dense<0xFF800000> : vector<8xf32>
    %127 = vector.multi_reduction <maximumf>, %126, %cst_37 [1] : vector<8x8xf32> to vector<8xf32>
    %128 = vector.shape_cast %127 : vector<8xf32> to vector<8x1xf32>
    %129 = vector.broadcast %128 : vector<8x1xf32> to vector<8x8xf32>
    %130 = arith.subf %126, %129 : vector<8x8xf32>
    %131 = math.exp %130 : vector<8x8xf32>
    %cst_38 = arith.constant dense<0.000000e+00> : vector<8xf32>
    %132 = vector.multi_reduction <add>, %131, %cst_38 [1] : vector<8x8xf32> to vector<8xf32>
    %133 = vector.shape_cast %132 : vector<8xf32> to vector<8x1xf32>
    %134 = tpu.reciprocal %133 : vector<8x1xf32> -> vector<8x1xf32>
    %135 = vector.broadcast %134 : vector<8x1xf32> to vector<8x8xf32>
    %136 = arith.mulf %131, %135 : vector<8x8xf32>
    %cst_39 = arith.constant dense<0.000000e+00> : vector<8x8xf32>
    %137 = tpu.matmul %136, %123, %cst_39 {dimension_numbers = #tpu.dot_dimension_numbers<[1], [0], [0], [1], [0, 0, 1, 1], [], []>} : vector<8x8xf32>, vector<8x8xf32>, vector<8x8xf32> -> vector<8x8xf32>
    %138 = vector.extract_strided_slice %120 {offsets = [0, 8], sizes = [8, 8], strides = [1, 1]} : vector<8x96xf32> to vector<8x8xf32>
    %139 = vector.extract_strided_slice %120 {offsets = [0, 40], sizes = [8, 8], strides = [1, 1]} : vector<8x96xf32> to vector<8x8xf32>
    %140 = vector.extract_strided_slice %120 {offsets = [0, 72], sizes = [8, 8], strides = [1, 1]} : vector<8x96xf32> to vector<8x8xf32>
    %cst_40 = arith.constant dense<0.000000e+00> : vector<8x8xf32>
    %141 = tpu.matmul %138, %139, %cst_40 {dimension_numbers = #tpu.dot_dimension_numbers<[1], [1], [0], [0], [0, 0, 1, 0], [], []>} : vector<8x8xf32>, vector<8x8xf32>, vector<8x8xf32> -> vector<8x8xf32>
    %142 = vector.broadcast %119 : vector<1x8xf32> to vector<8x8xf32>
    %143 = arith.addf %141, %142 : vector<8x8xf32>
    %cst_41 = arith.constant dense<0xFF800000> : vector<8xf32>
    %144 = vector.multi_reduction <maximumf>, %143, %cst_41 [1] : vector<8x8xf32> to vector<8xf32>
    %145 = vector.shape_cast %144 : vector<8xf32> to vector<8x1xf32>
    %146 = vector.broadcast %145 : vector<8x1xf32> to vector<8x8xf32>
    %147 = arith.subf %143, %146 : vector<8x8xf32>
    %148 = math.exp %147 : vector<8x8xf32>
    %cst_42 = arith.constant dense<0.000000e+00> : vector<8xf32>
    %149 = vector.multi_reduction <add>, %148, %cst_42 [1] : vector<8x8xf32> to vector<8xf32>
    %150 = vector.shape_cast %149 : vector<8xf32> to vector<8x1xf32>
    %151 = tpu.reciprocal %150 : vector<8x1xf32> -> vector<8x1xf32>
    %152 = vector.broadcast %151 : vector<8x1xf32> to vector<8x8xf32>
    %153 = arith.mulf %148, %152 : vector<8x8xf32>
    %cst_43 = arith.constant dense<0.000000e+00> : vector<8x8xf32>
    %154 = tpu.matmul %153, %140, %cst_43 {dimension_numbers = #tpu.dot_dimension_numbers<[1], [0], [0], [1], [0, 0, 1, 1], [], []>} : vector<8x8xf32>, vector<8x8xf32>, vector<8x8xf32> -> vector<8x8xf32>
    %155 = vector.extract_strided_slice %120 {offsets = [0, 16], sizes = [8, 8], strides = [1, 1]} : vector<8x96xf32> to vector<8x8xf32>
    %156 = vector.extract_strided_slice %120 {offsets = [0, 48], sizes = [8, 8], strides = [1, 1]} : vector<8x96xf32> to vector<8x8xf32>
    %157 = vector.extract_strided_slice %120 {offsets = [0, 80], sizes = [8, 8], strides = [1, 1]} : vector<8x96xf32> to vector<8x8xf32>
    %cst_44 = arith.constant dense<0.000000e+00> : vector<8x8xf32>
    %158 = tpu.matmul %155, %156, %cst_44 {dimension_numbers = #tpu.dot_dimension_numbers<[1], [1], [0], [0], [0, 0, 1, 0], [], []>} : vector<8x8xf32>, vector<8x8xf32>, vector<8x8xf32> -> vector<8x8xf32>
    %159 = vector.broadcast %119 : vector<1x8xf32> to vector<8x8xf32>
    %160 = arith.addf %158, %159 : vector<8x8xf32>
    %cst_45 = arith.constant dense<0xFF800000> : vector<8xf32>
    %161 = vector.multi_reduction <maximumf>, %160, %cst_45 [1] : vector<8x8xf32> to vector<8xf32>
    %162 = vector.shape_cast %161 : vector<8xf32> to vector<8x1xf32>
    %163 = vector.broadcast %162 : vector<8x1xf32> to vector<8x8xf32>
    %164 = arith.subf %160, %163 : vector<8x8xf32>
    %165 = math.exp %164 : vector<8x8xf32>
    %cst_46 = arith.constant dense<0.000000e+00> : vector<8xf32>
    %166 = vector.multi_reduction <add>, %165, %cst_46 [1] : vector<8x8xf32> to vector<8xf32>
    %167 = vector.shape_cast %166 : vector<8xf32> to vector<8x1xf32>
    %168 = tpu.reciprocal %167 : vector<8x1xf32> -> vector<8x1xf32>
    %169 = vector.broadcast %168 : vector<8x1xf32> to vector<8x8xf32>
    %170 = arith.mulf %165, %169 : vector<8x8xf32>
    %cst_47 = arith.constant dense<0.000000e+00> : vector<8x8xf32>
    %171 = tpu.matmul %170, %157, %cst_47 {dimension_numbers = #tpu.dot_dimension_numbers<[1], [0], [0], [1], [0, 0, 1, 1], [], []>} : vector<8x8xf32>, vector<8x8xf32>, vector<8x8xf32> -> vector<8x8xf32>
    %172 = vector.extract_strided_slice %120 {offsets = [0, 24], sizes = [8, 8], strides = [1, 1]} : vector<8x96xf32> to vector<8x8xf32>
    %173 = vector.extract_strided_slice %120 {offsets = [0, 56], sizes = [8, 8], strides = [1, 1]} : vector<8x96xf32> to vector<8x8xf32>
    %174 = vector.extract_strided_slice %120 {offsets = [0, 88], sizes = [8, 8], strides = [1, 1]} : vector<8x96xf32> to vector<8x8xf32>
    %cst_48 = arith.constant dense<0.000000e+00> : vector<8x8xf32>
    %175 = tpu.matmul %172, %173, %cst_48 {dimension_numbers = #tpu.dot_dimension_numbers<[1], [1], [0], [0], [0, 0, 1, 0], [], []>} : vector<8x8xf32>, vector<8x8xf32>, vector<8x8xf32> -> vector<8x8xf32>
    %176 = vector.broadcast %119 : vector<1x8xf32> to vector<8x8xf32>
    %177 = arith.addf %175, %176 : vector<8x8xf32>
    %cst_49 = arith.constant dense<0xFF800000> : vector<8xf32>
    %178 = vector.multi_reduction <maximumf>, %177, %cst_49 [1] : vector<8x8xf32> to vector<8xf32>
    %179 = vector.shape_cast %178 : vector<8xf32> to vector<8x1xf32>
    %180 = vector.broadcast %179 : vector<8x1xf32> to vector<8x8xf32>
    %181 = arith.subf %177, %180 : vector<8x8xf32>
    %182 = math.exp %181 : vector<8x8xf32>
    %cst_50 = arith.constant dense<0.000000e+00> : vector<8xf32>
    %183 = vector.multi_reduction <add>, %182, %cst_50 [1] : vector<8x8xf32> to vector<8xf32>
    %184 = vector.shape_cast %183 : vector<8xf32> to vector<8x1xf32>
    %185 = tpu.reciprocal %184 : vector<8x1xf32> -> vector<8x1xf32>
    %186 = vector.broadcast %185 : vector<8x1xf32> to vector<8x8xf32>
    %187 = arith.mulf %182, %186 : vector<8x8xf32>
    %cst_51 = arith.constant dense<0.000000e+00> : vector<8x8xf32>
    %188 = tpu.matmul %187, %174, %cst_51 {dimension_numbers = #tpu.dot_dimension_numbers<[1], [0], [0], [1], [0, 0, 1, 1], [], []>} : vector<8x8xf32>, vector<8x8xf32>, vector<8x8xf32> -> vector<8x8xf32>
    %189 = tpu.concatenate %137, %154, %171, %188 in 1 : vector<8x8xf32>, vector<8x8xf32>, vector<8x8xf32>, vector<8x8xf32> -> vector<8x32xf32>
    %cst_52 = arith.constant dense<0.000000e+00> : vector<8x32xf32>
    %190 = tpu.matmul %189, %8, %cst_52 {dimension_numbers = #tpu.dot_dimension_numbers<[1], [0], [0], [1], [0, 0, 1, 1], [], []>} : vector<8x32xf32>, vector<32x32xf32>, vector<8x32xf32> -> vector<8x32xf32>
    %191 = vector.broadcast %14 : vector<1x32xf32> to vector<8x32xf32>
    %192 = arith.addf %190, %191 : vector<8x32xf32>
    %193 = vector.extract_strided_slice %0 {offsets = [8, 0], sizes = [8, 32], strides = [1, 1]} : vector<16x32xf32> to vector<8x32xf32>
    %194 = arith.addf %193, %192 : vector<8x32xf32>
    %195 = tpu.concatenate %118, %194 in 0 : vector<8x32xf32>, vector<8x32xf32> -> vector<16x32xf32>
    %cst_53 = arith.constant dense<0.000000e+00> : vector<16xf32>
    %196 = vector.multi_reduction <add>, %195, %cst_53 [1] : vector<16x32xf32> to vector<16xf32>
    %197 = vector.shape_cast %196 : vector<16xf32> to vector<16x1xf32>
    %cst_54 = arith.constant 3.200000e+01 : f32
    %198 = vector.broadcast %cst_54 : f32 to vector<16x1xf32>
    %199 = arith.divf %197, %198 : vector<16x1xf32>
    %200 = vector.broadcast %199 : vector<16x1xf32> to vector<16x32xf32>
    %201 = arith.subf %195, %200 : vector<16x32xf32>
    %202 = arith.mulf %201, %201 : vector<16x32xf32>
    %cst_55 = arith.constant dense<0.000000e+00> : vector<16xf32>
    %203 = vector.multi_reduction <add>, %202, %cst_55 [1] : vector<16x32xf32> to vector<16xf32>
    %204 = vector.shape_cast %203 : vector<16xf32> to vector<16x1xf32>
    %cst_56 = arith.constant 0.0322580636 : f32
    %205 = vector.broadcast %cst_56 : f32 to vector<16x1xf32>
    %206 = arith.mulf %204, %205 : vector<16x1xf32>
    %207 = vector.broadcast %15 : vector<1x32xf32> to vector<16x32xf32>
    %208 = arith.mulf %207, %201 : vector<16x32xf32>
    %cst_57 = arith.constant 9.99999997E-7 : f32
    %209 = vector.broadcast %cst_57 : f32 to vector<16x1xf32>
    %210 = arith.addf %206, %209 : vector<16x1xf32>
    %211 = math.rsqrt %210 : vector<16x1xf32>
    %212 = vector.broadcast %211 : vector<16x1xf32> to vector<16x32xf32>
    %213 = arith.mulf %208, %212 : vector<16x32xf32>
    %214 = vector.broadcast %16 : vector<1x32xf32> to vector<16x32xf32>
    %215 = arith.addf %213, %214 : vector<16x32xf32>
    %cst_58 = arith.constant dense<0.000000e+00> : vector<16x64xf32>
    %216 = tpu.matmul %215, %9, %cst_58 {dimension_numbers = #tpu.dot_dimension_numbers<[1], [0], [0], [1], [0, 0, 1, 1], [], []>} : vector<16x32xf32>, vector<32x64xf32>, vector<16x64xf32> -> vector<16x64xf32>
    %217 = vector.broadcast %18 : vector<1x64xf32> to vector<16x64xf32>
    %218 = arith.addf %216, %217 : vector<16x64xf32>
    %cst_59 = arith.constant 0.000000e+00 : f32
    %219 = vector.broadcast %cst_59 : f32 to vector<16x64xf32>
    %220 = arith.maximumf %218, %219 : vector<16x64xf32>
    %cst_60 = arith.constant dense<0.000000e+00> : vector<16x32xf32>
    %221 = tpu.matmul %220, %11, %cst_60 {dimension_numbers = #tpu.dot_dimension_numbers<[1], [0], [0], [1], [0, 0, 1, 1], [], []>} : vector<16x64xf32>, vector<64x32xf32>, vector<16x32xf32> -> vector<16x32xf32>
    %222 = arith.addf %195, %221 : vector<16x32xf32>
    %223 = vector.broadcast %17 : vector<1x32xf32> to vector<16x32xf32>
    %224 = arith.addf %222, %223 : vector<16x32xf32>
    %c1 = arith.constant 1 : index
    %c0_61 = arith.constant 0 : index
    %c0_62 = arith.constant 0 : index
    %225 = vector.load %arg2[%c1, %c0_61, %c0_62] : memref<2x32x384xf32, #tpu.memory_space<vmem>>, vector<1x32x384xf32>
    %226 = vector.shape_cast %225 : vector<1x32x384xf32> to vector<32x384xf32>
    %c1_63 = arith.constant 1 : index
    %c0_64 = arith.constant 0 : index
    %c0_65 = arith.constant 0 : index
    %227 = vector.load %arg4[%c1_63, %c0_64, %c0_65] : memref<2x8x128xf32, #tpu.memory_space<vmem>>, vector<1x8x128xf32>
    %228 = vector.shape_cast %227 : vector<1x8x128xf32> to vector<8x128xf32>
    %229 = vector.extract_strided_slice %226 {offsets = [0, 0], sizes = [32, 96], strides = [1, 1]} : vector<32x384xf32> to vector<32x96xf32>
    %230 = vector.extract_strided_slice %226 {offsets = [0, 128], sizes = [32, 32], strides = [1, 1]} : vector<32x384xf32> to vector<32x32xf32>
    %231 = vector.extract_strided_slice %226 {offsets = [0, 256], sizes = [32, 64], strides = [1, 1]} : vector<32x384xf32> to vector<32x64xf32>
    %c1_66 = arith.constant 1 : index
    %c0_67 = arith.constant 0 : index
    %c0_68 = arith.constant 0 : index
    %232 = vector.load %arg3[%c1_66, %c0_67, %c0_68] : memref<2x64x32xf32, #tpu.memory_space<vmem>>, vector<1x64x32xf32>
    %233 = vector.shape_cast %232 : vector<1x64x32xf32> to vector<64x32xf32>
    %234 = vector.extract_strided_slice %228 {offsets = [0, 0], sizes = [1, 32], strides = [1, 1]} : vector<8x128xf32> to vector<1x32xf32>
    %235 = vector.extract_strided_slice %228 {offsets = [1, 0], sizes = [1, 32], strides = [1, 1]} : vector<8x128xf32> to vector<1x32xf32>
    %236 = vector.extract_strided_slice %228 {offsets = [2, 0], sizes = [1, 32], strides = [1, 1]} : vector<8x128xf32> to vector<1x32xf32>
    %237 = vector.extract_strided_slice %228 {offsets = [3, 0], sizes = [1, 32], strides = [1, 1]} : vector<8x128xf32> to vector<1x32xf32>
    %238 = vector.extract_strided_slice %228 {offsets = [4, 0], sizes = [1, 32], strides = [1, 1]} : vector<8x128xf32> to vector<1x32xf32>
    %239 = vector.extract_strided_slice %228 {offsets = [5, 0], sizes = [1, 32], strides = [1, 1]} : vector<8x128xf32> to vector<1x32xf32>
    %240 = vector.extract_strided_slice %228 {offsets = [6, 0], sizes = [1, 64], strides = [1, 1]} : vector<8x128xf32> to vector<1x64xf32>
    %241 = vector.extract_strided_slice %228 {offsets = [7, 0], sizes = [1, 96], strides = [1, 1]} : vector<8x128xf32> to vector<1x96xf32>
    %cst_69 = arith.constant dense<0.000000e+00> : vector<16xf32>
    %242 = vector.multi_reduction <add>, %224, %cst_69 [1] : vector<16x32xf32> to vector<16xf32>
    %243 = vector.shape_cast %242 : vector<16xf32> to vector<16x1xf32>
    %cst_70 = arith.constant 3.200000e+01 : f32
    %244 = vector.broadcast %cst_70 : f32 to vector<16x1xf32>
    %245 = arith.divf %243, %244 : vector<16x1xf32>
    %246 = vector.broadcast %245 : vector<16x1xf32> to vector<16x32xf32>
    %247 = arith.subf %224, %246 : vector<16x32xf32>
    %248 = arith.mulf %247, %247 : vector<16x32xf32>
    %cst_71 = arith.constant dense<0.000000e+00> : vector<16xf32>
    %249 = vector.multi_reduction <add>, %248, %cst_71 [1] : vector<16x32xf32> to vector<16xf32>
    %250 = vector.shape_cast %249 : vector<16xf32> to vector<16x1xf32>
    %cst_72 = arith.constant 0.0322580636 : f32
    %251 = vector.broadcast %cst_72 : f32 to vector<16x1xf32>
    %252 = arith.mulf %250, %251 : vector<16x1xf32>
    %253 = vector.broadcast %234 : vector<1x32xf32> to vector<16x32xf32>
    %254 = arith.mulf %253, %247 : vector<16x32xf32>
    %cst_73 = arith.constant 9.99999997E-7 : f32
    %255 = vector.broadcast %cst_73 : f32 to vector<16x1xf32>
    %256 = arith.addf %252, %255 : vector<16x1xf32>
    %257 = math.rsqrt %256 : vector<16x1xf32>
    %258 = vector.broadcast %257 : vector<16x1xf32> to vector<16x32xf32>
    %259 = arith.mulf %254, %258 : vector<16x32xf32>
    %260 = vector.broadcast %235 : vector<1x32xf32> to vector<16x32xf32>
    %261 = arith.addf %259, %260 : vector<16x32xf32>
    %cst_74 = arith.constant dense<0.000000e+00> : vector<16x96xf32>
    %262 = tpu.matmul %261, %229, %cst_74 {dimension_numbers = #tpu.dot_dimension_numbers<[1], [0], [0], [1], [0, 0, 1, 1], [], []>} : vector<16x32xf32>, vector<32x96xf32>, vector<16x96xf32> -> vector<16x96xf32>
    %263 = vector.broadcast %241 : vector<1x96xf32> to vector<16x96xf32>
    %264 = arith.addf %262, %263 : vector<16x96xf32>
    %265 = vector.extract_strided_slice %1 {offsets = [0, 0], sizes = [1, 8], strides = [1, 1]} : vector<2x8xf32> to vector<1x8xf32>
    %266 = vector.extract_strided_slice %264 {offsets = [0, 0], sizes = [8, 96], strides = [1, 1]} : vector<16x96xf32> to vector<8x96xf32>
    %267 = vector.extract_strided_slice %266 {offsets = [0, 0], sizes = [8, 8], strides = [1, 1]} : vector<8x96xf32> to vector<8x8xf32>
    %268 = vector.extract_strided_slice %266 {offsets = [0, 32], sizes = [8, 8], strides = [1, 1]} : vector<8x96xf32> to vector<8x8xf32>
    %269 = vector.extract_strided_slice %266 {offsets = [0, 64], sizes = [8, 8], strides = [1, 1]} : vector<8x96xf32> to vector<8x8xf32>
    %cst_75 = arith.constant dense<0.000000e+00> : vector<8x8xf32>
    %270 = tpu.matmul %267, %268, %cst_75 {dimension_numbers = #tpu.dot_dimension_numbers<[1], [1], [0], [0], [0, 0, 1, 0], [], []>} : vector<8x8xf32>, vector<8x8xf32>, vector<8x8xf32> -> vector<8x8xf32>
    %271 = vector.broadcast %265 : vector<1x8xf32> to vector<8x8xf32>
    %272 = arith.addf %270, %271 : vector<8x8xf32>
    %cst_76 = arith.constant dense<0xFF800000> : vector<8xf32>
    %273 = vector.multi_reduction <maximumf>, %272, %cst_76 [1] : vector<8x8xf32> to vector<8xf32>
    %274 = vector.shape_cast %273 : vector<8xf32> to vector<8x1xf32>
    %275 = vector.broadcast %274 : vector<8x1xf32> to vector<8x8xf32>
    %276 = arith.subf %272, %275 : vector<8x8xf32>
    %277 = math.exp %276 : vector<8x8xf32>
    %cst_77 = arith.constant dense<0.000000e+00> : vector<8xf32>
    %278 = vector.multi_reduction <add>, %277, %cst_77 [1] : vector<8x8xf32> to vector<8xf32>
    %279 = vector.shape_cast %278 : vector<8xf32> to vector<8x1xf32>
    %280 = tpu.reciprocal %279 : vector<8x1xf32> -> vector<8x1xf32>
    %281 = vector.broadcast %280 : vector<8x1xf32> to vector<8x8xf32>
    %282 = arith.mulf %277, %281 : vector<8x8xf32>
    %cst_78 = arith.constant dense<0.000000e+00> : vector<8x8xf32>
    %283 = tpu.matmul %282, %269, %cst_78 {dimension_numbers = #tpu.dot_dimension_numbers<[1], [0], [0], [1], [0, 0, 1, 1], [], []>} : vector<8x8xf32>, vector<8x8xf32>, vector<8x8xf32> -> vector<8x8xf32>
    %284 = vector.extract_strided_slice %266 {offsets = [0, 8], sizes = [8, 8], strides = [1, 1]} : vector<8x96xf32> to vector<8x8xf32>
    %285 = vector.extract_strided_slice %266 {offsets = [0, 40], sizes = [8, 8], strides = [1, 1]} : vector<8x96xf32> to vector<8x8xf32>
    %286 = vector.extract_strided_slice %266 {offsets = [0, 72], sizes = [8, 8], strides = [1, 1]} : vector<8x96xf32> to vector<8x8xf32>
    %cst_79 = arith.constant dense<0.000000e+00> : vector<8x8xf32>
    %287 = tpu.matmul %284, %285, %cst_79 {dimension_numbers = #tpu.dot_dimension_numbers<[1], [1], [0], [0], [0, 0, 1, 0], [], []>} : vector<8x8xf32>, vector<8x8xf32>, vector<8x8xf32> -> vector<8x8xf32>
    %288 = vector.broadcast %265 : vector<1x8xf32> to vector<8x8xf32>
    %289 = arith.addf %287, %288 : vector<8x8xf32>
    %cst_80 = arith.constant dense<0xFF800000> : vector<8xf32>
    %290 = vector.multi_reduction <maximumf>, %289, %cst_80 [1] : vector<8x8xf32> to vector<8xf32>
    %291 = vector.shape_cast %290 : vector<8xf32> to vector<8x1xf32>
    %292 = vector.broadcast %291 : vector<8x1xf32> to vector<8x8xf32>
    %293 = arith.subf %289, %292 : vector<8x8xf32>
    %294 = math.exp %293 : vector<8x8xf32>
    %cst_81 = arith.constant dense<0.000000e+00> : vector<8xf32>
    %295 = vector.multi_reduction <add>, %294, %cst_81 [1] : vector<8x8xf32> to vector<8xf32>
    %296 = vector.shape_cast %295 : vector<8xf32> to vector<8x1xf32>
    %297 = tpu.reciprocal %296 : vector<8x1xf32> -> vector<8x1xf32>
    %298 = vector.broadcast %297 : vector<8x1xf32> to vector<8x8xf32>
    %299 = arith.mulf %294, %298 : vector<8x8xf32>
    %cst_82 = arith.constant dense<0.000000e+00> : vector<8x8xf32>
    %300 = tpu.matmul %299, %286, %cst_82 {dimension_numbers = #tpu.dot_dimension_numbers<[1], [0], [0], [1], [0, 0, 1, 1], [], []>} : vector<8x8xf32>, vector<8x8xf32>, vector<8x8xf32> -> vector<8x8xf32>
    %301 = vector.extract_strided_slice %266 {offsets = [0, 16], sizes = [8, 8], strides = [1, 1]} : vector<8x96xf32> to vector<8x8xf32>
    %302 = vector.extract_strided_slice %266 {offsets = [0, 48], sizes = [8, 8], strides = [1, 1]} : vector<8x96xf32> to vector<8x8xf32>
    %303 = vector.extract_strided_slice %266 {offsets = [0, 80], sizes = [8, 8], strides = [1, 1]} : vector<8x96xf32> to vector<8x8xf32>
    %cst_83 = arith.constant dense<0.000000e+00> : vector<8x8xf32>
    %304 = tpu.matmul %301, %302, %cst_83 {dimension_numbers = #tpu.dot_dimension_numbers<[1], [1], [0], [0], [0, 0, 1, 0], [], []>} : vector<8x8xf32>, vector<8x8xf32>, vector<8x8xf32> -> vector<8x8xf32>
    %305 = vector.broadcast %265 : vector<1x8xf32> to vector<8x8xf32>
    %306 = arith.addf %304, %305 : vector<8x8xf32>
    %cst_84 = arith.constant dense<0xFF800000> : vector<8xf32>
    %307 = vector.multi_reduction <maximumf>, %306, %cst_84 [1] : vector<8x8xf32> to vector<8xf32>
    %308 = vector.shape_cast %307 : vector<8xf32> to vector<8x1xf32>
    %309 = vector.broadcast %308 : vector<8x1xf32> to vector<8x8xf32>
    %310 = arith.subf %306, %309 : vector<8x8xf32>
    %311 = math.exp %310 : vector<8x8xf32>
    %cst_85 = arith.constant dense<0.000000e+00> : vector<8xf32>
    %312 = vector.multi_reduction <add>, %311, %cst_85 [1] : vector<8x8xf32> to vector<8xf32>
    %313 = vector.shape_cast %312 : vector<8xf32> to vector<8x1xf32>
    %314 = tpu.reciprocal %313 : vector<8x1xf32> -> vector<8x1xf32>
    %315 = vector.broadcast %314 : vector<8x1xf32> to vector<8x8xf32>
    %316 = arith.mulf %311, %315 : vector<8x8xf32>
    %cst_86 = arith.constant dense<0.000000e+00> : vector<8x8xf32>
    %317 = tpu.matmul %316, %303, %cst_86 {dimension_numbers = #tpu.dot_dimension_numbers<[1], [0], [0], [1], [0, 0, 1, 1], [], []>} : vector<8x8xf32>, vector<8x8xf32>, vector<8x8xf32> -> vector<8x8xf32>
    %318 = vector.extract_strided_slice %266 {offsets = [0, 24], sizes = [8, 8], strides = [1, 1]} : vector<8x96xf32> to vector<8x8xf32>
    %319 = vector.extract_strided_slice %266 {offsets = [0, 56], sizes = [8, 8], strides = [1, 1]} : vector<8x96xf32> to vector<8x8xf32>
    %320 = vector.extract_strided_slice %266 {offsets = [0, 88], sizes = [8, 8], strides = [1, 1]} : vector<8x96xf32> to vector<8x8xf32>
    %cst_87 = arith.constant dense<0.000000e+00> : vector<8x8xf32>
    %321 = tpu.matmul %318, %319, %cst_87 {dimension_numbers = #tpu.dot_dimension_numbers<[1], [1], [0], [0], [0, 0, 1, 0], [], []>} : vector<8x8xf32>, vector<8x8xf32>, vector<8x8xf32> -> vector<8x8xf32>
    %322 = vector.broadcast %265 : vector<1x8xf32> to vector<8x8xf32>
    %323 = arith.addf %321, %322 : vector<8x8xf32>
    %cst_88 = arith.constant dense<0xFF800000> : vector<8xf32>
    %324 = vector.multi_reduction <maximumf>, %323, %cst_88 [1] : vector<8x8xf32> to vector<8xf32>
    %325 = vector.shape_cast %324 : vector<8xf32> to vector<8x1xf32>
    %326 = vector.broadcast %325 : vector<8x1xf32> to vector<8x8xf32>
    %327 = arith.subf %323, %326 : vector<8x8xf32>
    %328 = math.exp %327 : vector<8x8xf32>
    %cst_89 = arith.constant dense<0.000000e+00> : vector<8xf32>
    %329 = vector.multi_reduction <add>, %328, %cst_89 [1] : vector<8x8xf32> to vector<8xf32>
    %330 = vector.shape_cast %329 : vector<8xf32> to vector<8x1xf32>
    %331 = tpu.reciprocal %330 : vector<8x1xf32> -> vector<8x1xf32>
    %332 = vector.broadcast %331 : vector<8x1xf32> to vector<8x8xf32>
    %333 = arith.mulf %328, %332 : vector<8x8xf32>
    %cst_90 = arith.constant dense<0.000000e+00> : vector<8x8xf32>
    %334 = tpu.matmul %333, %320, %cst_90 {dimension_numbers = #tpu.dot_dimension_numbers<[1], [0], [0], [1], [0, 0, 1, 1], [], []>} : vector<8x8xf32>, vector<8x8xf32>, vector<8x8xf32> -> vector<8x8xf32>
    %335 = tpu.concatenate %283, %300, %317, %334 in 1 : vector<8x8xf32>, vector<8x8xf32>, vector<8x8xf32>, vector<8x8xf32> -> vector<8x32xf32>
    %cst_91 = arith.constant dense<0.000000e+00> : vector<8x32xf32>
    %336 = tpu.matmul %335, %230, %cst_91 {dimension_numbers = #tpu.dot_dimension_numbers<[1], [0], [0], [1], [0, 0, 1, 1], [], []>} : vector<8x32xf32>, vector<32x32xf32>, vector<8x32xf32> -> vector<8x32xf32>
    %337 = vector.broadcast %236 : vector<1x32xf32> to vector<8x32xf32>
    %338 = arith.addf %336, %337 : vector<8x32xf32>
    %339 = vector.extract_strided_slice %224 {offsets = [0, 0], sizes = [8, 32], strides = [1, 1]} : vector<16x32xf32> to vector<8x32xf32>
    %340 = arith.addf %339, %338 : vector<8x32xf32>
    %341 = vector.extract_strided_slice %1 {offsets = [1, 0], sizes = [1, 8], strides = [1, 1]} : vector<2x8xf32> to vector<1x8xf32>
    %342 = vector.extract_strided_slice %264 {offsets = [8, 0], sizes = [8, 96], strides = [1, 1]} : vector<16x96xf32> to vector<8x96xf32>
    %343 = vector.extract_strided_slice %342 {offsets = [0, 0], sizes = [8, 8], strides = [1, 1]} : vector<8x96xf32> to vector<8x8xf32>
    %344 = vector.extract_strided_slice %342 {offsets = [0, 32], sizes = [8, 8], strides = [1, 1]} : vector<8x96xf32> to vector<8x8xf32>
    %345 = vector.extract_strided_slice %342 {offsets = [0, 64], sizes = [8, 8], strides = [1, 1]} : vector<8x96xf32> to vector<8x8xf32>
    %cst_92 = arith.constant dense<0.000000e+00> : vector<8x8xf32>
    %346 = tpu.matmul %343, %344, %cst_92 {dimension_numbers = #tpu.dot_dimension_numbers<[1], [1], [0], [0], [0, 0, 1, 0], [], []>} : vector<8x8xf32>, vector<8x8xf32>, vector<8x8xf32> -> vector<8x8xf32>
    %347 = vector.broadcast %341 : vector<1x8xf32> to vector<8x8xf32>
    %348 = arith.addf %346, %347 : vector<8x8xf32>
    %cst_93 = arith.constant dense<0xFF800000> : vector<8xf32>
    %349 = vector.multi_reduction <maximumf>, %348, %cst_93 [1] : vector<8x8xf32> to vector<8xf32>
    %350 = vector.shape_cast %349 : vector<8xf32> to vector<8x1xf32>
    %351 = vector.broadcast %350 : vector<8x1xf32> to vector<8x8xf32>
    %352 = arith.subf %348, %351 : vector<8x8xf32>
    %353 = math.exp %352 : vector<8x8xf32>
    %cst_94 = arith.constant dense<0.000000e+00> : vector<8xf32>
    %354 = vector.multi_reduction <add>, %353, %cst_94 [1] : vector<8x8xf32> to vector<8xf32>
    %355 = vector.shape_cast %354 : vector<8xf32> to vector<8x1xf32>
    %356 = tpu.reciprocal %355 : vector<8x1xf32> -> vector<8x1xf32>
    %357 = vector.broadcast %356 : vector<8x1xf32> to vector<8x8xf32>
    %358 = arith.mulf %353, %357 : vector<8x8xf32>
    %cst_95 = arith.constant dense<0.000000e+00> : vector<8x8xf32>
    %359 = tpu.matmul %358, %345, %cst_95 {dimension_numbers = #tpu.dot_dimension_numbers<[1], [0], [0], [1], [0, 0, 1, 1], [], []>} : vector<8x8xf32>, vector<8x8xf32>, vector<8x8xf32> -> vector<8x8xf32>
    %360 = vector.extract_strided_slice %342 {offsets = [0, 8], sizes = [8, 8], strides = [1, 1]} : vector<8x96xf32> to vector<8x8xf32>
    %361 = vector.extract_strided_slice %342 {offsets = [0, 40], sizes = [8, 8], strides = [1, 1]} : vector<8x96xf32> to vector<8x8xf32>
    %362 = vector.extract_strided_slice %342 {offsets = [0, 72], sizes = [8, 8], strides = [1, 1]} : vector<8x96xf32> to vector<8x8xf32>
    %cst_96 = arith.constant dense<0.000000e+00> : vector<8x8xf32>
    %363 = tpu.matmul %360, %361, %cst_96 {dimension_numbers = #tpu.dot_dimension_numbers<[1], [1], [0], [0], [0, 0, 1, 0], [], []>} : vector<8x8xf32>, vector<8x8xf32>, vector<8x8xf32> -> vector<8x8xf32>
    %364 = vector.broadcast %341 : vector<1x8xf32> to vector<8x8xf32>
    %365 = arith.addf %363, %364 : vector<8x8xf32>
    %cst_97 = arith.constant dense<0xFF800000> : vector<8xf32>
    %366 = vector.multi_reduction <maximumf>, %365, %cst_97 [1] : vector<8x8xf32> to vector<8xf32>
    %367 = vector.shape_cast %366 : vector<8xf32> to vector<8x1xf32>
    %368 = vector.broadcast %367 : vector<8x1xf32> to vector<8x8xf32>
    %369 = arith.subf %365, %368 : vector<8x8xf32>
    %370 = math.exp %369 : vector<8x8xf32>
    %cst_98 = arith.constant dense<0.000000e+00> : vector<8xf32>
    %371 = vector.multi_reduction <add>, %370, %cst_98 [1] : vector<8x8xf32> to vector<8xf32>
    %372 = vector.shape_cast %371 : vector<8xf32> to vector<8x1xf32>
    %373 = tpu.reciprocal %372 : vector<8x1xf32> -> vector<8x1xf32>
    %374 = vector.broadcast %373 : vector<8x1xf32> to vector<8x8xf32>
    %375 = arith.mulf %370, %374 : vector<8x8xf32>
    %cst_99 = arith.constant dense<0.000000e+00> : vector<8x8xf32>
    %376 = tpu.matmul %375, %362, %cst_99 {dimension_numbers = #tpu.dot_dimension_numbers<[1], [0], [0], [1], [0, 0, 1, 1], [], []>} : vector<8x8xf32>, vector<8x8xf32>, vector<8x8xf32> -> vector<8x8xf32>
    %377 = vector.extract_strided_slice %342 {offsets = [0, 16], sizes = [8, 8], strides = [1, 1]} : vector<8x96xf32> to vector<8x8xf32>
    %378 = vector.extract_strided_slice %342 {offsets = [0, 48], sizes = [8, 8], strides = [1, 1]} : vector<8x96xf32> to vector<8x8xf32>
    %379 = vector.extract_strided_slice %342 {offsets = [0, 80], sizes = [8, 8], strides = [1, 1]} : vector<8x96xf32> to vector<8x8xf32>
    %cst_100 = arith.constant dense<0.000000e+00> : vector<8x8xf32>
    %380 = tpu.matmul %377, %378, %cst_100 {dimension_numbers = #tpu.dot_dimension_numbers<[1], [1], [0], [0], [0, 0, 1, 0], [], []>} : vector<8x8xf32>, vector<8x8xf32>, vector<8x8xf32> -> vector<8x8xf32>
    %381 = vector.broadcast %341 : vector<1x8xf32> to vector<8x8xf32>
    %382 = arith.addf %380, %381 : vector<8x8xf32>
    %cst_101 = arith.constant dense<0xFF800000> : vector<8xf32>
    %383 = vector.multi_reduction <maximumf>, %382, %cst_101 [1] : vector<8x8xf32> to vector<8xf32>
    %384 = vector.shape_cast %383 : vector<8xf32> to vector<8x1xf32>
    %385 = vector.broadcast %384 : vector<8x1xf32> to vector<8x8xf32>
    %386 = arith.subf %382, %385 : vector<8x8xf32>
    %387 = math.exp %386 : vector<8x8xf32>
    %cst_102 = arith.constant dense<0.000000e+00> : vector<8xf32>
    %388 = vector.multi_reduction <add>, %387, %cst_102 [1] : vector<8x8xf32> to vector<8xf32>
    %389 = vector.shape_cast %388 : vector<8xf32> to vector<8x1xf32>
    %390 = tpu.reciprocal %389 : vector<8x1xf32> -> vector<8x1xf32>
    %391 = vector.broadcast %390 : vector<8x1xf32> to vector<8x8xf32>
    %392 = arith.mulf %387, %391 : vector<8x8xf32>
    %cst_103 = arith.constant dense<0.000000e+00> : vector<8x8xf32>
    %393 = tpu.matmul %392, %379, %cst_103 {dimension_numbers = #tpu.dot_dimension_numbers<[1], [0], [0], [1], [0, 0, 1, 1], [], []>} : vector<8x8xf32>, vector<8x8xf32>, vector<8x8xf32> -> vector<8x8xf32>
    %394 = vector.extract_strided_slice %342 {offsets = [0, 24], sizes = [8, 8], strides = [1, 1]} : vector<8x96xf32> to vector<8x8xf32>
    %395 = vector.extract_strided_slice %342 {offsets = [0, 56], sizes = [8, 8], strides = [1, 1]} : vector<8x96xf32> to vector<8x8xf32>
    %396 = vector.extract_strided_slice %342 {offsets = [0, 88], sizes = [8, 8], strides = [1, 1]} : vector<8x96xf32> to vector<8x8xf32>
    %cst_104 = arith.constant dense<0.000000e+00> : vector<8x8xf32>
    %397 = tpu.matmul %394, %395, %cst_104 {dimension_numbers = #tpu.dot_dimension_numbers<[1], [1], [0], [0], [0, 0, 1, 0], [], []>} : vector<8x8xf32>, vector<8x8xf32>, vector<8x8xf32> -> vector<8x8xf32>
    %398 = vector.broadcast %341 : vector<1x8xf32> to vector<8x8xf32>
    %399 = arith.addf %397, %398 : vector<8x8xf32>
    %cst_105 = arith.constant dense<0xFF800000> : vector<8xf32>
    %400 = vector.multi_reduction <maximumf>, %399, %cst_105 [1] : vector<8x8xf32> to vector<8xf32>
    %401 = vector.shape_cast %400 : vector<8xf32> to vector<8x1xf32>
    %402 = vector.broadcast %401 : vector<8x1xf32> to vector<8x8xf32>
    %403 = arith.subf %399, %402 : vector<8x8xf32>
    %404 = math.exp %403 : vector<8x8xf32>
    %cst_106 = arith.constant dense<0.000000e+00> : vector<8xf32>
    %405 = vector.multi_reduction <add>, %404, %cst_106 [1] : vector<8x8xf32> to vector<8xf32>
    %406 = vector.shape_cast %405 : vector<8xf32> to vector<8x1xf32>
    %407 = tpu.reciprocal %406 : vector<8x1xf32> -> vector<8x1xf32>
    %408 = vector.broadcast %407 : vector<8x1xf32> to vector<8x8xf32>
    %409 = arith.mulf %404, %408 : vector<8x8xf32>
    %cst_107 = arith.constant dense<0.000000e+00> : vector<8x8xf32>
    %410 = tpu.matmul %409, %396, %cst_107 {dimension_numbers = #tpu.dot_dimension_numbers<[1], [0], [0], [1], [0, 0, 1, 1], [], []>} : vector<8x8xf32>, vector<8x8xf32>, vector<8x8xf32> -> vector<8x8xf32>
    %411 = tpu.concatenate %359, %376, %393, %410 in 1 : vector<8x8xf32>, vector<8x8xf32>, vector<8x8xf32>, vector<8x8xf32> -> vector<8x32xf32>
    %cst_108 = arith.constant dense<0.000000e+00> : vector<8x32xf32>
    %412 = tpu.matmul %411, %230, %cst_108 {dimension_numbers = #tpu.dot_dimension_numbers<[1], [0], [0], [1], [0, 0, 1, 1], [], []>} : vector<8x32xf32>, vector<32x32xf32>, vector<8x32xf32> -> vector<8x32xf32>
    %413 = vector.broadcast %236 : vector<1x32xf32> to vector<8x32xf32>
    %414 = arith.addf %412, %413 : vector<8x32xf32>
    %415 = vector.extract_strided_slice %224 {offsets = [8, 0], sizes = [8, 32], strides = [1, 1]} : vector<16x32xf32> to vector<8x32xf32>
    %416 = arith.addf %415, %414 : vector<8x32xf32>
    %417 = tpu.concatenate %340, %416 in 0 : vector<8x32xf32>, vector<8x32xf32> -> vector<16x32xf32>
    %cst_109 = arith.constant dense<0.000000e+00> : vector<16xf32>
    %418 = vector.multi_reduction <add>, %417, %cst_109 [1] : vector<16x32xf32> to vector<16xf32>
    %419 = vector.shape_cast %418 : vector<16xf32> to vector<16x1xf32>
    %cst_110 = arith.constant 3.200000e+01 : f32
    %420 = vector.broadcast %cst_110 : f32 to vector<16x1xf32>
    %421 = arith.divf %419, %420 : vector<16x1xf32>
    %422 = vector.broadcast %421 : vector<16x1xf32> to vector<16x32xf32>
    %423 = arith.subf %417, %422 : vector<16x32xf32>
    %424 = arith.mulf %423, %423 : vector<16x32xf32>
    %cst_111 = arith.constant dense<0.000000e+00> : vector<16xf32>
    %425 = vector.multi_reduction <add>, %424, %cst_111 [1] : vector<16x32xf32> to vector<16xf32>
    %426 = vector.shape_cast %425 : vector<16xf32> to vector<16x1xf32>
    %cst_112 = arith.constant 0.0322580636 : f32
    %427 = vector.broadcast %cst_112 : f32 to vector<16x1xf32>
    %428 = arith.mulf %426, %427 : vector<16x1xf32>
    %429 = vector.broadcast %237 : vector<1x32xf32> to vector<16x32xf32>
    %430 = arith.mulf %429, %423 : vector<16x32xf32>
    %cst_113 = arith.constant 9.99999997E-7 : f32
    %431 = vector.broadcast %cst_113 : f32 to vector<16x1xf32>
    %432 = arith.addf %428, %431 : vector<16x1xf32>
    %433 = math.rsqrt %432 : vector<16x1xf32>
    %434 = vector.broadcast %433 : vector<16x1xf32> to vector<16x32xf32>
    %435 = arith.mulf %430, %434 : vector<16x32xf32>
    %436 = vector.broadcast %238 : vector<1x32xf32> to vector<16x32xf32>
    %437 = arith.addf %435, %436 : vector<16x32xf32>
    %cst_114 = arith.constant dense<0.000000e+00> : vector<16x64xf32>
    %438 = tpu.matmul %437, %231, %cst_114 {dimension_numbers = #tpu.dot_dimension_numbers<[1], [0], [0], [1], [0, 0, 1, 1], [], []>} : vector<16x32xf32>, vector<32x64xf32>, vector<16x64xf32> -> vector<16x64xf32>
    %439 = vector.broadcast %240 : vector<1x64xf32> to vector<16x64xf32>
    %440 = arith.addf %438, %439 : vector<16x64xf32>
    %cst_115 = arith.constant 0.000000e+00 : f32
    %441 = vector.broadcast %cst_115 : f32 to vector<16x64xf32>
    %442 = arith.maximumf %440, %441 : vector<16x64xf32>
    %cst_116 = arith.constant dense<0.000000e+00> : vector<16x32xf32>
    %443 = tpu.matmul %442, %233, %cst_116 {dimension_numbers = #tpu.dot_dimension_numbers<[1], [0], [0], [1], [0, 0, 1, 1], [], []>} : vector<16x64xf32>, vector<64x32xf32>, vector<16x32xf32> -> vector<16x32xf32>
    %444 = arith.addf %417, %443 : vector<16x32xf32>
    %445 = vector.broadcast %239 : vector<1x32xf32> to vector<16x32xf32>
    %446 = arith.addf %444, %445 : vector<16x32xf32>
    %447 = vector.extract_strided_slice %2 {offsets = [0, 0], sizes = [1, 32], strides = [1, 1]} : vector<2x32xf32> to vector<1x32xf32>
    %448 = vector.extract_strided_slice %2 {offsets = [1, 0], sizes = [1, 32], strides = [1, 1]} : vector<2x32xf32> to vector<1x32xf32>
    %cst_117 = arith.constant dense<0.000000e+00> : vector<16xf32>
    %449 = vector.multi_reduction <add>, %446, %cst_117 [1] : vector<16x32xf32> to vector<16xf32>
    %450 = vector.shape_cast %449 : vector<16xf32> to vector<16x1xf32>
    %cst_118 = arith.constant 3.200000e+01 : f32
    %451 = vector.broadcast %cst_118 : f32 to vector<16x1xf32>
    %452 = arith.divf %450, %451 : vector<16x1xf32>
    %453 = vector.broadcast %452 : vector<16x1xf32> to vector<16x32xf32>
    %454 = arith.subf %446, %453 : vector<16x32xf32>
    %455 = arith.mulf %454, %454 : vector<16x32xf32>
    %cst_119 = arith.constant dense<0.000000e+00> : vector<16xf32>
    %456 = vector.multi_reduction <add>, %455, %cst_119 [1] : vector<16x32xf32> to vector<16xf32>
    %457 = vector.shape_cast %456 : vector<16xf32> to vector<16x1xf32>
    %cst_120 = arith.constant 0.0322580636 : f32
    %458 = vector.broadcast %cst_120 : f32 to vector<16x1xf32>
    %459 = arith.mulf %457, %458 : vector<16x1xf32>
    %460 = vector.broadcast %447 : vector<1x32xf32> to vector<16x32xf32>
    %461 = arith.mulf %460, %454 : vector<16x32xf32>
    %cst_121 = arith.constant 9.99999997E-7 : f32
    %462 = vector.broadcast %cst_121 : f32 to vector<16x1xf32>
    %463 = arith.addf %459, %462 : vector<16x1xf32>
    %464 = math.rsqrt %463 : vector<16x1xf32>
    %465 = vector.broadcast %464 : vector<16x1xf32> to vector<16x32xf32>
    %466 = arith.mulf %461, %465 : vector<16x32xf32>
    %467 = vector.broadcast %448 : vector<1x32xf32> to vector<16x32xf32>
    %468 = arith.addf %466, %467 : vector<16x32xf32>
    %c0_122 = arith.constant 0 : index
    %c0_123 = arith.constant 0 : index
    %469 = vector.load %arg6[%c0_122, %c0_123] : memref<16x32xf32, #tpu.memory_space<vmem>>, vector<16x32xf32>
    tpu.vector_store %arg6[%c0_122, %c0_123], %468 {strides = array<i32>} : memref<16x32xf32, #tpu.memory_space<vmem>>, vector<16x32xf32>,
    return
  }
}

</mosaic_0001>

<llo_original>
// kernel: encoder_forward.1
$region0: #{encoder_forward.1}
  #allocation0 [shape = 'u32[]', space=smem, size = 0x4, offset = 0x4, fixed_abs, tag = 'smem constant byte address 0x4 - core index']
  #allocation1 [shape = 'u32[144,128]{1,0:T(1,128)}', space=vmem, size = 0x12000, scoped, tag = 'internal scratch']
  %s0 = inlined_call_operand.hbm [shape: f32[16,32], index: 0, kind: input, shape index: {}]
  %s1 = inlined_call_operand.vmem [shape: f32[2,8], index: 1, kind: input, shape index: {}]
  %s2 = inlined_call_operand.vmem [shape: f32[2,32,384], index: 2, kind: input, shape index: {}]
  %s3 = inlined_call_operand.vmem [shape: f32[2,64,32], index: 3, kind: input, shape index: {}]
  %s4 = inlined_call_operand.hbm [shape: f32[2,8,128], index: 4, kind: input, shape index: {}]
  %s5 = inlined_call_operand.vmem [shape: f32[2,32], index: 5, kind: input, shape index: {}]
  %s6 = inlined_call_operand.hbm [shape: f32[16,32], index: 6, kind: output, shape index: {}]
  %s7 = sld [smem:[#allocation0]]
  $region42: #{encoder_forward.1} parent=0
    _
  %s9 = ssub.s32 1, %s7
  %s10 = scalar_select 0, %s9, %s7
  $region1: #{encoder_forward.1} parent=0
    #allocation2 [shape = 'u8[8192]{0}', space=vmem, size = 0x2000, scoped, tag = 'input window, operand 0, single buffered']
    #allocation3 [shape = 's32[1]{0}', space=sflag, size = 0x4, scoped, tag = 'scoped memory for encoder_forward.1']
    #allocation4 [shape = 's32[1]{0}', space=sflag, size = 0x4, scoped, tag = 'scoped memory for encoder_forward.1']
    #allocation5 [shape = 'u8[8192]{0}', space=vmem, size = 0x2000, scoped, tag = 'input window, operand 4, single buffered']
    #allocation6 [shape = 's32[1]{0}', space=sflag, size = 0x4, scoped, tag = 'scoped memory for encoder_forward.1']
    #allocation7 [shape = 'u8[8192]{0}', space=vmem, size = 0x2000, scoped, tag = 'output window, operand 0, single buffered']
    %11 = vsyncpa [#allocation3], 0
    %12 = vsyncpa [#allocation6], 0
    %13 = vsyncpa [#allocation4], 0
    // Predicated region
    $region2: #{encoder_forward.1} parent=1 // pred_check
      _
    $region3: #{encoder_forward.1} parent=1 // pred_check_branch
      %15 = sbr.rel (0) target = $region5
    $region4: #{encoder_forward.1} parent=1 // pred_region
      %s17 = ssub.s32 256, 256
      %18 = vsyncadd [#allocation3], %s17
      %s19 = sshll.u32 [#allocation2], 4
      %s20 = int_to_ptr.vmem [resolvable:$true] %s19
      %25 = dma.hbm_to_vmem [thread:$0]  %s0, 256, %s20, [#allocation3], 128, 128, 8
    $region5: #{encoder_forward.1} parent=1 // pred_fallthru
      _
    // Predicated region
    $region6: #{encoder_forward.1} parent=1 // pred_check
      _
    $region7: #{encoder_forward.1} parent=1 // pred_check_branch
      %27 = sbr.rel (0) target = $region9
    $region8: #{encoder_forward.1} parent=1 // pred_region
      _
    $region9: #{encoder_forward.1} parent=1 // pred_fallthru
      _
    // Predicated region
    $region10: #{encoder_forward.1} parent=1 // pred_check
      _
    $region11: #{encoder_forward.1} parent=1 // pred_check_branch
      %29 = sbr.rel (0) target = $region13
    $region12: #{encoder_forward.1} parent=1 // pred_region
      _
    $region13: #{encoder_forward.1} parent=1 // pred_fallthru
      _
    // Predicated region
    $region14: #{encoder_forward.1} parent=1 // pred_check
      _
    $region15: #{encoder_forward.1} parent=1 // pred_check_branch
      %31 = sbr.rel (0) target = $region17
    $region16: #{encoder_forward.1} parent=1 // pred_region
      _
    $region17: #{encoder_forward.1} parent=1 // pred_fallthru
      _
    // Predicated region
    $region18: #{encoder_forward.1} parent=1 // pred_check
      _
    $region19: #{encoder_forward.1} parent=1 // pred_check_branch
      %33 = sbr.rel (0) target = $region21
    $region20: #{encoder_forward.1} parent=1 // pred_region
      %s35 = ssub.s32 256, 256
      %36 = vsyncadd [#allocation6], %s35
      %s37 = sshll.u32 [#allocation5], 4
      %s38 = int_to_ptr.vmem [resolvable:$true] %s37
      %43 = dma.hbm_to_vmem [thread:$0]  %s4, 256, %s38, [#allocation6], 128, 128, 8
    $region21: #{encoder_forward.1} parent=1 // pred_fallthru
      _
    // Predicated region
    $region22: #{encoder_forward.1} parent=1 // pred_check
      _
    $region23: #{encoder_forward.1} parent=1 // pred_check_branch
      %45 = sbr.rel (0) target = $region25
    $region24: #{encoder_forward.1} parent=1 // pred_region
      _
    $region25: #{encoder_forward.1} parent=1 // pred_fallthru
      _
    // Predicated region
    $region26: #{encoder_forward.1} parent=1 // pred_check
      _
    $region27: #{encoder_forward.1} parent=1 // pred_check_branch
      %47 = sbr.rel (0) target = $region29
    $region28: #{encoder_forward.1} parent=1 // pred_region
      %48 = dma.done [#allocation3], 256
    $region29: #{encoder_forward.1} parent=1 // pred_fallthru
      _
    // Predicated region
    $region30: #{encoder_forward.1} parent=1 // pred_check
      _
    $region31: #{encoder_forward.1} parent=1 // pred_check_branch
      %50 = sbr.rel (0) target = $region33
    $region32: #{encoder_forward.1} parent=1 // pred_region
      %51 = dma.done [#allocation6], 256
    $region33: #{encoder_forward.1} parent=1 // pred_fallthru
      _
    %v52 = vld [vmem:[#allocation2] sm:$0xff]
    %v53 = vld [vmem:[#allocation2 + $0x8] sm:$0xff]
    %v54 = vld [vmem:[%s1] sm:$0x3]
    %v55 = vld [vmem:[%s5] sm:$0x3]
    %v56 = vld [vmem:[%s2] sm:$0xff]
    %v57 = vld [vmem:[%s2 + $0x8] sm:$0xff]
    %v58 = vld [vmem:[%s2 + $0x10] sm:$0xff]
    %v59 = vld [vmem:[%s2 + $0x18] sm:$0xff]
    %v60 = vld [vmem:[%s2 + $0x20] sm:$0xff]
    %v61 = vld [vmem:[%s2 + $0x28] sm:$0xff]
    %v62 = vld [vmem:[%s2 + $0x30] sm:$0xff]
    %v63 = vld [vmem:[%s2 + $0x38] sm:$0xff]
    %v64 = vld [vmem:[%s2 + $0x40] sm:$0xff]
    %v65 = vld [vmem:[%s2 + $0x48] sm:$0xff]
    %v66 = vld [vmem:[%s2 + $0x50] sm:$0xff]
    %v67 = vld [vmem:[%s2 + $0x58] sm:$0xff]
    %v68 = vld [vmem:[#allocation5] sm:$0xff]
    %v69 = vld [vmem:[%s3] sm:$0xff]
    %v70 = vld [vmem:[%s3 + $0x8] sm:$0xff]
    %v71 = vld [vmem:[%s3 + $0x10] sm:$0xff]
    %v72 = vld [vmem:[%s3 + $0x18] sm:$0xff]
    %v73 = vld [vmem:[%s3 + $0x20] sm:$0xff]
    %v74 = vld [vmem:[%s3 + $0x28] sm:$0xff]
    %v75 = vld [vmem:[%s3 + $0x30] sm:$0xff]
    %v76 = vld [vmem:[%s3 + $0x38] sm:$0xff]
    %vm77 = vcmask 261120
    %v78 = vsel %vm77, %v52, 0.0
    %79 = vadd.xlane.f32.xlu0 %v78
    %v80 = vpop.xlane.xlu0 %79
    %v81 = vsel %vm77, %v53, 0.0
    %82 = vadd.xlane.f32.xlu0 %v81
    %v83 = vpop.xlane.xlu0 %82
    %v84 = vrcp.pop 32.0
    %v85 = vmul.f32 %v80, %v84
    %v86 = vmul.f32 %v83, %v84
    %v87 = vsub.f32 %v52, %v85
    %v88 = vsub.f32 %v53, %v86
    %v89 = vmul.f32 %v87, %v87
    %v90 = vmul.f32 %v88, %v88
    %v91 = vsel %vm77, %v89, 0.0
    %92 = vadd.xlane.f32.xlu0 %v91
    %v93 = vpop.xlane.xlu0 %92
    %v94 = vsel %vm77, %v90, 0.0
    %95 = vadd.xlane.f32.xlu0 %v94
    %v96 = vpop.xlane.xlu0 %95
    %v97 = vmul.f32 %v93, 0.032258064
    %v98 = vmul.f32 %v96, 0.032258064
    %v99 = vlaneseq
    %v100 = vshrl.u32 %v99, 7
    %v101 = vsub.s32 0, %v100
    %v102 = vrot.slane %v68, %v101
    %v103 = vmul.f32 %v102, %v87
    %v104 = vmul.f32 %v102, %v88
    %v105 = vadd.f32 %v97, 1e-06
    %v106 = vadd.f32 %v98, 1e-06
    %v107 = vrsqrt.pop %v105
    %v108 = vrsqrt.pop %v106
    %v109 = vmul.f32 %v103, %v107
    %v110 = vmul.f32 %v104, %v108
    %v111 = vlaneseq
    %v112 = vshrl.u32 %v111, 7
    %v113 = vsub.s32 1, %v112
    %v114 = vrot.slane %v68, %v113
    %v115 = vadd.f32 %v109, %v114
    %v116 = vadd.f32 %v110, %v114
    %v117 = vlaneseq
    %v118 = vshrl.u32 %v117, 7
    %v119 = vsub.s32 7, %v118
    %v120 = vrot.slane %v68, %v119
    %v122 = vsel %vm77, %v115, 0
    %v125 = vsel %vm77, %v116, 0
    %127 = vmatprep.subr.mxu0 0.0
    %128 = vmatpush1.msra.mxu0 0.0
    %129 = vmatprep.subr.mxu0 0.0
    %130 = vmatpush1.msra.mxu0 0.0
    %131 = vmatprep.subr.mxu0 0.0
    %132 = vmatpush1.msra.mxu0 0.0
    %133 = vmatprep.subr.mxu0 0.0
    %134 = vmatpush1.msra.mxu0 0.0
    %135 = vmatprep.subr.mxu0 0.0
    %136 = vmatpush1.msra.mxu0 0.0
    %137 = vmatprep.subr.mxu0 0.0
    %138 = vmatpush1.msra.mxu0 0.0
    %139 = vmatprep.subr.mxu0 0.0
    %140 = vmatpush1.msra.mxu0 0.0
    %141 = vmatprep.subr.mxu0 0.0
    %142 = vmatpush1.msra.mxu0 0.0
    %143 = vmatprep.subr.mxu0 0.0
    %144 = vmatpush1.msra.mxu0 0.0
    %145 = vmatprep.subr.mxu0 0.0
    %146 = vmatpush1.msra.mxu0 0.0
    %147 = vmatprep.subr.mxu0 0.0
    %148 = vmatpush1.msra.mxu0 0.0
    %149 = vmatprep.subr.mxu0 0.0
    %150 = vmatpush1.msra.mxu0 0.0
    %151 = vmatprep.subr.mxu0 0.0
    %152 = vmatpush1.msra.mxu0 %v65
    %153 = vmatprep.subr.mxu0 0.0
    %154 = vmatpush1.msra.mxu0 %v62
    %155 = vmatprep.subr.mxu0 0.0
    %156 = vmatpush1.msra.mxu0 %v59
    %157 = vmatprep.subr.mxu0 0.0
    %158 = vmatpush1.msra.mxu0 %v56
    %159 = vmatprep.subr.mxu0 0.0
    %160 = vmatpush2.msra.mxu0 0.0
    %161 = vmatprep.subr.mxu0 0.0
    %162 = vmatpush2.msra.mxu0 0.0
    %163 = vmatprep.subr.mxu0 0.0
    %164 = vmatpush2.msra.mxu0 0.0
    %165 = vmatprep.subr.mxu0 0.0
    %166 = vmatpush2.msra.mxu0 0.0
    %167 = vmatprep.subr.mxu0 0.0
    %168 = vmatpush2.msra.mxu0 0.0
    %169 = vmatprep.subr.mxu0 0.0
    %170 = vmatpush2.msra.mxu0 0.0
    %171 = vmatprep.subr.mxu0 0.0
    %172 = vmatpush2.msra.mxu0 0.0
    %173 = vmatprep.subr.mxu0 0.0
    %174 = vmatpush2.msra.mxu0 0.0
    %175 = vmatprep.subr.mxu0 0.0
    %176 = vmatpush2.msra.mxu0 0.0
    %177 = vmatprep.subr.mxu0 0.0
    %178 = vmatpush2.msra.mxu0 0.0
    %179 = vmatprep.subr.mxu0 0.0
    %180 = vmatpush2.msra.mxu0 0.0
    %181 = vmatprep.subr.mxu0 0.0
    %182 = vmatpush2.msra.mxu0 0.0
    %183 = vmatprep.subr.mxu0 0.0
    %184 = vmatpush2.msra.mxu0 0.0
    %185 = vmatprep.subr.mxu0 0.0
    %186 = vmatpush2.msra.mxu0 0.0
    %187 = vmatprep.subr.mxu0 0.0
    %188 = vmatpush2.msra.mxu0 0.0
    %189 = vmatprep.subr.mxu0 0.0
    %190 = vmatpush2.msra.mxu0 0.0
    %191 = vmatprep.mubr.f32.mxu0 0.0
    %192 = vmatmul.mubr.f32.gmra.mxu0 %v122
    %v193 = vpop.f32.mrf.mxu0
    %v194 = vadd.f32 %v120, %v193
    %v195 = vpop.f32.mrf.mxu0
    %196 = vmatprep.mubr.f32.mxu0 0.0
    %197 = vmatmul.mubr.f32.gmra.mxu0 %v125
    %v198 = vpop.f32.mrf.mxu0
    %v199 = vadd.f32 %v120, %v198
    %v200 = vpop.f32.mrf.mxu0
    %201 = vdwg.mxu0
    %v202 = vlaneseq
    %v203 = vshrl.u32 %v202, 7
    %v204 = vsub.s32 0, %v203
    %v205 = vrot.slane %v54, %v204
    %207 = vrot.lane.b32.xlu0 %v194, 96
    %v208 = vpop.permute.xlu0 %207
    %vm209 = vcmask 64512
    %v210 = vsel %vm209, %v194, 0
    %v212 = vsel %vm209, %v208, 0
    %214 = vmatprep.subr.mxu0 0.0
    %215 = vmatpush1.xpose.msra.mxu0 0.0
    %216 = vmatprep.subr.mxu0 0.0
    %217 = vmatpush1.xpose.msra.mxu0 0.0
    %218 = vmatprep.subr.mxu0 0.0
    %219 = vmatpush1.xpose.msra.mxu0 0.0
    %220 = vmatprep.subr.mxu0 0.0
    %221 = vmatpush1.xpose.msra.mxu0 0.0
    %222 = vmatprep.subr.mxu0 0.0
    %223 = vmatpush1.xpose.msra.mxu0 0.0
    %224 = vmatprep.subr.mxu0 0.0
    %225 = vmatpush1.xpose.msra.mxu0 0.0
    %226 = vmatprep.subr.mxu0 0.0
    %227 = vmatpush1.xpose.msra.mxu0 0.0
    %228 = vmatprep.subr.mxu0 0.0
    %229 = vmatpush1.xpose.msra.mxu0 0.0
    %230 = vmatprep.subr.mxu0 0.0
    %231 = vmatpush1.xpose.msra.mxu0 0.0
    %232 = vmatprep.subr.mxu0 0.0
    %233 = vmatpush1.xpose.msra.mxu0 0.0
    %234 = vmatprep.subr.mxu0 0.0
    %235 = vmatpush1.xpose.msra.mxu0 0.0
    %236 = vmatprep.subr.mxu0 0.0
    %237 = vmatpush1.xpose.msra.mxu0 0.0
    %238 = vmatprep.subr.mxu0 0.0
    %239 = vmatpush1.xpose.msra.mxu0 0.0
    %240 = vmatprep.subr.mxu0 0.0
    %241 = vmatpush1.xpose.msra.mxu0 0.0
    %242 = vmatprep.subr.mxu0 0.0
    %243 = vmatpush1.xpose.msra.mxu0 0.0
    %244 = vmatprep.subr.mxu0 0.0
    %245 = vmatpush1.xpose.msra.mxu0 %v212
    %246 = vmatprep.subr.mxu0 0.0
    %247 = vmatpush2.xpose.msra.mxu0 0.0
    %248 = vmatprep.subr.mxu0 0.0
    %249 = vmatpush2.xpose.msra.mxu0 0.0
    %250 = vmatprep.subr.mxu0 0.0
    %251 = vmatpush2.xpose.msra.mxu0 0.0
    %252 = vmatprep.subr.mxu0 0.0
    %253 = vmatpush2.xpose.msra.mxu0 0.0
    %254 = vmatprep.subr.mxu0 0.0
    %255 = vmatpush2.xpose.msra.mxu0 0.0
    %256 = vmatprep.subr.mxu0 0.0
    %257 = vmatpush2.xpose.msra.mxu0 0.0
    %258 = vmatprep.subr.mxu0 0.0
    %259 = vmatpush2.xpose.msra.mxu0 0.0
    %260 = vmatprep.subr.mxu0 0.0
    %261 = vmatpush2.xpose.msra.mxu0 0.0
    %262 = vmatprep.subr.mxu0 0.0
    %263 = vmatpush2.xpose.msra.mxu0 0.0
    %264 = vmatprep.subr.mxu0 0.0
    %265 = vmatpush2.xpose.msra.mxu0 0.0
    %266 = vmatprep.subr.mxu0 0.0
    %267 = vmatpush2.xpose.msra.mxu0 0.0
    %268 = vmatprep.subr.mxu0 0.0
    %269 = vmatpush2.xpose.msra.mxu0 0.0
    %270 = vmatprep.subr.mxu0 0.0
    %271 = vmatpush2.xpose.msra.mxu0 0.0
    %272 = vmatprep.subr.mxu0 0.0
    %273 = vmatpush2.xpose.msra.mxu0 0.0
    %274 = vmatprep.subr.mxu0 0.0
    %275 = vmatpush2.xpose.msra.mxu0 0.0
    %276 = vmatprep.subr.mxu0 0.0
    %277 = vmatpush2.xpose.msra.mxu0 0.0
    %278 = vmatprep.mubr.f32.mxu0 0.0
    %279 = vmatmul.mubr.f32.gmra.mxu0 %v210
    %v280 = vpop.f32.mrf.mxu0
    %v281 = vadd.f32 %v205, %v280
    %v282 = vpop.f32.mrf.mxu0
    %283 = vdwg.mxu0
    %v284 = vsel %vm209, %v281, -inf
    %285 = vmax.xlane.f32.xlu0 %v284
    %v286 = vpop.xlane.xlu0 %285
    %v287 = vsub.f32 %v281, %v286
    %v288 = vmul.f32 %v287, 1.442695
    %v289 = vpow.pop %v288
    %v290 = vsel %vm209, %v289, 0.0
    %291 = vadd.xlane.f32.xlu0 %v290
    %v292 = vpop.xlane.xlu0 %291
    %v293 = vrcp.pop %v292
    %v294 = vmul.f32 %v289, %v293
    %295 = vrot.lane.b32.xlu0 %v194, 64
    %v296 = vpop.permute.xlu0 %295
    %v299 = vsel %vm209, %v294, 0
    %301 = vmatprep.subr.mxu0 0.0
    %302 = vmatpush1.msra.mxu0 0.0
    %303 = vmatprep.subr.mxu0 0.0
    %304 = vmatpush1.msra.mxu0 0.0
    %305 = vmatprep.subr.mxu0 0.0
    %306 = vmatpush1.msra.mxu0 0.0
    %307 = vmatprep.subr.mxu0 0.0
    %308 = vmatpush1.msra.mxu0 0.0
    %309 = vmatprep.subr.mxu0 0.0
    %310 = vmatpush1.msra.mxu0 0.0
    %311 = vmatprep.subr.mxu0 0.0
    %312 = vmatpush1.msra.mxu0 0.0
    %313 = vmatprep.subr.mxu0 0.0
    %314 = vmatpush1.msra.mxu0 0.0
    %315 = vmatprep.subr.mxu0 0.0
    %316 = vmatpush1.msra.mxu0 0.0
    %317 = vmatprep.subr.mxu0 0.0
    %318 = vmatpush1.msra.mxu0 0.0
    %319 = vmatprep.subr.mxu0 0.0
    %320 = vmatpush1.msra.mxu0 0.0
    %321 = vmatprep.subr.mxu0 0.0
    %322 = vmatpush1.msra.mxu0 0.0
    %323 = vmatprep.subr.mxu0 0.0
    %324 = vmatpush1.msra.mxu0 0.0
    %325 = vmatprep.subr.mxu0 0.0
    %326 = vmatpush1.msra.mxu0 0.0
    %327 = vmatprep.subr.mxu0 0.0
    %328 = vmatpush1.msra.mxu0 0.0
    %329 = vmatprep.subr.mxu0 0.0
    %330 = vmatpush1.msra.mxu0 0.0
    %331 = vmatprep.subr.mxu0 0.0
    %332 = vmatpush1.msra.mxu0 %v296
    %333 = vmatprep.subr.mxu0 0.0
    %334 = vmatpush2.msra.mxu0 0.0
    %335 = vmatprep.subr.mxu0 0.0
    %336 = vmatpush2.msra.mxu0 0.0
    %337 = vmatprep.subr.mxu0 0.0
    %338 = vmatpush2.msra.mxu0 0.0
    %339 = vmatprep.subr.mxu0 0.0
    %340 = vmatpush2.msra.mxu0 0.0
    %341 = vmatprep.subr.mxu0 0.0
    %342 = vmatpush2.msra.mxu0 0.0
    %343 = vmatprep.subr.mxu0 0.0
    %344 = vmatpush2.msra.mxu0 0.0
    %345 = vmatprep.subr.mxu0 0.0
    %346 = vmatpush2.msra.mxu0 0.0
    %347 = vmatprep.subr.mxu0 0.0
    %348 = vmatpush2.msra.mxu0 0.0
    %349 = vmatprep.subr.mxu0 0.0
    %350 = vmatpush2.msra.mxu0 0.0
    %351 = vmatprep.subr.mxu0 0.0
    %352 = vmatpush2.msra.mxu0 0.0
    %353 = vmatprep.subr.mxu0 0.0
    %354 = vmatpush2.msra.mxu0 0.0
    %355 = vmatprep.subr.mxu0 0.0
    %356 = vmatpush2.msra.mxu0 0.0
    %357 = vmatprep.subr.mxu0 0.0
    %358 = vmatpush2.msra.mxu0 0.0
    %359 = vmatprep.subr.mxu0 0.0
    %360 = vmatpush2.msra.mxu0 0.0
    %361 = vmatprep.subr.mxu0 0.0
    %362 = vmatpush2.msra.mxu0 0.0
    %363 = vmatprep.subr.mxu0 0.0
    %364 = vmatpush2.msra.mxu0 0.0
    %365 = vmatprep.mubr.f32.mxu0 0.0
    %366 = vmatmul.mubr.f32.gmra.mxu0 %v299
    %v367 = vpop.f32.mrf.mxu0
    %v368 = vadd.f32 0.0, %v367
    %v369 = vpop.f32.mrf.mxu0
    %370 = vdwg.mxu0
    %371 = vrot.lane.b32.xlu0 %v194, 120
    %v372 = vpop.permute.xlu0 %371
    %373 = vrot.lane.b32.xlu0 %v194, 88
    %v374 = vpop.permute.xlu0 %373
    %v375 = vsel %vm209, %v372, 0
    %v377 = vsel %vm209, %v374, 0
    %379 = vmatprep.subr.mxu0 0.0
    %380 = vmatpush1.xpose.msra.mxu0 0.0
    %381 = vmatprep.subr.mxu0 0.0
    %382 = vmatpush1.xpose.msra.mxu0 0.0
    %383 = vmatprep.subr.mxu0 0.0
    %384 = vmatpush1.xpose.msra.mxu0 0.0
    %385 = vmatprep.subr.mxu0 0.0
    %386 = vmatpush1.xpose.msra.mxu0 0.0
    %387 = vmatprep.subr.mxu0 0.0
    %388 = vmatpush1.xpose.msra.mxu0 0.0
    %389 = vmatprep.subr.mxu0 0.0
    %390 = vmatpush1.xpose.msra.mxu0 0.0
    %391 = vmatprep.subr.mxu0 0.0
    %392 = vmatpush1.xpose.msra.mxu0 0.0
    %393 = vmatprep.subr.mxu0 0.0
    %394 = vmatpush1.xpose.msra.mxu0 0.0
    %395 = vmatprep.subr.mxu0 0.0
    %396 = vmatpush1.xpose.msra.mxu0 0.0
    %397 = vmatprep.subr.mxu0 0.0
    %398 = vmatpush1.xpose.msra.mxu0 0.0
    %399 = vmatprep.subr.mxu0 0.0
    %400 = vmatpush1.xpose.msra.mxu0 0.0
    %401 = vmatprep.subr.mxu0 0.0
    %402 = vmatpush1.xpose.msra.mxu0 0.0
    %403 = vmatprep.subr.mxu0 0.0
    %404 = vmatpush1.xpose.msra.mxu0 0.0
    %405 = vmatprep.subr.mxu0 0.0
    %406 = vmatpush1.xpose.msra.mxu0 0.0
    %407 = vmatprep.subr.mxu0 0.0
    %408 = vmatpush1.xpose.msra.mxu0 0.0
    %409 = vmatprep.subr.mxu0 0.0
    %410 = vmatpush1.xpose.msra.mxu0 %v377
    %411 = vmatprep.subr.mxu0 0.0
    %412 = vmatpush2.xpose.msra.mxu0 0.0
    %413 = vmatprep.subr.mxu0 0.0
    %414 = vmatpush2.xpose.msra.mxu0 0.0
    %415 = vmatprep.subr.mxu0 0.0
    %416 = vmatpush2.xpose.msra.mxu0 0.0
    %417 = vmatprep.subr.mxu0 0.0
    %418 = vmatpush2.xpose.msra.mxu0 0.0
    %419 = vmatprep.subr.mxu0 0.0
    %420 = vmatpush2.xpose.msra.mxu0 0.0
    %421 = vmatprep.subr.mxu0 0.0
    %422 = vmatpush2.xpose.msra.mxu0 0.0
    %423 = vmatprep.subr.mxu0 0.0
    %424 = vmatpush2.xpose.msra.mxu0 0.0
    %425 = vmatprep.subr.mxu0 0.0
    %426 = vmatpush2.xpose.msra.mxu0 0.0
    %427 = vmatprep.subr.mxu0 0.0
    %428 = vmatpush2.xpose.msra.mxu0 0.0
    %429 = vmatprep.subr.mxu0 0.0
    %430 = vmatpush2.xpose.msra.mxu0 0.0
    %431 = vmatprep.subr.mxu0 0.0
    %432 = vmatpush2.xpose.msra.mxu0 0.0
    %433 = vmatprep.subr.mxu0 0.0
    %434 = vmatpush2.xpose.msra.mxu0 0.0
    %435 = vmatprep.subr.mxu0 0.0
    %436 = vmatpush2.xpose.msra.mxu0 0.0
    %437 = vmatprep.subr.mxu0 0.0
    %438 = vmatpush2.xpose.msra.mxu0 0.0
    %439 = vmatprep.subr.mxu0 0.0
    %440 = vmatpush2.xpose.msra.mxu0 0.0
    %441 = vmatprep.subr.mxu0 0.0
    %442 = vmatpush2.xpose.msra.mxu0 0.0
    %443 = vmatprep.mubr.f32.mxu0 0.0
    %444 = vmatmul.mubr.f32.gmra.mxu0 %v375
    %v445 = vpop.f32.mrf.mxu0
    %v446 = vadd.f32 %v205, %v445
    %v447 = vpop.f32.mrf.mxu0
    %448 = vdwg.mxu0
    %v449 = vsel %vm209, %v446, -inf
    %450 = vmax.xlane.f32.xlu0 %v449
    %v451 = vpop.xlane.xlu0 %450
    %v452 = vsub.f32 %v446, %v451
    %v453 = vmul.f32 %v452, 1.442695
    %v454 = vpow.pop %v453
    %v455 = vsel %vm209, %v454, 0.0
    %456 = vadd.xlane.f32.xlu0 %v455
    %v457 = vpop.xlane.xlu0 %456
    %v458 = vrcp.pop %v457
    %v459 = vmul.f32 %v454, %v458
    %460 = vrot.lane.b32.xlu0 %v194, 56
    %v461 = vpop.permute.xlu0 %460
    %v464 = vsel %vm209, %v459, 0
    %466 = vmatprep.subr.mxu0 0.0
    %467 = vmatpush1.msra.mxu0 0.0
    %468 = vmatprep.subr.mxu0 0.0
    %469 = vmatpush1.msra.mxu0 0.0
    %470 = vmatprep.subr.mxu0 0.0
    %471 = vmatpush1.msra.mxu0 0.0
    %472 = vmatprep.subr.mxu0 0.0
    %473 = vmatpush1.msra.mxu0 0.0
    %474 = vmatprep.subr.mxu0 0.0
    %475 = vmatpush1.msra.mxu0 0.0
    %476 = vmatprep.subr.mxu0 0.0
    %477 = vmatpush1.msra.mxu0 0.0
    %478 = vmatprep.subr.mxu0 0.0
    %479 = vmatpush1.msra.mxu0 0.0
    %480 = vmatprep.subr.mxu0 0.0
    %481 = vmatpush1.msra.mxu0 0.0
    %482 = vmatprep.subr.mxu0 0.0
    %483 = vmatpush1.msra.mxu0 0.0
    %484 = vmatprep.subr.mxu0 0.0
    %485 = vmatpush1.msra.mxu0 0.0
    %486 = vmatprep.subr.mxu0 0.0
    %487 = vmatpush1.msra.mxu0 0.0
    %488 = vmatprep.subr.mxu0 0.0
    %489 = vmatpush1.msra.mxu0 0.0
    %490 = vmatprep.subr.mxu0 0.0
    %491 = vmatpush1.msra.mxu0 0.0
    %492 = vmatprep.subr.mxu0 0.0
    %493 = vmatpush1.msra.mxu0 0.0
    %494 = vmatprep.subr.mxu0 0.0
    %495 = vmatpush1.msra.mxu0 0.0
    %496 = vmatprep.subr.mxu0 0.0
    %497 = vmatpush1.msra.mxu0 %v461
    %498 = vmatprep.subr.mxu0 0.0
    %499 = vmatpush2.msra.mxu0 0.0
    %500 = vmatprep.subr.mxu0 0.0
    %501 = vmatpush2.msra.mxu0 0.0
    %502 = vmatprep.subr.mxu0 0.0
    %503 = vmatpush2.msra.mxu0 0.0
    %504 = vmatprep.subr.mxu0 0.0
    %505 = vmatpush2.msra.mxu0 0.0
    %506 = vmatprep.subr.mxu0 0.0
    %507 = vmatpush2.msra.mxu0 0.0
    %508 = vmatprep.subr.mxu0 0.0
    %509 = vmatpush2.msra.mxu0 0.0
    %510 = vmatprep.subr.mxu0 0.0
    %511 = vmatpush2.msra.mxu0 0.0
    %512 = vmatprep.subr.mxu0 0.0
    %513 = vmatpush2.msra.mxu0 0.0
    %514 = vmatprep.subr.mxu0 0.0
    %515 = vmatpush2.msra.mxu0 0.0
    %516 = vmatprep.subr.mxu0 0.0
    %517 = vmatpush2.msra.mxu0 0.0
    %518 = vmatprep.subr.mxu0 0.0
    %519 = vmatpush2.msra.mxu0 0.0
    %520 = vmatprep.subr.mxu0 0.0
    %521 = vmatpush2.msra.mxu0 0.0
    %522 = vmatprep.subr.mxu0 0.0
    %523 = vmatpush2.msra.mxu0 0.0
    %524 = vmatprep.subr.mxu0 0.0
    %525 = vmatpush2.msra.mxu0 0.0
    %526 = vmatprep.subr.mxu0 0.0
    %527 = vmatpush2.msra.mxu0 0.0
    %528 = vmatprep.subr.mxu0 0.0
    %529 = vmatpush2.msra.mxu0 0.0
    %530 = vmatprep.mubr.f32.mxu0 0.0
    %531 = vmatmul.mubr.f32.gmra.mxu0 %v464
    %v532 = vpop.f32.mrf.mxu0
    %v533 = vadd.f32 0.0, %v532
    %v534 = vpop.f32.mrf.mxu0
    %535 = vdwg.mxu0
    %536 = vrot.lane.b32.xlu0 %v194, 112
    %v537 = vpop.permute.xlu0 %536
    %538 = vrot.lane.b32.xlu0 %v194, 80
    %v539 = vpop.permute.xlu0 %538
    %v540 = vsel %vm209, %v537, 0
    %v542 = vsel %vm209, %v539, 0
    %544 = vmatprep.subr.mxu0 0.0
    %545 = vmatpush1.xpose.msra.mxu0 0.0
    %546 = vmatprep.subr.mxu0 0.0
    %547 = vmatpush1.xpose.msra.mxu0 0.0
    %548 = vmatprep.subr.mxu0 0.0
    %549 = vmatpush1.xpose.msra.mxu0 0.0
    %550 = vmatprep.subr.mxu0 0.0
    %551 = vmatpush1.xpose.msra.mxu0 0.0
    %552 = vmatprep.subr.mxu0 0.0
    %553 = vmatpush1.xpose.msra.mxu0 0.0
    %554 = vmatprep.subr.mxu0 0.0
    %555 = vmatpush1.xpose.msra.mxu0 0.0
    %556 = vmatprep.subr.mxu0 0.0
    %557 = vmatpush1.xpose.msra.mxu0 0.0
    %558 = vmatprep.subr.mxu0 0.0
    %559 = vmatpush1.xpose.msra.mxu0 0.0
    %560 = vmatprep.subr.mxu0 0.0
    %561 = vmatpush1.xpose.msra.mxu0 0.0
    %562 = vmatprep.subr.mxu0 0.0
    %563 = vmatpush1.xpose.msra.mxu0 0.0
    %564 = vmatprep.subr.mxu0 0.0
    %565 = vmatpush1.xpose.msra.mxu0 0.0
    %566 = vmatprep.subr.mxu0 0.0
    %567 = vmatpush1.xpose.msra.mxu0 0.0
    %568 = vmatprep.subr.mxu0 0.0
    %569 = vmatpush1.xpose.msra.mxu0 0.0
    %570 = vmatprep.subr.mxu0 0.0
    %571 = vmatpush1.xpose.msra.mxu0 0.0
    %572 = vmatprep.subr.mxu0 0.0
    %573 = vmatpush1.xpose.msra.mxu0 0.0
    %574 = vmatprep.subr.mxu0 0.0
    %575 = vmatpush1.xpose.msra.mxu0 %v542
    %576 = vmatprep.subr.mxu0 0.0
    %577 = vmatpush2.xpose.msra.mxu0 0.0
    %578 = vmatprep.subr.mxu0 0.0
    %579 = vmatpush2.xpose.msra.mxu0 0.0
    %580 = vmatprep.subr.mxu0 0.0
    %581 = vmatpush2.xpose.msra.mxu0 0.0
    %582 = vmatprep.subr.mxu0 0.0
    %583 = vmatpush2.xpose.msra.mxu0 0.0
    %584 = vmatprep.subr.mxu0 0.0
    %585 = vmatpush2.xpose.msra.mxu0 0.0
    %586 = vmatprep.subr.mxu0 0.0
    %587 = vmatpush2.xpose.msra.mxu0 0.0
    %588 = vmatprep.subr.mxu0 0.0
    %589 = vmatpush2.xpose.msra.mxu0 0.0
    %590 = vmatprep.subr.mxu0 0.0
    %591 = vmatpush2.xpose.msra.mxu0 0.0
    %592 = vmatprep.subr.mxu0 0.0
    %593 = vmatpush2.xpose.msra.mxu0 0.0
    %594 = vmatprep.subr.mxu0 0.0
    %595 = vmatpush2.xpose.msra.mxu0 0.0
    %596 = vmatprep.subr.mxu0 0.0
    %597 = vmatpush2.xpose.msra.mxu0 0.0
    %598 = vmatprep.subr.mxu0 0.0
    %599 = vmatpush2.xpose.msra.mxu0 0.0
    %600 = vmatprep.subr.mxu0 0.0
    %601 = vmatpush2.xpose.msra.mxu0 0.0
    %602 = vmatprep.subr.mxu0 0.0
    %603 = vmatpush2.xpose.msra.mxu0 0.0
    %604 = vmatprep.subr.mxu0 0.0
    %605 = vmatpush2.xpose.msra.mxu0 0.0
    %606 = vmatprep.subr.mxu0 0.0
    %607 = vmatpush2.xpose.msra.mxu0 0.0
    %608 = vmatprep.mubr.f32.mxu0 0.0
    %609 = vmatmul.mubr.f32.gmra.mxu0 %v540
    %v610 = vpop.f32.mrf.mxu0
    %v611 = vadd.f32 %v205, %v610
    %v612 = vpop.f32.mrf.mxu0
    %613 = vdwg.mxu0
    %v614 = vsel %vm209, %v611, -inf
    %615 = vmax.xlane.f32.xlu0 %v614
    %v616 = vpop.xlane.xlu0 %615
    %v617 = vsub.f32 %v611, %v616
    %v618 = vmul.f32 %v617, 1.442695
    %v619 = vpow.pop %v618
    %v620 = vsel %vm209, %v619, 0.0
    %621 = vadd.xlane.f32.xlu0 %v620
    %v622 = vpop.xlane.xlu0 %621
    %v623 = vrcp.pop %v622
    %v624 = vmul.f32 %v619, %v623
    %625 = vrot.lane.b32.xlu0 %v194, 48
    %v626 = vpop.permute.xlu0 %625
    %v629 = vsel %vm209, %v624, 0
    %631 = vmatprep.subr.mxu0 0.0
    %632 = vmatpush1.msra.mxu0 0.0
    %633 = vmatprep.subr.mxu0 0.0
    %634 = vmatpush1.msra.mxu0 0.0
    %635 = vmatprep.subr.mxu0 0.0
    %636 = vmatpush1.msra.mxu0 0.0
    %637 = vmatprep.subr.mxu0 0.0
    %638 = vmatpush1.msra.mxu0 0.0
    %639 = vmatprep.subr.mxu0 0.0
    %640 = vmatpush1.msra.mxu0 0.0
    %641 = vmatprep.subr.mxu0 0.0
    %642 = vmatpush1.msra.mxu0 0.0
    %643 = vmatprep.subr.mxu0 0.0
    %644 = vmatpush1.msra.mxu0 0.0
    %645 = vmatprep.subr.mxu0 0.0
    %646 = vmatpush1.msra.mxu0 0.0
    %647 = vmatprep.subr.mxu0 0.0
    %648 = vmatpush1.msra.mxu0 0.0
    %649 = vmatprep.subr.mxu0 0.0
    %650 = vmatpush1.msra.mxu0 0.0
    %651 = vmatprep.subr.mxu0 0.0
    %652 = vmatpush1.msra.mxu0 0.0
    %653 = vmatprep.subr.mxu0 0.0
    %654 = vmatpush1.msra.mxu0 0.0
    %655 = vmatprep.subr.mxu0 0.0
    %656 = vmatpush1.msra.mxu0 0.0
    %657 = vmatprep.subr.mxu0 0.0
    %658 = vmatpush1.msra.mxu0 0.0
    %659 = vmatprep.subr.mxu0 0.0
    %660 = vmatpush1.msra.mxu0 0.0
    %661 = vmatprep.subr.mxu0 0.0
    %662 = vmatpush1.msra.mxu0 %v626
    %663 = vmatprep.subr.mxu0 0.0
    %664 = vmatpush2.msra.mxu0 0.0
    %665 = vmatprep.subr.mxu0 0.0
    %666 = vmatpush2.msra.mxu0 0.0
    %667 = vmatprep.subr.mxu0 0.0
    %668 = vmatpush2.msra.mxu0 0.0
    %669 = vmatprep.subr.mxu0 0.0
    %670 = vmatpush2.msra.mxu0 0.0
    %671 = vmatprep.subr.mxu0 0.0
    %672 = vmatpush2.msra.mxu0 0.0
    %673 = vmatprep.subr.mxu0 0.0
    %674 = vmatpush2.msra.mxu0 0.0
    %675 = vmatprep.subr.mxu0 0.0
    %676 = vmatpush2.msra.mxu0 0.0
    %677 = vmatprep.subr.mxu0 0.0
    %678 = vmatpush2.msra.mxu0 0.0
    %679 = vmatprep.subr.mxu0 0.0
    %680 = vmatpush2.msra.mxu0 0.0
    %681 = vmatprep.subr.mxu0 0.0
    %682 = vmatpush2.msra.mxu0 0.0
    %683 = vmatprep.subr.mxu0 0.0
    %684 = vmatpush2.msra.mxu0 0.0
    %685 = vmatprep.subr.mxu0 0.0
    %686 = vmatpush2.msra.mxu0 0.0
    %687 = vmatprep.subr.mxu0 0.0
    %688 = vmatpush2.msra.mxu0 0.0
    %689 = vmatprep.subr.mxu0 0.0
    %690 = vmatpush2.msra.mxu0 0.0
    %691 = vmatprep.subr.mxu0 0.0
    %692 = vmatpush2.msra.mxu0 0.0
    %693 = vmatprep.subr.mxu0 0.0
    %694 = vmatpush2.msra.mxu0 0.0
    %695 = vmatprep.mubr.f32.mxu0 0.0
    %696 = vmatmul.mubr.f32.gmra.mxu0 %v629
    %v697 = vpop.f32.mrf.mxu0
    %v698 = vadd.f32 0.0, %v697
    %v699 = vpop.f32.mrf.mxu0
    %700 = vdwg.mxu0
    %701 = vrot.lane.b32.xlu0 %v194, 104
    %v702 = vpop.permute.xlu0 %701
    %703 = vrot.lane.b32.xlu0 %v194, 72
    %v704 = vpop.permute.xlu0 %703
    %v705 = vsel %vm209, %v702, 0
    %v707 = vsel %vm209, %v704, 0
    %709 = vmatprep.subr.mxu0 0.0
    %710 = vmatpush1.xpose.msra.mxu0 0.0
    %711 = vmatprep.subr.mxu0 0.0
    %712 = vmatpush1.xpose.msra.mxu0 0.0
    %713 = vmatprep.subr.mxu0 0.0
    %714 = vmatpush1.xpose.msra.mxu0 0.0
    %715 = vmatprep.subr.mxu0 0.0
    %716 = vmatpush1.xpose.msra.mxu0 0.0
    %717 = vmatprep.subr.mxu0 0.0
    %718 = vmatpush1.xpose.msra.mxu0 0.0
    %719 = vmatprep.subr.mxu0 0.0
    %720 = vmatpush1.xpose.msra.mxu0 0.0
    %721 = vmatprep.subr.mxu0 0.0
    %722 = vmatpush1.xpose.msra.mxu0 0.0
    %723 = vmatprep.subr.mxu0 0.0
    %724 = vmatpush1.xpose.msra.mxu0 0.0
    %725 = vmatprep.subr.mxu0 0.0
    %726 = vmatpush1.xpose.msra.mxu0 0.0
    %727 = vmatprep.subr.mxu0 0.0
    %728 = vmatpush1.xpose.msra.mxu0 0.0
    %729 = vmatprep.subr.mxu0 0.0
    %730 = vmatpush1.xpose.msra.mxu0 0.0
    %731 = vmatprep.subr.mxu0 0.0
    %732 = vmatpush1.xpose.msra.mxu0 0.0
    %733 = vmatprep.subr.mxu0 0.0
    %734 = vmatpush1.xpose.msra.mxu0 0.0
    %735 = vmatprep.subr.mxu0 0.0
    %736 = vmatpush1.xpose.msra.mxu0 0.0
    %737 = vmatprep.subr.mxu0 0.0
    %738 = vmatpush1.xpose.msra.mxu0 0.0
    %739 = vmatprep.subr.mxu0 0.0
    %740 = vmatpush1.xpose.msra.mxu0 %v707
    %741 = vmatprep.subr.mxu0 0.0
    %742 = vmatpush2.xpose.msra.mxu0 0.0
    %743 = vmatprep.subr.mxu0 0.0
    %744 = vmatpush2.xpose.msra.mxu0 0.0
    %745 = vmatprep.subr.mxu0 0.0
    %746 = vmatpush2.xpose.msra.mxu0 0.0
    %747 = vmatprep.subr.mxu0 0.0
    %748 = vmatpush2.xpose.msra.mxu0 0.0
    %749 = vmatprep.subr.mxu0 0.0
    %750 = vmatpush2.xpose.msra.mxu0 0.0
    %751 = vmatprep.subr.mxu0 0.0
    %752 = vmatpush2.xpose.msra.mxu0 0.0
    %753 = vmatprep.subr.mxu0 0.0
    %754 = vmatpush2.xpose.msra.mxu0 0.0
    %755 = vmatprep.subr.mxu0 0.0
    %756 = vmatpush2.xpose.msra.mxu0 0.0
    %757 = vmatprep.subr.mxu0 0.0
    %758 = vmatpush2.xpose.msra.mxu0 0.0
    %759 = vmatprep.subr.mxu0 0.0
    %760 = vmatpush2.xpose.msra.mxu0 0.0
    %761 = vmatprep.subr.mxu0 0.0
    %762 = vmatpush2.xpose.msra.mxu0 0.0
    %763 = vmatprep.subr.mxu0 0.0
    %764 = vmatpush2.xpose.msra.mxu0 0.0
    %765 = vmatprep.subr.mxu0 0.0
    %766 = vmatpush2.xpose.msra.mxu0 0.0
    %767 = vmatprep.subr.mxu0 0.0
    %768 = vmatpush2.xpose.msra.mxu0 0.0
    %769 = vmatprep.subr.mxu0 0.0
    %770 = vmatpush2.xpose.msra.mxu0 0.0
    %771 = vmatprep.subr.mxu0 0.0
    %772 = vmatpush2.xpose.msra.mxu0 0.0
    %773 = vmatprep.mubr.f32.mxu0 0.0
    %774 = vmatmul.mubr.f32.gmra.mxu0 %v705
    %v775 = vpop.f32.mrf.mxu0
    %v776 = vadd.f32 %v205, %v775
    %v777 = vpop.f32.mrf.mxu0
    %778 = vdwg.mxu0
    %v779 = vsel %vm209, %v776, -inf
    %780 = vmax.xlane.f32.xlu0 %v779
    %v781 = vpop.xlane.xlu0 %780
    %v782 = vsub.f32 %v776, %v781
    %v783 = vmul.f32 %v782, 1.442695
    %v784 = vpow.pop %v783
    %v785 = vsel %vm209, %v784, 0.0
    %786 = vadd.xlane.f32.xlu0 %v785
    %v787 = vpop.xlane.xlu0 %786
    %v788 = vrcp.pop %v787
    %v789 = vmul.f32 %v784, %v788
    %790 = vrot.lane.b32.xlu0 %v194, 40
    %v791 = vpop.permute.xlu0 %790
    %v794 = vsel %vm209, %v789, 0
    %796 = vmatprep.subr.mxu0 0.0
    %797 = vmatpush1.msra.mxu0 0.0
    %798 = vmatprep.subr.mxu0 0.0
    %799 = vmatpush1.msra.mxu0 0.0
    %800 = vmatprep.subr.mxu0 0.0
    %801 = vmatpush1.msra.mxu0 0.0
    %802 = vmatprep.subr.mxu0 0.0
    %803 = vmatpush1.msra.mxu0 0.0
    %804 = vmatprep.subr.mxu0 0.0
    %805 = vmatpush1.msra.mxu0 0.0
    %806 = vmatprep.subr.mxu0 0.0
    %807 = vmatpush1.msra.mxu0 0.0
    %808 = vmatprep.subr.mxu0 0.0
    %809 = vmatpush1.msra.mxu0 0.0
    %810 = vmatprep.subr.mxu0 0.0
    %811 = vmatpush1.msra.mxu0 0.0
    %812 = vmatprep.subr.mxu0 0.0
    %813 = vmatpush1.msra.mxu0 0.0
    %814 = vmatprep.subr.mxu0 0.0
    %815 = vmatpush1.msra.mxu0 0.0
    %816 = vmatprep.subr.mxu0 0.0
    %817 = vmatpush1.msra.mxu0 0.0
    %818 = vmatprep.subr.mxu0 0.0
    %819 = vmatpush1.msra.mxu0 0.0
    %820 = vmatprep.subr.mxu0 0.0
    %821 = vmatpush1.msra.mxu0 0.0
    %822 = vmatprep.subr.mxu0 0.0
    %823 = vmatpush1.msra.mxu0 0.0
    %824 = vmatprep.subr.mxu0 0.0
    %825 = vmatpush1.msra.mxu0 0.0
    %826 = vmatprep.subr.mxu0 0.0
    %827 = vmatpush1.msra.mxu0 %v791
    %828 = vmatprep.subr.mxu0 0.0
    %829 = vmatpush2.msra.mxu0 0.0
    %830 = vmatprep.subr.mxu0 0.0
    %831 = vmatpush2.msra.mxu0 0.0
    %832 = vmatprep.subr.mxu0 0.0
    %833 = vmatpush2.msra.mxu0 0.0
    %834 = vmatprep.subr.mxu0 0.0
    %835 = vmatpush2.msra.mxu0 0.0
    %836 = vmatprep.subr.mxu0 0.0
    %837 = vmatpush2.msra.mxu0 0.0
    %838 = vmatprep.subr.mxu0 0.0
    %839 = vmatpush2.msra.mxu0 0.0
    %840 = vmatprep.subr.mxu0 0.0
    %841 = vmatpush2.msra.mxu0 0.0
    %842 = vmatprep.subr.mxu0 0.0
    %843 = vmatpush2.msra.mxu0 0.0
    %844 = vmatprep.subr.mxu0 0.0
    %845 = vmatpush2.msra.mxu0 0.0
    %846 = vmatprep.subr.mxu0 0.0
    %847 = vmatpush2.msra.mxu0 0.0
    %848 = vmatprep.subr.mxu0 0.0
    %849 = vmatpush2.msra.mxu0 0.0
    %850 = vmatprep.subr.mxu0 0.0
    %851 = vmatpush2.msra.mxu0 0.0
    %852 = vmatprep.subr.mxu0 0.0
    %853 = vmatpush2.msra.mxu0 0.0
    %854 = vmatprep.subr.mxu0 0.0
    %855 = vmatpush2.msra.mxu0 0.0
    %856 = vmatprep.subr.mxu0 0.0
    %857 = vmatpush2.msra.mxu0 0.0
    %858 = vmatprep.subr.mxu0 0.0
    %859 = vmatpush2.msra.mxu0 0.0
    %860 = vmatprep.mubr.f32.mxu0 0.0
    %861 = vmatmul.mubr.f32.gmra.mxu0 %v794
    %v862 = vpop.f32.mrf.mxu0
    %v863 = vadd.f32 0.0, %v862
    %v864 = vpop.f32.mrf.mxu0
    %865 = vdwg.mxu0
    %867 = vrot.lane.b32.xlu0 %v533, 8
    %v868 = vpop.permute.xlu0 %867
    %871 = vrot.lane.b32.xlu0 %v698, 16
    %v872 = vpop.permute.xlu0 %871
    %875 = vrot.lane.b32.xlu0 %v863, 24
    %v876 = vpop.permute.xlu0 %875
    %v878 = vsel %vm209, %v368, %v868
    %vm879 = vcmask 130048
    %v880 = vsel %vm879, %v878, %v872
    %vm881 = vcmask 195584
    %v882 = vsel %vm881, %v880, %v876
    %v883 = vlaneseq
    %v884 = vshrl.u32 %v883, 7
    %v885 = vsub.s32 2, %v884
    %v886 = vrot.slane %v68, %v885
    %v888 = vsel %vm77, %v882, 0
    %890 = vmatprep.subr.mxu0 0.0
    %891 = vmatpush1.msra.mxu0 0.0
    %892 = vmatprep.subr.mxu0 0.0
    %893 = vmatpush1.msra.mxu0 0.0
    %894 = vmatprep.subr.mxu0 0.0
    %895 = vmatpush1.msra.mxu0 0.0
    %896 = vmatprep.subr.mxu0 0.0
    %897 = vmatpush1.msra.mxu0 0.0
    %898 = vmatprep.subr.mxu0 0.0
    %899 = vmatpush1.msra.mxu0 0.0
    %900 = vmatprep.subr.mxu0 0.0
    %901 = vmatpush1.msra.mxu0 0.0
    %902 = vmatprep.subr.mxu0 0.0
    %903 = vmatpush1.msra.mxu0 0.0
    %904 = vmatprep.subr.mxu0 0.0
    %905 = vmatpush1.msra.mxu0 0.0
    %906 = vmatprep.subr.mxu0 0.0
    %907 = vmatpush1.msra.mxu0 0.0
    %908 = vmatprep.subr.mxu0 0.0
    %909 = vmatpush1.msra.mxu0 0.0
    %910 = vmatprep.subr.mxu0 0.0
    %911 = vmatpush1.msra.mxu0 0.0
    %912 = vmatprep.subr.mxu0 0.0
    %913 = vmatpush1.msra.mxu0 0.0
    %914 = vmatprep.subr.mxu0 0.0
    %915 = vmatpush1.msra.mxu0 %v66
    %916 = vmatprep.subr.mxu0 0.0
    %917 = vmatpush1.msra.mxu0 %v63
    %918 = vmatprep.subr.mxu0 0.0
    %919 = vmatpush1.msra.mxu0 %v60
    %920 = vmatprep.subr.mxu0 0.0
    %921 = vmatpush1.msra.mxu0 %v57
    %922 = vmatprep.subr.mxu0 0.0
    %923 = vmatpush2.msra.mxu0 0.0
    %924 = vmatprep.subr.mxu0 0.0
    %925 = vmatpush2.msra.mxu0 0.0
    %926 = vmatprep.subr.mxu0 0.0
    %927 = vmatpush2.msra.mxu0 0.0
    %928 = vmatprep.subr.mxu0 0.0
    %929 = vmatpush2.msra.mxu0 0.0
    %930 = vmatprep.subr.mxu0 0.0
    %931 = vmatpush2.msra.mxu0 0.0
    %932 = vmatprep.subr.mxu0 0.0
    %933 = vmatpush2.msra.mxu0 0.0
    %934 = vmatprep.subr.mxu0 0.0
    %935 = vmatpush2.msra.mxu0 0.0
    %936 = vmatprep.subr.mxu0 0.0
    %937 = vmatpush2.msra.mxu0 0.0
    %938 = vmatprep.subr.mxu0 0.0
    %939 = vmatpush2.msra.mxu0 0.0
    %940 = vmatprep.subr.mxu0 0.0
    %941 = vmatpush2.msra.mxu0 0.0
    %942 = vmatprep.subr.mxu0 0.0
    %943 = vmatpush2.msra.mxu0 0.0
    %944 = vmatprep.subr.mxu0 0.0
    %945 = vmatpush2.msra.mxu0 0.0
    %946 = vmatprep.subr.mxu0 0.0
    %947 = vmatpush2.msra.mxu0 0.0
    %948 = vmatprep.subr.mxu0 0.0
    %949 = vmatpush2.msra.mxu0 0.0
    %950 = vmatprep.subr.mxu0 0.0
    %951 = vmatpush2.msra.mxu0 0.0
    %952 = vmatprep.subr.mxu0 0.0
    %953 = vmatpush2.msra.mxu0 0.0
    %954 = vmatprep.mubr.f32.mxu0 0.0
    %955 = vmatmul.mubr.f32.gmra.mxu0 %v888
    %v956 = vpop.f32.mrf.mxu0
    %v957 = vadd.f32 %v886, %v956
    %v958 = vpop.f32.mrf.mxu0
    %959 = vdwg.mxu0
    %v960 = vadd.f32 %v52, %v957
    %v961 = vlaneseq
    %v962 = vshrl.u32 %v961, 7
    %v963 = vsub.s32 1, %v962
    %v964 = vrot.slane %v54, %v963
    %966 = vrot.lane.b32.xlu0 %v199, 96
    %v967 = vpop.permute.xlu0 %966
    %v968 = vsel %vm209, %v199, 0
    %v970 = vsel %vm209, %v967, 0
    %972 = vmatprep.subr.mxu0 0.0
    %973 = vmatpush1.xpose.msra.mxu0 0.0
    %974 = vmatprep.subr.mxu0 0.0
    %975 = vmatpush1.xpose.msra.mxu0 0.0
    %976 = vmatprep.subr.mxu0 0.0
    %977 = vmatpush1.xpose.msra.mxu0 0.0
    %978 = vmatprep.subr.mxu0 0.0
    %979 = vmatpush1.xpose.msra.mxu0 0.0
    %980 = vmatprep.subr.mxu0 0.0
    %981 = vmatpush1.xpose.msra.mxu0 0.0
    %982 = vmatprep.subr.mxu0 0.0
    %983 = vmatpush1.xpose.msra.mxu0 0.0
    %984 = vmatprep.subr.mxu0 0.0
    %985 = vmatpush1.xpose.msra.mxu0 0.0
    %986 = vmatprep.subr.mxu0 0.0
    %987 = vmatpush1.xpose.msra.mxu0 0.0
    %988 = vmatprep.subr.mxu0 0.0
    %989 = vmatpush1.xpose.msra.mxu0 0.0
    %990 = vmatprep.subr.mxu0 0.0
    %991 = vmatpush1.xpose.msra.mxu0 0.0
    %992 = vmatprep.subr.mxu0 0.0
    %993 = vmatpush1.xpose.msra.mxu0 0.0
    %994 = vmatprep.subr.mxu0 0.0
    %995 = vmatpush1.xpose.msra.mxu0 0.0
    %996 = vmatprep.subr.mxu0 0.0
    %997 = vmatpush1.xpose.msra.mxu0 0.0
    %998 = vmatprep.subr.mxu0 0.0
    %999 = vmatpush1.xpose.msra.mxu0 0.0
    %1000 = vmatprep.subr.mxu0 0.0
    %1001 = vmatpush1.xpose.msra.mxu0 0.0
    %1002 = vmatprep.subr.mxu0 0.0
    %1003 = vmatpush1.xpose.msra.mxu0 %v970
    %1004 = vmatprep.subr.mxu0 0.0
    %1005 = vmatpush2.xpose.msra.mxu0 0.0
    %1006 = vmatprep.subr.mxu0 0.0
    %1007 = vmatpush2.xpose.msra.mxu0 0.0
    %1008 = vmatprep.subr.mxu0 0.0
    %1009 = vmatpush2.xpose.msra.mxu0 0.0
    %1010 = vmatprep.subr.mxu0 0.0
    %1011 = vmatpush2.xpose.msra.mxu0 0.0
    %1012 = vmatprep.subr.mxu0 0.0
    %1013 = vmatpush2.xpose.msra.mxu0 0.0
    %1014 = vmatprep.subr.mxu0 0.0
    %1015 = vmatpush2.xpose.msra.mxu0 0.0
    %1016 = vmatprep.subr.mxu0 0.0
    %1017 = vmatpush2.xpose.msra.mxu0 0.0
    %1018 = vmatprep.subr.mxu0 0.0
    %1019 = vmatpush2.xpose.msra.mxu0 0.0
    %1020 = vmatprep.subr.mxu0 0.0
    %1021 = vmatpush2.xpose.msra.mxu0 0.0
    %1022 = vmatprep.subr.mxu0 0.0
    %1023 = vmatpush2.xpose.msra.mxu0 0.0
    %1024 = vmatprep.subr.mxu0 0.0
    %1025 = vmatpush2.xpose.msra.mxu0 0.0
    %1026 = vmatprep.subr.mxu0 0.0
    %1027 = vmatpush2.xpose.msra.mxu0 0.0
    %1028 = vmatprep.subr.mxu0 0.0
    %1029 = vmatpush2.xpose.msra.mxu0 0.0
    %1030 = vmatprep.subr.mxu0 0.0
    %1031 = vmatpush2.xpose.msra.mxu0 0.0
    %1032 = vmatprep.subr.mxu0 0.0
    %1033 = vmatpush2.xpose.msra.mxu0 0.0
    %1034 = vmatprep.subr.mxu0 0.0
    %1035 = vmatpush2.xpose.msra.mxu0 0.0
    %1036 = vmatprep.mubr.f32.mxu0 0.0
    %1037 = vmatmul.mubr.f32.gmra.mxu0 %v968
    %v1038 = vpop.f32.mrf.mxu0
    %v1039 = vadd.f32 %v964, %v1038
    %v1040 = vpop.f32.mrf.mxu0
    %1041 = vdwg.mxu0
    %v1042 = vsel %vm209, %v1039, -inf
    %1043 = vmax.xlane.f32.xlu0 %v1042
    %v1044 = vpop.xlane.xlu0 %1043
    %v1045 = vsub.f32 %v1039, %v1044
    %v1046 = vmul.f32 %v1045, 1.442695
    %v1047 = vpow.pop %v1046
    %v1048 = vsel %vm209, %v1047, 0.0
    %1049 = vadd.xlane.f32.xlu0 %v1048
    %v1050 = vpop.xlane.xlu0 %1049
    %v1051 = vrcp.pop %v1050
    %v1052 = vmul.f32 %v1047, %v1051
    %1053 = vrot.lane.b32.xlu0 %v199, 64
    %v1054 = vpop.permute.xlu0 %1053
    %v1057 = vsel %vm209, %v1052, 0
    %1059 = vmatprep.subr.mxu0 0.0
    %1060 = vmatpush1.msra.mxu0 0.0
    %1061 = vmatprep.subr.mxu0 0.0
    %1062 = vmatpush1.msra.mxu0 0.0
    %1063 = vmatprep.subr.mxu0 0.0
    %1064 = vmatpush1.msra.mxu0 0.0
    %1065 = vmatprep.subr.mxu0 0.0
    %1066 = vmatpush1.msra.mxu0 0.0
    %1067 = vmatprep.subr.mxu0 0.0
    %1068 = vmatpush1.msra.mxu0 0.0
    %1069 = vmatprep.subr.mxu0 0.0
    %1070 = vmatpush1.msra.mxu0 0.0
    %1071 = vmatprep.subr.mxu0 0.0
    %1072 = vmatpush1.msra.mxu0 0.0
    %1073 = vmatprep.subr.mxu0 0.0
    %1074 = vmatpush1.msra.mxu0 0.0
    %1075 = vmatprep.subr.mxu0 0.0
    %1076 = vmatpush1.msra.mxu0 0.0
    %1077 = vmatprep.subr.mxu0 0.0
    %1078 = vmatpush1.msra.mxu0 0.0
    %1079 = vmatprep.subr.mxu0 0.0
    %1080 = vmatpush1.msra.mxu0 0.0
    %1081 = vmatprep.subr.mxu0 0.0
    %1082 = vmatpush1.msra.mxu0 0.0
    %1083 = vmatprep.subr.mxu0 0.0
    %1084 = vmatpush1.msra.mxu0 0.0
    %1085 = vmatprep.subr.mxu0 0.0
    %1086 = vmatpush1.msra.mxu0 0.0
    %1087 = vmatprep.subr.mxu0 0.0
    %1088 = vmatpush1.msra.mxu0 0.0
    %1089 = vmatprep.subr.mxu0 0.0
    %1090 = vmatpush1.msra.mxu0 %v1054
    %1091 = vmatprep.subr.mxu0 0.0
    %1092 = vmatpush2.msra.mxu0 0.0
    %1093 = vmatprep.subr.mxu0 0.0
    %1094 = vmatpush2.msra.mxu0 0.0
    %1095 = vmatprep.subr.mxu0 0.0
    %1096 = vmatpush2.msra.mxu0 0.0
    %1097 = vmatprep.subr.mxu0 0.0
    %1098 = vmatpush2.msra.mxu0 0.0
    %1099 = vmatprep.subr.mxu0 0.0
    %1100 = vmatpush2.msra.mxu0 0.0
    %1101 = vmatprep.subr.mxu0 0.0
    %1102 = vmatpush2.msra.mxu0 0.0
    %1103 = vmatprep.subr.mxu0 0.0
    %1104 = vmatpush2.msra.mxu0 0.0
    %1105 = vmatprep.subr.mxu0 0.0
    %1106 = vmatpush2.msra.mxu0 0.0
    %1107 = vmatprep.subr.mxu0 0.0
    %1108 = vmatpush2.msra.mxu0 0.0
    %1109 = vmatprep.subr.mxu0 0.0
    %1110 = vmatpush2.msra.mxu0 0.0
    %1111 = vmatprep.subr.mxu0 0.0
    %1112 = vmatpush2.msra.mxu0 0.0
    %1113 = vmatprep.subr.mxu0 0.0
    %1114 = vmatpush2.msra.mxu0 0.0
    %1115 = vmatprep.subr.mxu0 0.0
    %1116 = vmatpush2.msra.mxu0 0.0
    %1117 = vmatprep.subr.mxu0 0.0
    %1118 = vmatpush2.msra.mxu0 0.0
    %1119 = vmatprep.subr.mxu0 0.0
    %1120 = vmatpush2.msra.mxu0 0.0
    %1121 = vmatprep.subr.mxu0 0.0
    %1122 = vmatpush2.msra.mxu0 0.0
    %1123 = vmatprep.mubr.f32.mxu0 0.0
    %1124 = vmatmul.mubr.f32.gmra.mxu0 %v1057
    %v1125 = vpop.f32.mrf.mxu0
    %v1126 = vadd.f32 0.0, %v1125
    %v1127 = vpop.f32.mrf.mxu0
    %1128 = vdwg.mxu0
    %1129 = vrot.lane.b32.xlu0 %v199, 120
    %v1130 = vpop.permute.xlu0 %1129
    %1131 = vrot.lane.b32.xlu0 %v199, 88
    %v1132 = vpop.permute.xlu0 %1131
    %v1133 = vsel %vm209, %v1130, 0
    %v1135 = vsel %vm209, %v1132, 0
    %1137 = vmatprep.subr.mxu0 0.0
    %1138 = vmatpush1.xpose.msra.mxu0 0.0
    %1139 = vmatprep.subr.mxu0 0.0
    %1140 = vmatpush1.xpose.msra.mxu0 0.0
    %1141 = vmatprep.subr.mxu0 0.0
    %1142 = vmatpush1.xpose.msra.mxu0 0.0
    %1143 = vmatprep.subr.mxu0 0.0
    %1144 = vmatpush1.xpose.msra.mxu0 0.0
    %1145 = vmatprep.subr.mxu0 0.0
    %1146 = vmatpush1.xpose.msra.mxu0 0.0
    %1147 = vmatprep.subr.mxu0 0.0
    %1148 = vmatpush1.xpose.msra.mxu0 0.0
    %1149 = vmatprep.subr.mxu0 0.0
    %1150 = vmatpush1.xpose.msra.mxu0 0.0
    %1151 = vmatprep.subr.mxu0 0.0
    %1152 = vmatpush1.xpose.msra.mxu0 0.0
    %1153 = vmatprep.subr.mxu0 0.0
    %1154 = vmatpush1.xpose.msra.mxu0 0.0
    %1155 = vmatprep.subr.mxu0 0.0
    %1156 = vmatpush1.xpose.msra.mxu0 0.0
    %1157 = vmatprep.subr.mxu0 0.0
    %1158 = vmatpush1.xpose.msra.mxu0 0.0
    %1159 = vmatprep.subr.mxu0 0.0
    %1160 = vmatpush1.xpose.msra.mxu0 0.0
    %1161 = vmatprep.subr.mxu0 0.0
    %1162 = vmatpush1.xpose.msra.mxu0 0.0
    %1163 = vmatprep.subr.mxu0 0.0
    %1164 = vmatpush1.xpose.msra.mxu0 0.0
    %1165 = vmatprep.subr.mxu0 0.0
    %1166 = vmatpush1.xpose.msra.mxu0 0.0
    %1167 = vmatprep.subr.mxu0 0.0
    %1168 = vmatpush1.xpose.msra.mxu0 %v1135
    %1169 = vmatprep.subr.mxu0 0.0
    %1170 = vmatpush2.xpose.msra.mxu0 0.0
    %1171 = vmatprep.subr.mxu0 0.0
    %1172 = vmatpush2.xpose.msra.mxu0 0.0
    %1173 = vmatprep.subr.mxu0 0.0
    %1174 = vmatpush2.xpose.msra.mxu0 0.0
    %1175 = vmatprep.subr.mxu0 0.0
    %1176 = vmatpush2.xpose.msra.mxu0 0.0
    %1177 = vmatprep.subr.mxu0 0.0
    %1178 = vmatpush2.xpose.msra.mxu0 0.0
    %1179 = vmatprep.subr.mxu0 0.0
    %1180 = vmatpush2.xpose.msra.mxu0 0.0
    %1181 = vmatprep.subr.mxu0 0.0
    %1182 = vmatpush2.xpose.msra.mxu0 0.0
    %1183 = vmatprep.subr.mxu0 0.0
    %1184 = vmatpush2.xpose.msra.mxu0 0.0
    %1185 = vmatprep.subr.mxu0 0.0
    %1186 = vmatpush2.xpose.msra.mxu0 0.0
    %1187 = vmatprep.subr.mxu0 0.0
    %1188 = vmatpush2.xpose.msra.mxu0 0.0
    %1189 = vmatprep.subr.mxu0 0.0
    %1190 = vmatpush2.xpose.msra.mxu0 0.0
    %1191 = vmatprep.subr.mxu0 0.0
    %1192 = vmatpush2.xpose.msra.mxu0 0.0
    %1193 = vmatprep.subr.mxu0 0.0
    %1194 = vmatpush2.xpose.msra.mxu0 0.0
    %1195 = vmatprep.subr.mxu0 0.0
    %1196 = vmatpush2.xpose.msra.mxu0 0.0
    %1197 = vmatprep.subr.mxu0 0.0
    %1198 = vmatpush2.xpose.msra.mxu0 0.0
    %1199 = vmatprep.subr.mxu0 0.0
    %1200 = vmatpush2.xpose.msra.mxu0 0.0
    %1201 = vmatprep.mubr.f32.mxu0 0.0
    %1202 = vmatmul.mubr.f32.gmra.mxu0 %v1133
    %v1203 = vpop.f32.mrf.mxu0
    %v1204 = vadd.f32 %v964, %v1203
    %v1205 = vpop.f32.mrf.mxu0
    %1206 = vdwg.mxu0
    %v1207 = vsel %vm209, %v1204, -inf
    %1208 = vmax.xlane.f32.xlu0 %v1207
    %v1209 = vpop.xlane.xlu0 %1208
    %v1210 = vsub.f32 %v1204, %v1209
    %v1211 = vmul.f32 %v1210, 1.442695
    %v1212 = vpow.pop %v1211
    %v1213 = vsel %vm209, %v1212, 0.0
    %1214 = vadd.xlane.f32.xlu0 %v1213
    %v1215 = vpop.xlane.xlu0 %1214
    %v1216 = vrcp.pop %v1215
    %v1217 = vmul.f32 %v1212, %v1216
    %1218 = vrot.lane.b32.xlu0 %v199, 56
    %v1219 = vpop.permute.xlu0 %1218
    %v1222 = vsel %vm209, %v1217, 0
    %1224 = vmatprep.subr.mxu0 0.0
    %1225 = vmatpush1.msra.mxu0 0.0
    %1226 = vmatprep.subr.mxu0 0.0
    %1227 = vmatpush1.msra.mxu0 0.0
    %1228 = vmatprep.subr.mxu0 0.0
    %1229 = vmatpush1.msra.mxu0 0.0
    %1230 = vmatprep.subr.mxu0 0.0
    %1231 = vmatpush1.msra.mxu0 0.0
    %1232 = vmatprep.subr.mxu0 0.0
    %1233 = vmatpush1.msra.mxu0 0.0
    %1234 = vmatprep.subr.mxu0 0.0
    %1235 = vmatpush1.msra.mxu0 0.0
    %1236 = vmatprep.subr.mxu0 0.0
    %1237 = vmatpush1.msra.mxu0 0.0
    %1238 = vmatprep.subr.mxu0 0.0
    %1239 = vmatpush1.msra.mxu0 0.0
    %1240 = vmatprep.subr.mxu0 0.0
    %1241 = vmatpush1.msra.mxu0 0.0
    %1242 = vmatprep.subr.mxu0 0.0
    %1243 = vmatpush1.msra.mxu0 0.0
    %1244 = vmatprep.subr.mxu0 0.0
    %1245 = vmatpush1.msra.mxu0 0.0
    %1246 = vmatprep.subr.mxu0 0.0
    %1247 = vmatpush1.msra.mxu0 0.0
    %1248 = vmatprep.subr.mxu0 0.0
    %1249 = vmatpush1.msra.mxu0 0.0
    %1250 = vmatprep.subr.mxu0 0.0
    %1251 = vmatpush1.msra.mxu0 0.0
    %1252 = vmatprep.subr.mxu0 0.0
    %1253 = vmatpush1.msra.mxu0 0.0
    %1254 = vmatprep.subr.mxu0 0.0
    %1255 = vmatpush1.msra.mxu0 %v1219
    %1256 = vmatprep.subr.mxu0 0.0
    %1257 = vmatpush2.msra.mxu0 0.0
    %1258 = vmatprep.subr.mxu0 0.0
    %1259 = vmatpush2.msra.mxu0 0.0
    %1260 = vmatprep.subr.mxu0 0.0
    %1261 = vmatpush2.msra.mxu0 0.0
    %1262 = vmatprep.subr.mxu0 0.0
    %1263 = vmatpush2.msra.mxu0 0.0
    %1264 = vmatprep.subr.mxu0 0.0
    %1265 = vmatpush2.msra.mxu0 0.0
    %1266 = vmatprep.subr.mxu0 0.0
    %1267 = vmatpush2.msra.mxu0 0.0
    %1268 = vmatprep.subr.mxu0 0.0
    %1269 = vmatpush2.msra.mxu0 0.0
    %1270 = vmatprep.subr.mxu0 0.0
    %1271 = vmatpush2.msra.mxu0 0.0
    %1272 = vmatprep.subr.mxu0 0.0
    %1273 = vmatpush2.msra.mxu0 0.0
    %1274 = vmatprep.subr.mxu0 0.0
    %1275 = vmatpush2.msra.mxu0 0.0
    %1276 = vmatprep.subr.mxu0 0.0
    %1277 = vmatpush2.msra.mxu0 0.0
    %1278 = vmatprep.subr.mxu0 0.0
    %1279 = vmatpush2.msra.mxu0 0.0
    %1280 = vmatprep.subr.mxu0 0.0
    %1281 = vmatpush2.msra.mxu0 0.0
    %1282 = vmatprep.subr.mxu0 0.0
    %1283 = vmatpush2.msra.mxu0 0.0
    %1284 = vmatprep.subr.mxu0 0.0
    %1285 = vmatpush2.msra.mxu0 0.0
    %1286 = vmatprep.subr.mxu0 0.0
    %1287 = vmatpush2.msra.mxu0 0.0
    %1288 = vmatprep.mubr.f32.mxu0 0.0
    %1289 = vmatmul.mubr.f32.gmra.mxu0 %v1222
    %v1290 = vpop.f32.mrf.mxu0
    %v1291 = vadd.f32 0.0, %v1290
    %v1292 = vpop.f32.mrf.mxu0
    %1293 = vdwg.mxu0
    %1294 = vrot.lane.b32.xlu0 %v199, 112
    %v1295 = vpop.permute.xlu0 %1294
    %1296 = vrot.lane.b32.xlu0 %v199, 80
    %v1297 = vpop.permute.xlu0 %1296
    %v1298 = vsel %vm209, %v1295, 0
    %v1300 = vsel %vm209, %v1297, 0
    %1302 = vmatprep.subr.mxu0 0.0
    %1303 = vmatpush1.xpose.msra.mxu0 0.0
    %1304 = vmatprep.subr.mxu0 0.0
    %1305 = vmatpush1.xpose.msra.mxu0 0.0
    %1306 = vmatprep.subr.mxu0 0.0
    %1307 = vmatpush1.xpose.msra.mxu0 0.0
    %1308 = vmatprep.subr.mxu0 0.0
    %1309 = vmatpush1.xpose.msra.mxu0 0.0
    %1310 = vmatprep.subr.mxu0 0.0
    %1311 = vmatpush1.xpose.msra.mxu0 0.0
    %1312 = vmatprep.subr.mxu0 0.0
    %1313 = vmatpush1.xpose.msra.mxu0 0.0
    %1314 = vmatprep.subr.mxu0 0.0
    %1315 = vmatpush1.xpose.msra.mxu0 0.0
    %1316 = vmatprep.subr.mxu0 0.0
    %1317 = vmatpush1.xpose.msra.mxu0 0.0
    %1318 = vmatprep.subr.mxu0 0.0
    %1319 = vmatpush1.xpose.msra.mxu0 0.0
    %1320 = vmatprep.subr.mxu0 0.0
    %1321 = vmatpush1.xpose.msra.mxu0 0.0
    %1322 = vmatprep.subr.mxu0 0.0
    %1323 = vmatpush1.xpose.msra.mxu0 0.0
    %1324 = vmatprep.subr.mxu0 0.0
    %1325 = vmatpush1.xpose.msra.mxu0 0.0
    %1326 = vmatprep.subr.mxu0 0.0
    %1327 = vmatpush1.xpose.msra.mxu0 0.0
    %1328 = vmatprep.subr.mxu0 0.0
    %1329 = vmatpush1.xpose.msra.mxu0 0.0
    %1330 = vmatprep.subr.mxu0 0.0
    %1331 = vmatpush1.xpose.msra.mxu0 0.0
    %1332 = vmatprep.subr.mxu0 0.0
    %1333 = vmatpush1.xpose.msra.mxu0 %v1300
    %1334 = vmatprep.subr.mxu0 0.0
    %1335 = vmatpush2.xpose.msra.mxu0 0.0
    %1336 = vmatprep.subr.mxu0 0.0
    %1337 = vmatpush2.xpose.msra.mxu0 0.0
    %1338 = vmatprep.subr.mxu0 0.0
    %1339 = vmatpush2.xpose.msra.mxu0 0.0
    %1340 = vmatprep.subr.mxu0 0.0
    %1341 = vmatpush2.xpose.msra.mxu0 0.0
    %1342 = vmatprep.subr.mxu0 0.0
    %1343 = vmatpush2.xpose.msra.mxu0 0.0
    %1344 = vmatprep.subr.mxu0 0.0
    %1345 = vmatpush2.xpose.msra.mxu0 0.0
    %1346 = vmatprep.subr.mxu0 0.0
    %1347 = vmatpush2.xpose.msra.mxu0 0.0
    %1348 = vmatprep.subr.mxu0 0.0
    %1349 = vmatpush2.xpose.msra.mxu0 0.0
    %1350 = vmatprep.subr.mxu0 0.0
    %1351 = vmatpush2.xpose.msra.mxu0 0.0
    %1352 = vmatprep.subr.mxu0 0.0
    %1353 = vmatpush2.xpose.msra.mxu0 0.0
    %1354 = vmatprep.subr.mxu0 0.0
    %1355 = vmatpush2.xpose.msra.mxu0 0.0
    %1356 = vmatprep.subr.mxu0 0.0
    %1357 = vmatpush2.xpose.msra.mxu0 0.0
    %1358 = vmatprep.subr.mxu0 0.0
    %1359 = vmatpush2.xpose.msra.mxu0 0.0
    %1360 = vmatprep.subr.mxu0 0.0
    %1361 = vmatpush2.xpose.msra.mxu0 0.0
    %1362 = vmatprep.subr.mxu0 0.0
    %1363 = vmatpush2.xpose.msra.mxu0 0.0
    %1364 = vmatprep.subr.mxu0 0.0
    %1365 = vmatpush2.xpose.msra.mxu0 0.0
    %1366 = vmatprep.mubr.f32.mxu0 0.0
    %1367 = vmatmul.mubr.f32.gmra.mxu0 %v1298
    %v1368 = vpop.f32.mrf.mxu0
    %v1369 = vadd.f32 %v964, %v1368
    %v1370 = vpop.f32.mrf.mxu0
    %1371 = vdwg.mxu0
    %v1372 = vsel %vm209, %v1369, -inf
    %1373 = vmax.xlane.f32.xlu0 %v1372
    %v1374 = vpop.xlane.xlu0 %1373
    %v1375 = vsub.f32 %v1369, %v1374
    %v1376 = vmul.f32 %v1375, 1.442695
    %v1377 = vpow.pop %v1376
    %v1378 = vsel %vm209, %v1377, 0.0
    %1379 = vadd.xlane.f32.xlu0 %v1378
    %v1380 = vpop.xlane.xlu0 %1379
    %v1381 = vrcp.pop %v1380
    %v1382 = vmul.f32 %v1377, %v1381
    %1383 = vrot.lane.b32.xlu0 %v199, 48
    %v1384 = vpop.permute.xlu0 %1383
    %v1387 = vsel %vm209, %v1382, 0
    %1389 = vmatprep.subr.mxu0 0.0
    %1390 = vmatpush1.msra.mxu0 0.0
    %1391 = vmatprep.subr.mxu0 0.0
    %1392 = vmatpush1.msra.mxu0 0.0
    %1393 = vmatprep.subr.mxu0 0.0
    %1394 = vmatpush1.msra.mxu0 0.0
    %1395 = vmatprep.subr.mxu0 0.0
    %1396 = vmatpush1.msra.mxu0 0.0
    %1397 = vmatprep.subr.mxu0 0.0
    %1398 = vmatpush1.msra.mxu0 0.0
    %1399 = vmatprep.subr.mxu0 0.0
    %1400 = vmatpush1.msra.mxu0 0.0
    %1401 = vmatprep.subr.mxu0 0.0
    %1402 = vmatpush1.msra.mxu0 0.0
    %1403 = vmatprep.subr.mxu0 0.0
    %1404 = vmatpush1.msra.mxu0 0.0
    %1405 = vmatprep.subr.mxu0 0.0
    %1406 = vmatpush1.msra.mxu0 0.0
    %1407 = vmatprep.subr.mxu0 0.0
    %1408 = vmatpush1.msra.mxu0 0.0
    %1409 = vmatprep.subr.mxu0 0.0
    %1410 = vmatpush1.msra.mxu0 0.0
    %1411 = vmatprep.subr.mxu0 0.0
    %1412 = vmatpush1.msra.mxu0 0.0
    %1413 = vmatprep.subr.mxu0 0.0
    %1414 = vmatpush1.msra.mxu0 0.0
    %1415 = vmatprep.subr.mxu0 0.0
    %1416 = vmatpush1.msra.mxu0 0.0
    %1417 = vmatprep.subr.mxu0 0.0
    %1418 = vmatpush1.msra.mxu0 0.0
    %1419 = vmatprep.subr.mxu0 0.0
    %1420 = vmatpush1.msra.mxu0 %v1384
    %1421 = vmatprep.subr.mxu0 0.0
    %1422 = vmatpush2.msra.mxu0 0.0
    %1423 = vmatprep.subr.mxu0 0.0
    %1424 = vmatpush2.msra.mxu0 0.0
    %1425 = vmatprep.subr.mxu0 0.0
    %1426 = vmatpush2.msra.mxu0 0.0
    %1427 = vmatprep.subr.mxu0 0.0
    %1428 = vmatpush2.msra.mxu0 0.0
    %1429 = vmatprep.subr.mxu0 0.0
    %1430 = vmatpush2.msra.mxu0 0.0
    %1431 = vmatprep.subr.mxu0 0.0
    %1432 = vmatpush2.msra.mxu0 0.0
    %1433 = vmatprep.subr.mxu0 0.0
    %1434 = vmatpush2.msra.mxu0 0.0
    %1435 = vmatprep.subr.mxu0 0.0
    %1436 = vmatpush2.msra.mxu0 0.0
    %1437 = vmatprep.subr.mxu0 0.0
    %1438 = vmatpush2.msra.mxu0 0.0
    %1439 = vmatprep.subr.mxu0 0.0
    %1440 = vmatpush2.msra.mxu0 0.0
    %1441 = vmatprep.subr.mxu0 0.0
    %1442 = vmatpush2.msra.mxu0 0.0
    %1443 = vmatprep.subr.mxu0 0.0
    %1444 = vmatpush2.msra.mxu0 0.0
    %1445 = vmatprep.subr.mxu0 0.0
    %1446 = vmatpush2.msra.mxu0 0.0
    %1447 = vmatprep.subr.mxu0 0.0
    %1448 = vmatpush2.msra.mxu0 0.0
    %1449 = vmatprep.subr.mxu0 0.0
    %1450 = vmatpush2.msra.mxu0 0.0
    %1451 = vmatprep.subr.mxu0 0.0
    %1452 = vmatpush2.msra.mxu0 0.0
    %1453 = vmatprep.mubr.f32.mxu0 0.0
    %1454 = vmatmul.mubr.f32.gmra.mxu0 %v1387
    %v1455 = vpop.f32.mrf.mxu0
    %v1456 = vadd.f32 0.0, %v1455
    %v1457 = vpop.f32.mrf.mxu0
    %1458 = vdwg.mxu0
    %1459 = vrot.lane.b32.xlu0 %v199, 104
    %v1460 = vpop.permute.xlu0 %1459
    %1461 = vrot.lane.b32.xlu0 %v199, 72
    %v1462 = vpop.permute.xlu0 %1461
    %v1463 = vsel %vm209, %v1460, 0
    %v1465 = vsel %vm209, %v1462, 0
    %1467 = vmatprep.subr.mxu0 0.0
    %1468 = vmatpush1.xpose.msra.mxu0 0.0
    %1469 = vmatprep.subr.mxu0 0.0
    %1470 = vmatpush1.xpose.msra.mxu0 0.0
    %1471 = vmatprep.subr.mxu0 0.0
    %1472 = vmatpush1.xpose.msra.mxu0 0.0
    %1473 = vmatprep.subr.mxu0 0.0
    %1474 = vmatpush1.xpose.msra.mxu0 0.0
    %1475 = vmatprep.subr.mxu0 0.0
    %1476 = vmatpush1.xpose.msra.mxu0 0.0
    %1477 = vmatprep.subr.mxu0 0.0
    %1478 = vmatpush1.xpose.msra.mxu0 0.0
    %1479 = vmatprep.subr.mxu0 0.0
    %1480 = vmatpush1.xpose.msra.mxu0 0.0
    %1481 = vmatprep.subr.mxu0 0.0
    %1482 = vmatpush1.xpose.msra.mxu0 0.0
    %1483 = vmatprep.subr.mxu0 0.0
    %1484 = vmatpush1.xpose.msra.mxu0 0.0
    %1485 = vmatprep.subr.mxu0 0.0
    %1486 = vmatpush1.xpose.msra.mxu0 0.0
    %1487 = vmatprep.subr.mxu0 0.0
    %1488 = vmatpush1.xpose.msra.mxu0 0.0
    %1489 = vmatprep.subr.mxu0 0.0
    %1490 = vmatpush1.xpose.msra.mxu0 0.0
    %1491 = vmatprep.subr.mxu0 0.0
    %1492 = vmatpush1.xpose.msra.mxu0 0.0
    %1493 = vmatprep.subr.mxu0 0.0
    %1494 = vmatpush1.xpose.msra.mxu0 0.0
    %1495 = vmatprep.subr.mxu0 0.0
    %1496 = vmatpush1.xpose.msra.mxu0 0.0
    %1497 = vmatprep.subr.mxu0 0.0
    %1498 = vmatpush1.xpose.msra.mxu0 %v1465
    %1499 = vmatprep.subr.mxu0 0.0
    %1500 = vmatpush2.xpose.msra.mxu0 0.0
    %1501 = vmatprep.subr.mxu0 0.0
    %1502 = vmatpush2.xpose.msra.mxu0 0.0
    %1503 = vmatprep.subr.mxu0 0.0
    %1504 = vmatpush2.xpose.msra.mxu0 0.0
    %1505 = vmatprep.subr.mxu0 0.0
    %1506 = vmatpush2.xpose.msra.mxu0 0.0
    %1507 = vmatprep.subr.mxu0 0.0
    %1508 = vmatpush2.xpose.msra.mxu0 0.0
    %1509 = vmatprep.subr.mxu0 0.0
    %1510 = vmatpush2.xpose.msra.mxu0 0.0
    %1511 = vmatprep.subr.mxu0 0.0
    %1512 = vmatpush2.xpose.msra.mxu0 0.0
    %1513 = vmatprep.subr.mxu0 0.0
    %1514 = vmatpush2.xpose.msra.mxu0 0.0
    %1515 = vmatprep.subr.mxu0 0.0
    %1516 = vmatpush2.xpose.msra.mxu0 0.0
    %1517 = vmatprep.subr.mxu0 0.0
    %1518 = vmatpush2.xpose.msra.mxu0 0.0
    %1519 = vmatprep.subr.mxu0 0.0
    %1520 = vmatpush2.xpose.msra.mxu0 0.0
    %1521 = vmatprep.subr.mxu0 0.0
    %1522 = vmatpush2.xpose.msra.mxu0 0.0
    %1523 = vmatprep.subr.mxu0 0.0
    %1524 = vmatpush2.xpose.msra.mxu0 0.0
    %1525 = vmatprep.subr.mxu0 0.0
    %1526 = vmatpush2.xpose.msra.mxu0 0.0
    %1527 = vmatprep.subr.mxu0 0.0
    %1528 = vmatpush2.xpose.msra.mxu0 0.0
    %1529 = vmatprep.subr.mxu0 0.0
    %1530 = vmatpush2.xpose.msra.mxu0 0.0
    %1531 = vmatprep.mubr.f32.mxu0 0.0
    %1532 = vmatmul.mubr.f32.gmra.mxu0 %v1463
    %v1533 = vpop.f32.mrf.mxu0
    %v1534 = vadd.f32 %v964, %v1533
    %v1535 = vpop.f32.mrf.mxu0
    %1536 = vdwg.mxu0
    %v1537 = vsel %vm209, %v1534, -inf
    %1538 = vmax.xlane.f32.xlu0 %v1537
    %v1539 = vpop.xlane.xlu0 %1538
    %v1540 = vsub.f32 %v1534, %v1539
    %v1541 = vmul.f32 %v1540, 1.442695
    %v1542 = vpow.pop %v1541
    %v1543 = vsel %vm209, %v1542, 0.0
    %1544 = vadd.xlane.f32.xlu0 %v1543
    %v1545 = vpop.xlane.xlu0 %1544
    %v1546 = vrcp.pop %v1545
    %v1547 = vmul.f32 %v1542, %v1546
    %1548 = vrot.lane.b32.xlu0 %v199, 40
    %v1549 = vpop.permute.xlu0 %1548
    %v1552 = vsel %vm209, %v1547, 0
    %1554 = vmatprep.subr.mxu0 0.0
    %1555 = vmatpush1.msra.mxu0 0.0
    %1556 = vmatprep.subr.mxu0 0.0
    %1557 = vmatpush1.msra.mxu0 0.0
    %1558 = vmatprep.subr.mxu0 0.0
    %1559 = vmatpush1.msra.mxu0 0.0
    %1560 = vmatprep.subr.mxu0 0.0
    %1561 = vmatpush1.msra.mxu0 0.0
    %1562 = vmatprep.subr.mxu0 0.0
    %1563 = vmatpush1.msra.mxu0 0.0
    %1564 = vmatprep.subr.mxu0 0.0
    %1565 = vmatpush1.msra.mxu0 0.0
    %1566 = vmatprep.subr.mxu0 0.0
    %1567 = vmatpush1.msra.mxu0 0.0
    %1568 = vmatprep.subr.mxu0 0.0
    %1569 = vmatpush1.msra.mxu0 0.0
    %1570 = vmatprep.subr.mxu0 0.0
    %1571 = vmatpush1.msra.mxu0 0.0
    %1572 = vmatprep.subr.mxu0 0.0
    %1573 = vmatpush1.msra.mxu0 0.0
    %1574 = vmatprep.subr.mxu0 0.0
    %1575 = vmatpush1.msra.mxu0 0.0
    %1576 = vmatprep.subr.mxu0 0.0
    %1577 = vmatpush1.msra.mxu0 0.0
    %1578 = vmatprep.subr.mxu0 0.0
    %1579 = vmatpush1.msra.mxu0 0.0
    %1580 = vmatprep.subr.mxu0 0.0
    %1581 = vmatpush1.msra.mxu0 0.0
    %1582 = vmatprep.subr.mxu0 0.0
    %1583 = vmatpush1.msra.mxu0 0.0
    %1584 = vmatprep.subr.mxu0 0.0
    %1585 = vmatpush1.msra.mxu0 %v1549
    %1586 = vmatprep.subr.mxu0 0.0
    %1587 = vmatpush2.msra.mxu0 0.0
    %1588 = vmatprep.subr.mxu0 0.0
    %1589 = vmatpush2.msra.mxu0 0.0
    %1590 = vmatprep.subr.mxu0 0.0
    %1591 = vmatpush2.msra.mxu0 0.0
    %1592 = vmatprep.subr.mxu0 0.0
    %1593 = vmatpush2.msra.mxu0 0.0
    %1594 = vmatprep.subr.mxu0 0.0
    %1595 = vmatpush2.msra.mxu0 0.0
    %1596 = vmatprep.subr.mxu0 0.0
    %1597 = vmatpush2.msra.mxu0 0.0
    %1598 = vmatprep.subr.mxu0 0.0
    %1599 = vmatpush2.msra.mxu0 0.0
    %1600 = vmatprep.subr.mxu0 0.0
    %1601 = vmatpush2.msra.mxu0 0.0
    %1602 = vmatprep.subr.mxu0 0.0
    %1603 = vmatpush2.msra.mxu0 0.0
    %1604 = vmatprep.subr.mxu0 0.0
    %1605 = vmatpush2.msra.mxu0 0.0
    %1606 = vmatprep.subr.mxu0 0.0
    %1607 = vmatpush2.msra.mxu0 0.0
    %1608 = vmatprep.subr.mxu0 0.0
    %1609 = vmatpush2.msra.mxu0 0.0
    %1610 = vmatprep.subr.mxu0 0.0
    %1611 = vmatpush2.msra.mxu0 0.0
    %1612 = vmatprep.subr.mxu0 0.0
    %1613 = vmatpush2.msra.mxu0 0.0
    %1614 = vmatprep.subr.mxu0 0.0
    %1615 = vmatpush2.msra.mxu0 0.0
    %1616 = vmatprep.subr.mxu0 0.0
    %1617 = vmatpush2.msra.mxu0 0.0
    %1618 = vmatprep.mubr.f32.mxu0 0.0
    %1619 = vmatmul.mubr.f32.gmra.mxu0 %v1552
    %v1620 = vpop.f32.mrf.mxu0
    %v1621 = vadd.f32 0.0, %v1620
    %v1622 = vpop.f32.mrf.mxu0
    %1623 = vdwg.mxu0
    %1625 = vrot.lane.b32.xlu0 %v1291, 8
    %v1626 = vpop.permute.xlu0 %1625
    %1629 = vrot.lane.b32.xlu0 %v1456, 16
    %v1630 = vpop.permute.xlu0 %1629
    %1633 = vrot.lane.b32.xlu0 %v1621, 24
    %v1634 = vpop.permute.xlu0 %1633
    %v1636 = vsel %vm209, %v1126, %v1626
    %v1637 = vsel %vm879, %v1636, %v1630
    %v1638 = vsel %vm881, %v1637, %v1634
    %v1640 = vsel %vm77, %v1638, 0
    %1642 = vmatprep.subr.mxu0 0.0
    %1643 = vmatpush1.msra.mxu0 0.0
    %1644 = vmatprep.subr.mxu0 0.0
    %1645 = vmatpush1.msra.mxu0 0.0
    %1646 = vmatprep.subr.mxu0 0.0
    %1647 = vmatpush1.msra.mxu0 0.0
    %1648 = vmatprep.subr.mxu0 0.0
    %1649 = vmatpush1.msra.mxu0 0.0
    %1650 = vmatprep.subr.mxu0 0.0
    %1651 = vmatpush1.msra.mxu0 0.0
    %1652 = vmatprep.subr.mxu0 0.0
    %1653 = vmatpush1.msra.mxu0 0.0
    %1654 = vmatprep.subr.mxu0 0.0
    %1655 = vmatpush1.msra.mxu0 0.0
    %1656 = vmatprep.subr.mxu0 0.0
    %1657 = vmatpush1.msra.mxu0 0.0
    %1658 = vmatprep.subr.mxu0 0.0
    %1659 = vmatpush1.msra.mxu0 0.0
    %1660 = vmatprep.subr.mxu0 0.0
    %1661 = vmatpush1.msra.mxu0 0.0
    %1662 = vmatprep.subr.mxu0 0.0
    %1663 = vmatpush1.msra.mxu0 0.0
    %1664 = vmatprep.subr.mxu0 0.0
    %1665 = vmatpush1.msra.mxu0 0.0
    %1666 = vmatprep.subr.mxu0 0.0
    %1667 = vmatpush1.msra.mxu0 %v66
    %1668 = vmatprep.subr.mxu0 0.0
    %1669 = vmatpush1.msra.mxu0 %v63
    %1670 = vmatprep.subr.mxu0 0.0
    %1671 = vmatpush1.msra.mxu0 %v60
    %1672 = vmatprep.subr.mxu0 0.0
    %1673 = vmatpush1.msra.mxu0 %v57
    %1674 = vmatprep.subr.mxu0 0.0
    %1675 = vmatpush2.msra.mxu0 0.0
    %1676 = vmatprep.subr.mxu0 0.0
    %1677 = vmatpush2.msra.mxu0 0.0
    %1678 = vmatprep.subr.mxu0 0.0
    %1679 = vmatpush2.msra.mxu0 0.0
    %1680 = vmatprep.subr.mxu0 0.0
    %1681 = vmatpush2.msra.mxu0 0.0
    %1682 = vmatprep.subr.mxu0 0.0
    %1683 = vmatpush2.msra.mxu0 0.0
    %1684 = vmatprep.subr.mxu0 0.0
    %1685 = vmatpush2.msra.mxu0 0.0
    %1686 = vmatprep.subr.mxu0 0.0
    %1687 = vmatpush2.msra.mxu0 0.0
    %1688 = vmatprep.subr.mxu0 0.0
    %1689 = vmatpush2.msra.mxu0 0.0
    %1690 = vmatprep.subr.mxu0 0.0
    %1691 = vmatpush2.msra.mxu0 0.0
    %1692 = vmatprep.subr.mxu0 0.0
    %1693 = vmatpush2.msra.mxu0 0.0
    %1694 = vmatprep.subr.mxu0 0.0
    %1695 = vmatpush2.msra.mxu0 0.0
    %1696 = vmatprep.subr.mxu0 0.0
    %1697 = vmatpush2.msra.mxu0 0.0
    %1698 = vmatprep.subr.mxu0 0.0
    %1699 = vmatpush2.msra.mxu0 0.0
    %1700 = vmatprep.subr.mxu0 0.0
    %1701 = vmatpush2.msra.mxu0 0.0
    %1702 = vmatprep.subr.mxu0 0.0
    %1703 = vmatpush2.msra.mxu0 0.0
    %1704 = vmatprep.subr.mxu0 0.0
    %1705 = vmatpush2.msra.mxu0 0.0
    %1706 = vmatprep.mubr.f32.mxu0 0.0
    %1707 = vmatmul.mubr.f32.gmra.mxu0 %v1640
    %v1708 = vpop.f32.mrf.mxu0
    %v1709 = vadd.f32 %v886, %v1708
    %v1710 = vpop.f32.mrf.mxu0
    %1711 = vdwg.mxu0
    %v1712 = vadd.f32 %v53, %v1709
    %v1713 = vsel %vm77, %v960, 0.0
    %1714 = vadd.xlane.f32.xlu0 %v1713
    %v1715 = vpop.xlane.xlu0 %1714
    %v1716 = vsel %vm77, %v1712, 0.0
    %1717 = vadd.xlane.f32.xlu0 %v1716
    %v1718 = vpop.xlane.xlu0 %1717
    %v1719 = vmul.f32 %v1715, %v84
    %v1720 = vmul.f32 %v1718, %v84
    %v1721 = vsub.f32 %v960, %v1719
    %v1722 = vsub.f32 %v1712, %v1720
    %v1723 = vmul.f32 %v1721, %v1721
    %v1724 = vmul.f32 %v1722, %v1722
    %v1725 = vsel %vm77, %v1723, 0.0
    %1726 = vadd.xlane.f32.xlu0 %v1725
    %v1727 = vpop.xlane.xlu0 %1726
    %v1728 = vsel %vm77, %v1724, 0.0
    %1729 = vadd.xlane.f32.xlu0 %v1728
    %v1730 = vpop.xlane.xlu0 %1729
    %v1731 = vmul.f32 %v1727, 0.032258064
    %v1732 = vmul.f32 %v1730, 0.032258064
    %v1733 = vlaneseq
    %v1734 = vshrl.u32 %v1733, 7
    %v1735 = vsub.s32 3, %v1734
    %v1736 = vrot.slane %v68, %v1735
    %v1737 = vmul.f32 %v1736, %v1721
    %v1738 = vmul.f32 %v1736, %v1722
    %v1739 = vadd.f32 %v1731, 1e-06
    %v1740 = vadd.f32 %v1732, 1e-06
    %v1741 = vrsqrt.pop %v1739
    %v1742 = vrsqrt.pop %v1740
    %v1743 = vmul.f32 %v1737, %v1741
    %v1744 = vmul.f32 %v1738, %v1742
    %v1745 = vlaneseq
    %v1746 = vshrl.u32 %v1745, 7
    %v1747 = vsub.s32 4, %v1746
    %v1748 = vrot.slane %v68, %v1747
    %v1749 = vadd.f32 %v1743, %v1748
    %v1750 = vadd.f32 %v1744, %v1748
    %v1751 = vlaneseq
    %v1752 = vshrl.u32 %v1751, 7
    %v1753 = vsub.s32 6, %v1752
    %v1754 = vrot.slane %v68, %v1753
    %v1756 = vsel %vm77, %v1749, 0
    %v1759 = vsel %vm77, %v1750, 0
    %1761 = vmatprep.subr.mxu0 0.0
    %1762 = vmatpush1.msra.mxu0 0.0
    %1763 = vmatprep.subr.mxu0 0.0
    %1764 = vmatpush1.msra.mxu0 0.0
    %1765 = vmatprep.subr.mxu0 0.0
    %1766 = vmatpush1.msra.mxu0 0.0
    %1767 = vmatprep.subr.mxu0 0.0
    %1768 = vmatpush1.msra.mxu0 0.0
    %1769 = vmatprep.subr.mxu0 0.0
    %1770 = vmatpush1.msra.mxu0 0.0
    %1771 = vmatprep.subr.mxu0 0.0
    %1772 = vmatpush1.msra.mxu0 0.0
    %1773 = vmatprep.subr.mxu0 0.0
    %1774 = vmatpush1.msra.mxu0 0.0
    %1775 = vmatprep.subr.mxu0 0.0
    %1776 = vmatpush1.msra.mxu0 0.0
    %1777 = vmatprep.subr.mxu0 0.0
    %1778 = vmatpush1.msra.mxu0 0.0
    %1779 = vmatprep.subr.mxu0 0.0
    %1780 = vmatpush1.msra.mxu0 0.0
    %1781 = vmatprep.subr.mxu0 0.0
    %1782 = vmatpush1.msra.mxu0 0.0
    %1783 = vmatprep.subr.mxu0 0.0
    %1784 = vmatpush1.msra.mxu0 0.0
    %1785 = vmatprep.subr.mxu0 0.0
    %1786 = vmatpush1.msra.mxu0 %v67
    %1787 = vmatprep.subr.mxu0 0.0
    %1788 = vmatpush1.msra.mxu0 %v64
    %1789 = vmatprep.subr.mxu0 0.0
    %1790 = vmatpush1.msra.mxu0 %v61
    %1791 = vmatprep.subr.mxu0 0.0
    %1792 = vmatpush1.msra.mxu0 %v58
    %1793 = vmatprep.subr.mxu0 0.0
    %1794 = vmatpush2.msra.mxu0 0.0
    %1795 = vmatprep.subr.mxu0 0.0
    %1796 = vmatpush2.msra.mxu0 0.0
    %1797 = vmatprep.subr.mxu0 0.0
    %1798 = vmatpush2.msra.mxu0 0.0
    %1799 = vmatprep.subr.mxu0 0.0
    %1800 = vmatpush2.msra.mxu0 0.0
    %1801 = vmatprep.subr.mxu0 0.0
    %1802 = vmatpush2.msra.mxu0 0.0
    %1803 = vmatprep.subr.mxu0 0.0
    %1804 = vmatpush2.msra.mxu0 0.0
    %1805 = vmatprep.subr.mxu0 0.0
    %1806 = vmatpush2.msra.mxu0 0.0
    %1807 = vmatprep.subr.mxu0 0.0
    %1808 = vmatpush2.msra.mxu0 0.0
    %1809 = vmatprep.subr.mxu0 0.0
    %1810 = vmatpush2.msra.mxu0 0.0
    %1811 = vmatprep.subr.mxu0 0.0
    %1812 = vmatpush2.msra.mxu0 0.0
    %1813 = vmatprep.subr.mxu0 0.0
    %1814 = vmatpush2.msra.mxu0 0.0
    %1815 = vmatprep.subr.mxu0 0.0
    %1816 = vmatpush2.msra.mxu0 0.0
    %1817 = vmatprep.subr.mxu0 0.0
    %1818 = vmatpush2.msra.mxu0 0.0
    %1819 = vmatprep.subr.mxu0 0.0
    %1820 = vmatpush2.msra.mxu0 0.0
    %1821 = vmatprep.subr.mxu0 0.0
    %1822 = vmatpush2.msra.mxu0 0.0
    %1823 = vmatprep.subr.mxu0 0.0
    %1824 = vmatpush2.msra.mxu0 0.0
    %1825 = vmatprep.mubr.f32.mxu0 0.0
    %1826 = vmatmul.mubr.f32.gmra.mxu0 %v1756
    %v1827 = vpop.f32.mrf.mxu0
    %v1828 = vadd.f32 %v1754, %v1827
    %v1829 = vpop.f32.mrf.mxu0
    %1830 = vmatprep.mubr.f32.mxu0 0.0
    %1831 = vmatmul.mubr.f32.gmra.mxu0 %v1759
    %v1832 = vpop.f32.mrf.mxu0
    %v1833 = vadd.f32 %v1754, %v1832
    %v1834 = vpop.f32.mrf.mxu0
    %1835 = vdwg.mxu0
    %v1836 = vmax.f32 %v1828, 0.0
    %v1837 = vmax.f32 %v1833, 0.0
    %vm1838 = vcmask 523264
    %v1840 = vsel %vm1838, %v1836, 0
    %v1843 = vsel %vm1838, %v1837, 0
    %1845 = vmatprep.subr.mxu0 0.0
    %1846 = vmatpush1.msra.mxu0 0.0
    %1847 = vmatprep.subr.mxu0 0.0
    %1848 = vmatpush1.msra.mxu0 0.0
    %1849 = vmatprep.subr.mxu0 0.0
    %1850 = vmatpush1.msra.mxu0 0.0
    %1851 = vmatprep.subr.mxu0 0.0
    %1852 = vmatpush1.msra.mxu0 0.0
    %1853 = vmatprep.subr.mxu0 0.0
    %1854 = vmatpush1.msra.mxu0 0.0
    %1855 = vmatprep.subr.mxu0 0.0
    %1856 = vmatpush1.msra.mxu0 0.0
    %1857 = vmatprep.subr.mxu0 0.0
    %1858 = vmatpush1.msra.mxu0 0.0
    %1859 = vmatprep.subr.mxu0 0.0
    %1860 = vmatpush1.msra.mxu0 0.0
    %1861 = vmatprep.subr.mxu0 0.0
    %1862 = vmatpush1.msra.mxu0 %v76
    %1863 = vmatprep.subr.mxu0 0.0
    %1864 = vmatpush1.msra.mxu0 %v75
    %1865 = vmatprep.subr.mxu0 0.0
    %1866 = vmatpush1.msra.mxu0 %v74
    %1867 = vmatprep.subr.mxu0 0.0
    %1868 = vmatpush1.msra.mxu0 %v73
    %1869 = vmatprep.subr.mxu0 0.0
    %1870 = vmatpush1.msra.mxu0 %v72
    %1871 = vmatprep.subr.mxu0 0.0
    %1872 = vmatpush1.msra.mxu0 %v71
    %1873 = vmatprep.subr.mxu0 0.0
    %1874 = vmatpush1.msra.mxu0 %v70
    %1875 = vmatprep.subr.mxu0 0.0
    %1876 = vmatpush1.msra.mxu0 %v69
    %1877 = vmatprep.subr.mxu0 0.0
    %1878 = vmatpush2.msra.mxu0 0.0
    %1879 = vmatprep.subr.mxu0 0.0
    %1880 = vmatpush2.msra.mxu0 0.0
    %1881 = vmatprep.subr.mxu0 0.0
    %1882 = vmatpush2.msra.mxu0 0.0
    %1883 = vmatprep.subr.mxu0 0.0
    %1884 = vmatpush2.msra.mxu0 0.0
    %1885 = vmatprep.subr.mxu0 0.0
    %1886 = vmatpush2.msra.mxu0 0.0
    %1887 = vmatprep.subr.mxu0 0.0
    %1888 = vmatpush2.msra.mxu0 0.0
    %1889 = vmatprep.subr.mxu0 0.0
    %1890 = vmatpush2.msra.mxu0 0.0
    %1891 = vmatprep.subr.mxu0 0.0
    %1892 = vmatpush2.msra.mxu0 0.0
    %1893 = vmatprep.subr.mxu0 0.0
    %1894 = vmatpush2.msra.mxu0 0.0
    %1895 = vmatprep.subr.mxu0 0.0
    %1896 = vmatpush2.msra.mxu0 0.0
    %1897 = vmatprep.subr.mxu0 0.0
    %1898 = vmatpush2.msra.mxu0 0.0
    %1899 = vmatprep.subr.mxu0 0.0
    %1900 = vmatpush2.msra.mxu0 0.0
    %1901 = vmatprep.subr.mxu0 0.0
    %1902 = vmatpush2.msra.mxu0 0.0
    %1903 = vmatprep.subr.mxu0 0.0
    %1904 = vmatpush2.msra.mxu0 0.0
    %1905 = vmatprep.subr.mxu0 0.0
    %1906 = vmatpush2.msra.mxu0 0.0
    %1907 = vmatprep.subr.mxu0 0.0
    %1908 = vmatpush2.msra.mxu0 0.0
    %1909 = vmatprep.mubr.f32.mxu0 0.0
    %1910 = vmatmul.mubr.f32.gmra.mxu0 %v1840
    %v1911 = vpop.f32.mrf.mxu0
    %v1912 = vadd.f32 0.0, %v1911
    %v1913 = vpop.f32.mrf.mxu0
    %1914 = vmatprep.mubr.f32.mxu0 0.0
    %1915 = vmatmul.mubr.f32.gmra.mxu0 %v1843
    %v1916 = vpop.f32.mrf.mxu0
    %v1917 = vadd.f32 0.0, %v1916
    %v1918 = vpop.f32.mrf.mxu0
    %1919 = vdwg.mxu0
    %v1920 = vadd.f32 %v960, %v1912
    %v1921 = vadd.f32 %v1712, %v1917
    %v1922 = vlaneseq
    %v1923 = vshrl.u32 %v1922, 7
    %v1924 = vsub.s32 5, %v1923
    %v1925 = vrot.slane %v68, %v1924
    %v1926 = vadd.f32 %v1920, %v1925
    %v1927 = vadd.f32 %v1921, %v1925
    %s1928 = scalar_lea.vmem %s2, 96
    %v1929 = vld [vmem:[%s1928] sm:$0xff]
    %v1930 = vld [vmem:[%s1928 + $0x8] sm:$0xff]
    %v1931 = vld [vmem:[%s1928 + $0x10] sm:$0xff]
    %v1932 = vld [vmem:[%s1928 + $0x18] sm:$0xff]
    %v1933 = vld [vmem:[%s1928 + $0x20] sm:$0xff]
    %v1934 = vld [vmem:[%s1928 + $0x28] sm:$0xff]
    %v1935 = vld [vmem:[%s1928 + $0x30] sm:$0xff]
    %v1936 = vld [vmem:[%s1928 + $0x38] sm:$0xff]
    %v1937 = vld [vmem:[%s1928 + $0x40] sm:$0xff]
    %v1938 = vld [vmem:[%s1928 + $0x48] sm:$0xff]
    %v1939 = vld [vmem:[%s1928 + $0x50] sm:$0xff]
    %v1940 = vld [vmem:[%s1928 + $0x58] sm:$0xff]
    %s1941 = scalar_lea.vmem [#allocation5], 8
    %v1942 = vld [vmem:[%s1941] sm:$0xff]
    %s1943 = scalar_lea.vmem %s3, 64
    %v1944 = vld [vmem:[%s1943] sm:$0xff]
    %v1945 = vld [vmem:[%s1943 + $0x8] sm:$0xff]
    %v1946 = vld [vmem:[%s1943 + $0x10] sm:$0xff]
    %v1947 = vld [vmem:[%s1943 + $0x18] sm:$0xff]
    %v1948 = vld [vmem:[%s1943 + $0x20] sm:$0xff]
    %v1949 = vld [vmem:[%s1943 + $0x28] sm:$0xff]
    %v1950 = vld [vmem:[%s1943 + $0x30] sm:$0xff]
    %v1951 = vld [vmem:[%s1943 + $0x38] sm:$0xff]
    %v1952 = vsel %vm77, %v1926, 0.0
    %1953 = vadd.xlane.f32.xlu0 %v1952
    %v1954 = vpop.xlane.xlu0 %1953
    %v1955 = vsel %vm77, %v1927, 0.0
    %1956 = vadd.xlane.f32.xlu0 %v1955
    %v1957 = vpop.xlane.xlu0 %1956
    %v1958 = vmul.f32 %v1954, %v84
    %v1959 = vmul.f32 %v1957, %v84
    %v1960 = vsub.f32 %v1926, %v1958
    %v1961 = vsub.f32 %v1927, %v1959
    %v1962 = vmul.f32 %v1960, %v1960
    %v1963 = vmul.f32 %v1961, %v1961
    %v1964 = vsel %vm77, %v1962, 0.0
    %1965 = vadd.xlane.f32.xlu0 %v1964
    %v1966 = vpop.xlane.xlu0 %1965
    %v1967 = vsel %vm77, %v1963, 0.0
    %1968 = vadd.xlane.f32.xlu0 %v1967
    %v1969 = vpop.xlane.xlu0 %1968
    %v1970 = vmul.f32 %v1966, 0.032258064
    %v1971 = vmul.f32 %v1969, 0.032258064
    %v1972 = vlaneseq
    %v1973 = vshrl.u32 %v1972, 7
    %v1974 = vsub.s32 0, %v1973
    %v1975 = vrot.slane %v1942, %v1974
    %v1976 = vmul.f32 %v1975, %v1960
    %v1977 = vmul.f32 %v1975, %v1961
    %v1978 = vadd.f32 %v1970, 1e-06
    %v1979 = vadd.f32 %v1971, 1e-06
    %v1980 = vrsqrt.pop %v1978
    %v1981 = vrsqrt.pop %v1979
    %v1982 = vmul.f32 %v1976, %v1980
    %v1983 = vmul.f32 %v1977, %v1981
    %v1984 = vlaneseq
    %v1985 = vshrl.u32 %v1984, 7
    %v1986 = vsub.s32 1, %v1985
    %v1987 = vrot.slane %v1942, %v1986
    %v1988 = vadd.f32 %v1982, %v1987
    %v1989 = vadd.f32 %v1983, %v1987
    %v1990 = vlaneseq
    %v1991 = vshrl.u32 %v1990, 7
    %v1992 = vsub.s32 7, %v1991
    %v1993 = vrot.slane %v1942, %v1992
    %v1995 = vsel %vm77, %v1988, 0
    %v1998 = vsel %vm77, %v1989, 0
    %2000 = vmatprep.subr.mxu0 0.0
    %2001 = vmatpush1.msra.mxu0 0.0
    %2002 = vmatprep.subr.mxu0 0.0
    %2003 = vmatpush1.msra.mxu0 0.0
    %2004 = vmatprep.subr.mxu0 0.0
    %2005 = vmatpush1.msra.mxu0 0.0
    %2006 = vmatprep.subr.mxu0 0.0
    %2007 = vmatpush1.msra.mxu0 0.0
    %2008 = vmatprep.subr.mxu0 0.0
    %2009 = vmatpush1.msra.mxu0 0.0
    %2010 = vmatprep.subr.mxu0 0.0
    %2011 = vmatpush1.msra.mxu0 0.0
    %2012 = vmatprep.subr.mxu0 0.0
    %2013 = vmatpush1.msra.mxu0 0.0
    %2014 = vmatprep.subr.mxu0 0.0
    %2015 = vmatpush1.msra.mxu0 0.0
    %2016 = vmatprep.subr.mxu0 0.0
    %2017 = vmatpush1.msra.mxu0 0.0
    %2018 = vmatprep.subr.mxu0 0.0
    %2019 = vmatpush1.msra.mxu0 0.0
    %2020 = vmatprep.subr.mxu0 0.0
    %2021 = vmatpush1.msra.mxu0 0.0
    %2022 = vmatprep.subr.mxu0 0.0
    %2023 = vmatpush1.msra.mxu0 0.0
    %2024 = vmatprep.subr.mxu0 0.0
    %2025 = vmatpush1.msra.mxu0 %v1938
    %2026 = vmatprep.subr.mxu0 0.0
    %2027 = vmatpush1.msra.mxu0 %v1935
    %2028 = vmatprep.subr.mxu0 0.0
    %2029 = vmatpush1.msra.mxu0 %v1932
    %2030 = vmatprep.subr.mxu0 0.0
    %2031 = vmatpush1.msra.mxu0 %v1929
    %2032 = vmatprep.subr.mxu0 0.0
    %2033 = vmatpush2.msra.mxu0 0.0
    %2034 = vmatprep.subr.mxu0 0.0
    %2035 = vmatpush2.msra.mxu0 0.0
    %2036 = vmatprep.subr.mxu0 0.0
    %2037 = vmatpush2.msra.mxu0 0.0
    %2038 = vmatprep.subr.mxu0 0.0
    %2039 = vmatpush2.msra.mxu0 0.0
    %2040 = vmatprep.subr.mxu0 0.0
    %2041 = vmatpush2.msra.mxu0 0.0
    %2042 = vmatprep.subr.mxu0 0.0
    %2043 = vmatpush2.msra.mxu0 0.0
    %2044 = vmatprep.subr.mxu0 0.0
    %2045 = vmatpush2.msra.mxu0 0.0
    %2046 = vmatprep.subr.mxu0 0.0
    %2047 = vmatpush2.msra.mxu0 0.0
    %2048 = vmatprep.subr.mxu0 0.0
    %2049 = vmatpush2.msra.mxu0 0.0
    %2050 = vmatprep.subr.mxu0 0.0
    %2051 = vmatpush2.msra.mxu0 0.0
    %2052 = vmatprep.subr.mxu0 0.0
    %2053 = vmatpush2.msra.mxu0 0.0
    %2054 = vmatprep.subr.mxu0 0.0
    %2055 = vmatpush2.msra.mxu0 0.0
    %2056 = vmatprep.subr.mxu0 0.0
    %2057 = vmatpush2.msra.mxu0 0.0
    %2058 = vmatprep.subr.mxu0 0.0
    %2059 = vmatpush2.msra.mxu0 0.0
    %2060 = vmatprep.subr.mxu0 0.0
    %2061 = vmatpush2.msra.mxu0 0.0
    %2062 = vmatprep.subr.mxu0 0.0
    %2063 = vmatpush2.msra.mxu0 0.0
    %2064 = vmatprep.mubr.f32.mxu0 0.0
    %2065 = vmatmul.mubr.f32.gmra.mxu0 %v1995
    %v2066 = vpop.f32.mrf.mxu0
    %v2067 = vadd.f32 %v1993, %v2066
    %v2068 = vpop.f32.mrf.mxu0
    %2069 = vmatprep.mubr.f32.mxu0 0.0
    %2070 = vmatmul.mubr.f32.gmra.mxu0 %v1998
    %v2071 = vpop.f32.mrf.mxu0
    %v2072 = vadd.f32 %v1993, %v2071
    %v2073 = vpop.f32.mrf.mxu0
    %2074 = vdwg.mxu0
    %2076 = vrot.lane.b32.xlu0 %v2067, 96
    %v2077 = vpop.permute.xlu0 %2076
    %v2078 = vsel %vm209, %v2067, 0
    %v2080 = vsel %vm209, %v2077, 0
    %2082 = vmatprep.subr.mxu0 0.0
    %2083 = vmatpush1.xpose.msra.mxu0 0.0
    %2084 = vmatprep.subr.mxu0 0.0
    %2085 = vmatpush1.xpose.msra.mxu0 0.0
    %2086 = vmatprep.subr.mxu0 0.0
    %2087 = vmatpush1.xpose.msra.mxu0 0.0
    %2088 = vmatprep.subr.mxu0 0.0
    %2089 = vmatpush1.xpose.msra.mxu0 0.0
    %2090 = vmatprep.subr.mxu0 0.0
    %2091 = vmatpush1.xpose.msra.mxu0 0.0
    %2092 = vmatprep.subr.mxu0 0.0
    %2093 = vmatpush1.xpose.msra.mxu0 0.0
    %2094 = vmatprep.subr.mxu0 0.0
    %2095 = vmatpush1.xpose.msra.mxu0 0.0
    %2096 = vmatprep.subr.mxu0 0.0
    %2097 = vmatpush1.xpose.msra.mxu0 0.0
    %2098 = vmatprep.subr.mxu0 0.0
    %2099 = vmatpush1.xpose.msra.mxu0 0.0
    %2100 = vmatprep.subr.mxu0 0.0
    %2101 = vmatpush1.xpose.msra.mxu0 0.0
    %2102 = vmatprep.subr.mxu0 0.0
    %2103 = vmatpush1.xpose.msra.mxu0 0.0
    %2104 = vmatprep.subr.mxu0 0.0
    %2105 = vmatpush1.xpose.msra.mxu0 0.0
    %2106 = vmatprep.subr.mxu0 0.0
    %2107 = vmatpush1.xpose.msra.mxu0 0.0
    %2108 = vmatprep.subr.mxu0 0.0
    %2109 = vmatpush1.xpose.msra.mxu0 0.0
    %2110 = vmatprep.subr.mxu0 0.0
    %2111 = vmatpush1.xpose.msra.mxu0 0.0
    %2112 = vmatprep.subr.mxu0 0.0
    %2113 = vmatpush1.xpose.msra.mxu0 %v2080
    %2114 = vmatprep.subr.mxu0 0.0
    %2115 = vmatpush2.xpose.msra.mxu0 0.0
    %2116 = vmatprep.subr.mxu0 0.0
    %2117 = vmatpush2.xpose.msra.mxu0 0.0
    %2118 = vmatprep.subr.mxu0 0.0
    %2119 = vmatpush2.xpose.msra.mxu0 0.0
    %2120 = vmatprep.subr.mxu0 0.0
    %2121 = vmatpush2.xpose.msra.mxu0 0.0
    %2122 = vmatprep.subr.mxu0 0.0
    %2123 = vmatpush2.xpose.msra.mxu0 0.0
    %2124 = vmatprep.subr.mxu0 0.0
    %2125 = vmatpush2.xpose.msra.mxu0 0.0
    %2126 = vmatprep.subr.mxu0 0.0
    %2127 = vmatpush2.xpose.msra.mxu0 0.0
    %2128 = vmatprep.subr.mxu0 0.0
    %2129 = vmatpush2.xpose.msra.mxu0 0.0
    %2130 = vmatprep.subr.mxu0 0.0
    %2131 = vmatpush2.xpose.msra.mxu0 0.0
    %2132 = vmatprep.subr.mxu0 0.0
    %2133 = vmatpush2.xpose.msra.mxu0 0.0
    %2134 = vmatprep.subr.mxu0 0.0
    %2135 = vmatpush2.xpose.msra.mxu0 0.0
    %2136 = vmatprep.subr.mxu0 0.0
    %2137 = vmatpush2.xpose.msra.mxu0 0.0
    %2138 = vmatprep.subr.mxu0 0.0
    %2139 = vmatpush2.xpose.msra.mxu0 0.0
    %2140 = vmatprep.subr.mxu0 0.0
    %2141 = vmatpush2.xpose.msra.mxu0 0.0
    %2142 = vmatprep.subr.mxu0 0.0
    %2143 = vmatpush2.xpose.msra.mxu0 0.0
    %2144 = vmatprep.subr.mxu0 0.0
    %2145 = vmatpush2.xpose.msra.mxu0 0.0
    %2146 = vmatprep.mubr.f32.mxu0 0.0
    %2147 = vmatmul.mubr.f32.gmra.mxu0 %v2078
    %v2148 = vpop.f32.mrf.mxu0
    %v2149 = vadd.f32 %v205, %v2148
    %v2150 = vpop.f32.mrf.mxu0
    %2151 = vdwg.mxu0
    %v2152 = vsel %vm209, %v2149, -inf
    %2153 = vmax.xlane.f32.xlu0 %v2152
    %v2154 = vpop.xlane.xlu0 %2153
    %v2155 = vsub.f32 %v2149, %v2154
    %v2156 = vmul.f32 %v2155, 1.442695
    %v2157 = vpow.pop %v2156
    %v2158 = vsel %vm209, %v2157, 0.0
    %2159 = vadd.xlane.f32.xlu0 %v2158
    %v2160 = vpop.xlane.xlu0 %2159
    %v2161 = vrcp.pop %v2160
    %v2162 = vmul.f32 %v2157, %v2161
    %2163 = vrot.lane.b32.xlu0 %v2067, 64
    %v2164 = vpop.permute.xlu0 %2163
    %v2167 = vsel %vm209, %v2162, 0
    %2169 = vmatprep.subr.mxu0 0.0
    %2170 = vmatpush1.msra.mxu0 0.0
    %2171 = vmatprep.subr.mxu0 0.0
    %2172 = vmatpush1.msra.mxu0 0.0
    %2173 = vmatprep.subr.mxu0 0.0
    %2174 = vmatpush1.msra.mxu0 0.0
    %2175 = vmatprep.subr.mxu0 0.0
    %2176 = vmatpush1.msra.mxu0 0.0
    %2177 = vmatprep.subr.mxu0 0.0
    %2178 = vmatpush1.msra.mxu0 0.0
    %2179 = vmatprep.subr.mxu0 0.0
    %2180 = vmatpush1.msra.mxu0 0.0
    %2181 = vmatprep.subr.mxu0 0.0
    %2182 = vmatpush1.msra.mxu0 0.0
    %2183 = vmatprep.subr.mxu0 0.0
    %2184 = vmatpush1.msra.mxu0 0.0
    %2185 = vmatprep.subr.mxu0 0.0
    %2186 = vmatpush1.msra.mxu0 0.0
    %2187 = vmatprep.subr.mxu0 0.0
    %2188 = vmatpush1.msra.mxu0 0.0
    %2189 = vmatprep.subr.mxu0 0.0
    %2190 = vmatpush1.msra.mxu0 0.0
    %2191 = vmatprep.subr.mxu0 0.0
    %2192 = vmatpush1.msra.mxu0 0.0
    %2193 = vmatprep.subr.mxu0 0.0
    %2194 = vmatpush1.msra.mxu0 0.0
    %2195 = vmatprep.subr.mxu0 0.0
    %2196 = vmatpush1.msra.mxu0 0.0
    %2197 = vmatprep.subr.mxu0 0.0
    %2198 = vmatpush1.msra.mxu0 0.0
    %2199 = vmatprep.subr.mxu0 0.0
    %2200 = vmatpush1.msra.mxu0 %v2164
    %2201 = vmatprep.subr.mxu0 0.0
    %2202 = vmatpush2.msra.mxu0 0.0
    %2203 = vmatprep.subr.mxu0 0.0
    %2204 = vmatpush2.msra.mxu0 0.0
    %2205 = vmatprep.subr.mxu0 0.0
    %2206 = vmatpush2.msra.mxu0 0.0
    %2207 = vmatprep.subr.mxu0 0.0
    %2208 = vmatpush2.msra.mxu0 0.0
    %2209 = vmatprep.subr.mxu0 0.0
    %2210 = vmatpush2.msra.mxu0 0.0
    %2211 = vmatprep.subr.mxu0 0.0
    %2212 = vmatpush2.msra.mxu0 0.0
    %2213 = vmatprep.subr.mxu0 0.0
    %2214 = vmatpush2.msra.mxu0 0.0
    %2215 = vmatprep.subr.mxu0 0.0
    %2216 = vmatpush2.msra.mxu0 0.0
    %2217 = vmatprep.subr.mxu0 0.0
    %2218 = vmatpush2.msra.mxu0 0.0
    %2219 = vmatprep.subr.mxu0 0.0
    %2220 = vmatpush2.msra.mxu0 0.0
    %2221 = vmatprep.subr.mxu0 0.0
    %2222 = vmatpush2.msra.mxu0 0.0
    %2223 = vmatprep.subr.mxu0 0.0
    %2224 = vmatpush2.msra.mxu0 0.0
    %2225 = vmatprep.subr.mxu0 0.0
    %2226 = vmatpush2.msra.mxu0 0.0
    %2227 = vmatprep.subr.mxu0 0.0
    %2228 = vmatpush2.msra.mxu0 0.0
    %2229 = vmatprep.subr.mxu0 0.0
    %2230 = vmatpush2.msra.mxu0 0.0
    %2231 = vmatprep.subr.mxu0 0.0
    %2232 = vmatpush2.msra.mxu0 0.0
    %2233 = vmatprep.mubr.f32.mxu0 0.0
    %2234 = vmatmul.mubr.f32.gmra.mxu0 %v2167
    %v2235 = vpop.f32.mrf.mxu0
    %v2236 = vadd.f32 0.0, %v2235
    %v2237 = vpop.f32.mrf.mxu0
    %2238 = vdwg.mxu0
    %2239 = vrot.lane.b32.xlu0 %v2067, 120
    %v2240 = vpop.permute.xlu0 %2239
    %2241 = vrot.lane.b32.xlu0 %v2067, 88
    %v2242 = vpop.permute.xlu0 %2241
    %v2243 = vsel %vm209, %v2240, 0
    %v2245 = vsel %vm209, %v2242, 0
    %2247 = vmatprep.subr.mxu0 0.0
    %2248 = vmatpush1.xpose.msra.mxu0 0.0
    %2249 = vmatprep.subr.mxu0 0.0
    %2250 = vmatpush1.xpose.msra.mxu0 0.0
    %2251 = vmatprep.subr.mxu0 0.0
    %2252 = vmatpush1.xpose.msra.mxu0 0.0
    %2253 = vmatprep.subr.mxu0 0.0
    %2254 = vmatpush1.xpose.msra.mxu0 0.0
    %2255 = vmatprep.subr.mxu0 0.0
    %2256 = vmatpush1.xpose.msra.mxu0 0.0
    %2257 = vmatprep.subr.mxu0 0.0
    %2258 = vmatpush1.xpose.msra.mxu0 0.0
    %2259 = vmatprep.subr.mxu0 0.0
    %2260 = vmatpush1.xpose.msra.mxu0 0.0
    %2261 = vmatprep.subr.mxu0 0.0
    %2262 = vmatpush1.xpose.msra.mxu0 0.0
    %2263 = vmatprep.subr.mxu0 0.0
    %2264 = vmatpush1.xpose.msra.mxu0 0.0
    %2265 = vmatprep.subr.mxu0 0.0
    %2266 = vmatpush1.xpose.msra.mxu0 0.0
    %2267 = vmatprep.subr.mxu0 0.0
    %2268 = vmatpush1.xpose.msra.mxu0 0.0
    %2269 = vmatprep.subr.mxu0 0.0
    %2270 = vmatpush1.xpose.msra.mxu0 0.0
    %2271 = vmatprep.subr.mxu0 0.0
    %2272 = vmatpush1.xpose.msra.mxu0 0.0
    %2273 = vmatprep.subr.mxu0 0.0
    %2274 = vmatpush1.xpose.msra.mxu0 0.0
    %2275 = vmatprep.subr.mxu0 0.0
    %2276 = vmatpush1.xpose.msra.mxu0 0.0
    %2277 = vmatprep.subr.mxu0 0.0
    %2278 = vmatpush1.xpose.msra.mxu0 %v2245
    %2279 = vmatprep.subr.mxu0 0.0
    %2280 = vmatpush2.xpose.msra.mxu0 0.0
    %2281 = vmatprep.subr.mxu0 0.0
    %2282 = vmatpush2.xpose.msra.mxu0 0.0
    %2283 = vmatprep.subr.mxu0 0.0
    %2284 = vmatpush2.xpose.msra.mxu0 0.0
    %2285 = vmatprep.subr.mxu0 0.0
    %2286 = vmatpush2.xpose.msra.mxu0 0.0
    %2287 = vmatprep.subr.mxu0 0.0
    %2288 = vmatpush2.xpose.msra.mxu0 0.0
    %2289 = vmatprep.subr.mxu0 0.0
    %2290 = vmatpush2.xpose.msra.mxu0 0.0
    %2291 = vmatprep.subr.mxu0 0.0
    %2292 = vmatpush2.xpose.msra.mxu0 0.0
    %2293 = vmatprep.subr.mxu0 0.0
    %2294 = vmatpush2.xpose.msra.mxu0 0.0
    %2295 = vmatprep.subr.mxu0 0.0
    %2296 = vmatpush2.xpose.msra.mxu0 0.0
    %2297 = vmatprep.subr.mxu0 0.0
    %2298 = vmatpush2.xpose.msra.mxu0 0.0
    %2299 = vmatprep.subr.mxu0 0.0
    %2300 = vmatpush2.xpose.msra.mxu0 0.0
    %2301 = vmatprep.subr.mxu0 0.0
    %2302 = vmatpush2.xpose.msra.mxu0 0.0
    %2303 = vmatprep.subr.mxu0 0.0
    %2304 = vmatpush2.xpose.msra.mxu0 0.0
    %2305 = vmatprep.subr.mxu0 0.0
    %2306 = vmatpush2.xpose.msra.mxu0 0.0
    %2307 = vmatprep.subr.mxu0 0.0
    %2308 = vmatpush2.xpose.msra.mxu0 0.0
    %2309 = vmatprep.subr.mxu0 0.0
    %2310 = vmatpush2.xpose.msra.mxu0 0.0
    %2311 = vmatprep.mubr.f32.mxu0 0.0
    %2312 = vmatmul.mubr.f32.gmra.mxu0 %v2243
    %v2313 = vpop.f32.mrf.mxu0
    %v2314 = vadd.f32 %v205, %v2313
    %v2315 = vpop.f32.mrf.mxu0
    %2316 = vdwg.mxu0
    %v2317 = vsel %vm209, %v2314, -inf
    %2318 = vmax.xlane.f32.xlu0 %v2317
    %v2319 = vpop.xlane.xlu0 %2318
    %v2320 = vsub.f32 %v2314, %v2319
    %v2321 = vmul.f32 %v2320, 1.442695
    %v2322 = vpow.pop %v2321
    %v2323 = vsel %vm209, %v2322, 0.0
    %2324 = vadd.xlane.f32.xlu0 %v2323
    %v2325 = vpop.xlane.xlu0 %2324
    %v2326 = vrcp.pop %v2325
    %v2327 = vmul.f32 %v2322, %v2326
    %2328 = vrot.lane.b32.xlu0 %v2067, 56
    %v2329 = vpop.permute.xlu0 %2328
    %v2332 = vsel %vm209, %v2327, 0
    %2334 = vmatprep.subr.mxu0 0.0
    %2335 = vmatpush1.msra.mxu0 0.0
    %2336 = vmatprep.subr.mxu0 0.0
    %2337 = vmatpush1.msra.mxu0 0.0
    %2338 = vmatprep.subr.mxu0 0.0
    %2339 = vmatpush1.msra.mxu0 0.0
    %2340 = vmatprep.subr.mxu0 0.0
    %2341 = vmatpush1.msra.mxu0 0.0
    %2342 = vmatprep.subr.mxu0 0.0
    %2343 = vmatpush1.msra.mxu0 0.0
    %2344 = vmatprep.subr.mxu0 0.0
    %2345 = vmatpush1.msra.mxu0 0.0
    %2346 = vmatprep.subr.mxu0 0.0
    %2347 = vmatpush1.msra.mxu0 0.0
    %2348 = vmatprep.subr.mxu0 0.0
    %2349 = vmatpush1.msra.mxu0 0.0
    %2350 = vmatprep.subr.mxu0 0.0
    %2351 = vmatpush1.msra.mxu0 0.0
    %2352 = vmatprep.subr.mxu0 0.0
    %2353 = vmatpush1.msra.mxu0 0.0
    %2354 = vmatprep.subr.mxu0 0.0
    %2355 = vmatpush1.msra.mxu0 0.0
    %2356 = vmatprep.subr.mxu0 0.0
    %2357 = vmatpush1.msra.mxu0 0.0
    %2358 = vmatprep.subr.mxu0 0.0
    %2359 = vmatpush1.msra.mxu0 0.0
    %2360 = vmatprep.subr.mxu0 0.0
    %2361 = vmatpush1.msra.mxu0 0.0
    %2362 = vmatprep.subr.mxu0 0.0
    %2363 = vmatpush1.msra.mxu0 0.0
    %2364 = vmatprep.subr.mxu0 0.0
    %2365 = vmatpush1.msra.mxu0 %v2329
    %2366 = vmatprep.subr.mxu0 0.0
    %2367 = vmatpush2.msra.mxu0 0.0
    %2368 = vmatprep.subr.mxu0 0.0
    %2369 = vmatpush2.msra.mxu0 0.0
    %2370 = vmatprep.subr.mxu0 0.0
    %2371 = vmatpush2.msra.mxu0 0.0
    %2372 = vmatprep.subr.mxu0 0.0
    %2373 = vmatpush2.msra.mxu0 0.0
    %2374 = vmatprep.subr.mxu0 0.0
    %2375 = vmatpush2.msra.mxu0 0.0
    %2376 = vmatprep.subr.mxu0 0.0
    %2377 = vmatpush2.msra.mxu0 0.0
    %2378 = vmatprep.subr.mxu0 0.0
    %2379 = vmatpush2.msra.mxu0 0.0
    %2380 = vmatprep.subr.mxu0 0.0
    %2381 = vmatpush2.msra.mxu0 0.0
    %2382 = vmatprep.subr.mxu0 0.0
    %2383 = vmatpush2.msra.mxu0 0.0
    %2384 = vmatprep.subr.mxu0 0.0
    %2385 = vmatpush2.msra.mxu0 0.0
    %2386 = vmatprep.subr.mxu0 0.0
    %2387 = vmatpush2.msra.mxu0 0.0
    %2388 = vmatprep.subr.mxu0 0.0
    %2389 = vmatpush2.msra.mxu0 0.0
    %2390 = vmatprep.subr.mxu0 0.0
    %2391 = vmatpush2.msra.mxu0 0.0
    %2392 = vmatprep.subr.mxu0 0.0
    %2393 = vmatpush2.msra.mxu0 0.0
    %2394 = vmatprep.subr.mxu0 0.0
    %2395 = vmatpush2.msra.mxu0 0.0
    %2396 = vmatprep.subr.mxu0 0.0
    %2397 = vmatpush2.msra.mxu0 0.0
    %2398 = vmatprep.mubr.f32.mxu0 0.0
    %2399 = vmatmul.mubr.f32.gmra.mxu0 %v2332
    %v2400 = vpop.f32.mrf.mxu0
    %v2401 = vadd.f32 0.0, %v2400
    %v2402 = vpop.f32.mrf.mxu0
    %2403 = vdwg.mxu0
    %2404 = vrot.lane.b32.xlu0 %v2067, 112
    %v2405 = vpop.permute.xlu0 %2404
    %2406 = vrot.lane.b32.xlu0 %v2067, 80
    %v2407 = vpop.permute.xlu0 %2406
    %v2408 = vsel %vm209, %v2405, 0
    %v2410 = vsel %vm209, %v2407, 0
    %2412 = vmatprep.subr.mxu0 0.0
    %2413 = vmatpush1.xpose.msra.mxu0 0.0
    %2414 = vmatprep.subr.mxu0 0.0
    %2415 = vmatpush1.xpose.msra.mxu0 0.0
    %2416 = vmatprep.subr.mxu0 0.0
    %2417 = vmatpush1.xpose.msra.mxu0 0.0
    %2418 = vmatprep.subr.mxu0 0.0
    %2419 = vmatpush1.xpose.msra.mxu0 0.0
    %2420 = vmatprep.subr.mxu0 0.0
    %2421 = vmatpush1.xpose.msra.mxu0 0.0
    %2422 = vmatprep.subr.mxu0 0.0
    %2423 = vmatpush1.xpose.msra.mxu0 0.0
    %2424 = vmatprep.subr.mxu0 0.0
    %2425 = vmatpush1.xpose.msra.mxu0 0.0
    %2426 = vmatprep.subr.mxu0 0.0
    %2427 = vmatpush1.xpose.msra.mxu0 0.0
    %2428 = vmatprep.subr.mxu0 0.0
    %2429 = vmatpush1.xpose.msra.mxu0 0.0
    %2430 = vmatprep.subr.mxu0 0.0
    %2431 = vmatpush1.xpose.msra.mxu0 0.0
    %2432 = vmatprep.subr.mxu0 0.0
    %2433 = vmatpush1.xpose.msra.mxu0 0.0
    %2434 = vmatprep.subr.mxu0 0.0
    %2435 = vmatpush1.xpose.msra.mxu0 0.0
    %2436 = vmatprep.subr.mxu0 0.0
    %2437 = vmatpush1.xpose.msra.mxu0 0.0
    %2438 = vmatprep.subr.mxu0 0.0
    %2439 = vmatpush1.xpose.msra.mxu0 0.0
    %2440 = vmatprep.subr.mxu0 0.0
    %2441 = vmatpush1.xpose.msra.mxu0 0.0
    %2442 = vmatprep.subr.mxu0 0.0
    %2443 = vmatpush1.xpose.msra.mxu0 %v2410
    %2444 = vmatprep.subr.mxu0 0.0
    %2445 = vmatpush2.xpose.msra.mxu0 0.0
    %2446 = vmatprep.subr.mxu0 0.0
    %2447 = vmatpush2.xpose.msra.mxu0 0.0
    %2448 = vmatprep.subr.mxu0 0.0
    %2449 = vmatpush2.xpose.msra.mxu0 0.0
    %2450 = vmatprep.subr.mxu0 0.0
    %2451 = vmatpush2.xpose.msra.mxu0 0.0
    %2452 = vmatprep.subr.mxu0 0.0
    %2453 = vmatpush2.xpose.msra.mxu0 0.0
    %2454 = vmatprep.subr.mxu0 0.0
    %2455 = vmatpush2.xpose.msra.mxu0 0.0
    %2456 = vmatprep.subr.mxu0 0.0
    %2457 = vmatpush2.xpose.msra.mxu0 0.0
    %2458 = vmatprep.subr.mxu0 0.0
    %2459 = vmatpush2.xpose.msra.mxu0 0.0
    %2460 = vmatprep.subr.mxu0 0.0
    %2461 = vmatpush2.xpose.msra.mxu0 0.0
    %2462 = vmatprep.subr.mxu0 0.0
    %2463 = vmatpush2.xpose.msra.mxu0 0.0
    %2464 = vmatprep.subr.mxu0 0.0
    %2465 = vmatpush2.xpose.msra.mxu0 0.0
    %2466 = vmatprep.subr.mxu0 0.0
    %2467 = vmatpush2.xpose.msra.mxu0 0.0
    %2468 = vmatprep.subr.mxu0 0.0
    %2469 = vmatpush2.xpose.msra.mxu0 0.0
    %2470 = vmatprep.subr.mxu0 0.0
    %2471 = vmatpush2.xpose.msra.mxu0 0.0
    %2472 = vmatprep.subr.mxu0 0.0
    %2473 = vmatpush2.xpose.msra.mxu0 0.0
    %2474 = vmatprep.subr.mxu0 0.0
    %2475 = vmatpush2.xpose.msra.mxu0 0.0
    %2476 = vmatprep.mubr.f32.mxu0 0.0
    %2477 = vmatmul.mubr.f32.gmra.mxu0 %v2408
    %v2478 = vpop.f32.mrf.mxu0
    %v2479 = vadd.f32 %v205, %v2478
    %v2480 = vpop.f32.mrf.mxu0
    %2481 = vdwg.mxu0
    %v2482 = vsel %vm209, %v2479, -inf
    %2483 = vmax.xlane.f32.xlu0 %v2482
    %v2484 = vpop.xlane.xlu0 %2483
    %v2485 = vsub.f32 %v2479, %v2484
    %v2486 = vmul.f32 %v2485, 1.442695
    %v2487 = vpow.pop %v2486
    %v2488 = vsel %vm209, %v2487, 0.0
    %2489 = vadd.xlane.f32.xlu0 %v2488
    %v2490 = vpop.xlane.xlu0 %2489
    %v2491 = vrcp.pop %v2490
    %v2492 = vmul.f32 %v2487, %v2491
    %2493 = vrot.lane.b32.xlu0 %v2067, 48
    %v2494 = vpop.permute.xlu0 %2493
    %v2497 = vsel %vm209, %v2492, 0
    %2499 = vmatprep.subr.mxu0 0.0
    %2500 = vmatpush1.msra.mxu0 0.0
    %2501 = vmatprep.subr.mxu0 0.0
    %2502 = vmatpush1.msra.mxu0 0.0
    %2503 = vmatprep.subr.mxu0 0.0
    %2504 = vmatpush1.msra.mxu0 0.0
    %2505 = vmatprep.subr.mxu0 0.0
    %2506 = vmatpush1.msra.mxu0 0.0
    %2507 = vmatprep.subr.mxu0 0.0
    %2508 = vmatpush1.msra.mxu0 0.0
    %2509 = vmatprep.subr.mxu0 0.0
    %2510 = vmatpush1.msra.mxu0 0.0
    %2511 = vmatprep.subr.mxu0 0.0
    %2512 = vmatpush1.msra.mxu0 0.0
    %2513 = vmatprep.subr.mxu0 0.0
    %2514 = vmatpush1.msra.mxu0 0.0
    %2515 = vmatprep.subr.mxu0 0.0
    %2516 = vmatpush1.msra.mxu0 0.0
    %2517 = vmatprep.subr.mxu0 0.0
    %2518 = vmatpush1.msra.mxu0 0.0
    %2519 = vmatprep.subr.mxu0 0.0
    %2520 = vmatpush1.msra.mxu0 0.0
    %2521 = vmatprep.subr.mxu0 0.0
    %2522 = vmatpush1.msra.mxu0 0.0
    %2523 = vmatprep.subr.mxu0 0.0
    %2524 = vmatpush1.msra.mxu0 0.0
    %2525 = vmatprep.subr.mxu0 0.0
    %2526 = vmatpush1.msra.mxu0 0.0
    %2527 = vmatprep.subr.mxu0 0.0
    %2528 = vmatpush1.msra.mxu0 0.0
    %2529 = vmatprep.subr.mxu0 0.0
    %2530 = vmatpush1.msra.mxu0 %v2494
    %2531 = vmatprep.subr.mxu0 0.0
    %2532 = vmatpush2.msra.mxu0 0.0
    %2533 = vmatprep.subr.mxu0 0.0
    %2534 = vmatpush2.msra.mxu0 0.0
    %2535 = vmatprep.subr.mxu0 0.0
    %2536 = vmatpush2.msra.mxu0 0.0
    %2537 = vmatprep.subr.mxu0 0.0
    %2538 = vmatpush2.msra.mxu0 0.0
    %2539 = vmatprep.subr.mxu0 0.0
    %2540 = vmatpush2.msra.mxu0 0.0
    %2541 = vmatprep.subr.mxu0 0.0
    %2542 = vmatpush2.msra.mxu0 0.0
    %2543 = vmatprep.subr.mxu0 0.0
    %2544 = vmatpush2.msra.mxu0 0.0
    %2545 = vmatprep.subr.mxu0 0.0
    %2546 = vmatpush2.msra.mxu0 0.0
    %2547 = vmatprep.subr.mxu0 0.0
    %2548 = vmatpush2.msra.mxu0 0.0
    %2549 = vmatprep.subr.mxu0 0.0
    %2550 = vmatpush2.msra.mxu0 0.0
    %2551 = vmatprep.subr.mxu0 0.0
    %2552 = vmatpush2.msra.mxu0 0.0
    %2553 = vmatprep.subr.mxu0 0.0
    %2554 = vmatpush2.msra.mxu0 0.0
    %2555 = vmatprep.subr.mxu0 0.0
    %2556 = vmatpush2.msra.mxu0 0.0
    %2557 = vmatprep.subr.mxu0 0.0
    %2558 = vmatpush2.msra.mxu0 0.0
    %2559 = vmatprep.subr.mxu0 0.0
    %2560 = vmatpush2.msra.mxu0 0.0
    %2561 = vmatprep.subr.mxu0 0.0
    %2562 = vmatpush2.msra.mxu0 0.0
    %2563 = vmatprep.mubr.f32.mxu0 0.0
    %2564 = vmatmul.mubr.f32.gmra.mxu0 %v2497
    %v2565 = vpop.f32.mrf.mxu0
    %v2566 = vadd.f32 0.0, %v2565
    %v2567 = vpop.f32.mrf.mxu0
    %2568 = vdwg.mxu0
    %2569 = vrot.lane.b32.xlu0 %v2067, 104
    %v2570 = vpop.permute.xlu0 %2569
    %2571 = vrot.lane.b32.xlu0 %v2067, 72
    %v2572 = vpop.permute.xlu0 %2571
    %v2573 = vsel %vm209, %v2570, 0
    %v2575 = vsel %vm209, %v2572, 0
    %2577 = vmatprep.subr.mxu0 0.0
    %2578 = vmatpush1.xpose.msra.mxu0 0.0
    %2579 = vmatprep.subr.mxu0 0.0
    %2580 = vmatpush1.xpose.msra.mxu0 0.0
    %2581 = vmatprep.subr.mxu0 0.0
    %2582 = vmatpush1.xpose.msra.mxu0 0.0
    %2583 = vmatprep.subr.mxu0 0.0
    %2584 = vmatpush1.xpose.msra.mxu0 0.0
    %2585 = vmatprep.subr.mxu0 0.0
    %2586 = vmatpush1.xpose.msra.mxu0 0.0
    %2587 = vmatprep.subr.mxu0 0.0
    %2588 = vmatpush1.xpose.msra.mxu0 0.0
    %2589 = vmatprep.subr.mxu0 0.0
    %2590 = vmatpush1.xpose.msra.mxu0 0.0
    %2591 = vmatprep.subr.mxu0 0.0
    %2592 = vmatpush1.xpose.msra.mxu0 0.0
    %2593 = vmatprep.subr.mxu0 0.0
    %2594 = vmatpush1.xpose.msra.mxu0 0.0
    %2595 = vmatprep.subr.mxu0 0.0
    %2596 = vmatpush1.xpose.msra.mxu0 0.0
    %2597 = vmatprep.subr.mxu0 0.0
    %2598 = vmatpush1.xpose.msra.mxu0 0.0
    %2599 = vmatprep.subr.mxu0 0.0
    %2600 = vmatpush1.xpose.msra.mxu0 0.0
    %2601 = vmatprep.subr.mxu0 0.0
    %2602 = vmatpush1.xpose.msra.mxu0 0.0
    %2603 = vmatprep.subr.mxu0 0.0
    %2604 = vmatpush1.xpose.msra.mxu0 0.0
    %2605 = vmatprep.subr.mxu0 0.0
    %2606 = vmatpush1.xpose.msra.mxu0 0.0
    %2607 = vmatprep.subr.mxu0 0.0
    %2608 = vmatpush1.xpose.msra.mxu0 %v2575
    %2609 = vmatprep.subr.mxu0 0.0
    %2610 = vmatpush2.xpose.msra.mxu0 0.0
    %2611 = vmatprep.subr.mxu0 0.0
    %2612 = vmatpush2.xpose.msra.mxu0 0.0
    %2613 = vmatprep.subr.mxu0 0.0
    %2614 = vmatpush2.xpose.msra.mxu0 0.0
    %2615 = vmatprep.subr.mxu0 0.0
    %2616 = vmatpush2.xpose.msra.mxu0 0.0
    %2617 = vmatprep.subr.mxu0 0.0
    %2618 = vmatpush2.xpose.msra.mxu0 0.0
    %2619 = vmatprep.subr.mxu0 0.0
    %2620 = vmatpush2.xpose.msra.mxu0 0.0
    %2621 = vmatprep.subr.mxu0 0.0
    %2622 = vmatpush2.xpose.msra.mxu0 0.0
    %2623 = vmatprep.subr.mxu0 0.0
    %2624 = vmatpush2.xpose.msra.mxu0 0.0
    %2625 = vmatprep.subr.mxu0 0.0
    %2626 = vmatpush2.xpose.msra.mxu0 0.0
    %2627 = vmatprep.subr.mxu0 0.0
    %2628 = vmatpush2.xpose.msra.mxu0 0.0
    %2629 = vmatprep.subr.mxu0 0.0
    %2630 = vmatpush2.xpose.msra.mxu0 0.0
    %2631 = vmatprep.subr.mxu0 0.0
    %2632 = vmatpush2.xpose.msra.mxu0 0.0
    %2633 = vmatprep.subr.mxu0 0.0
    %2634 = vmatpush2.xpose.msra.mxu0 0.0
    %2635 = vmatprep.subr.mxu0 0.0
    %2636 = vmatpush2.xpose.msra.mxu0 0.0
    %2637 = vmatprep.subr.mxu0 0.0
    %2638 = vmatpush2.xpose.msra.mxu0 0.0
    %2639 = vmatprep.subr.mxu0 0.0
    %2640 = vmatpush2.xpose.msra.mxu0 0.0
    %2641 = vmatprep.mubr.f32.mxu0 0.0
    %2642 = vmatmul.mubr.f32.gmra.mxu0 %v2573
    %v2643 = vpop.f32.mrf.mxu0
    %v2644 = vadd.f32 %v205, %v2643
    %v2645 = vpop.f32.mrf.mxu0
    %2646 = vdwg.mxu0
    %v2647 = vsel %vm209, %v2644, -inf
    %2648 = vmax.xlane.f32.xlu0 %v2647
    %v2649 = vpop.xlane.xlu0 %2648
    %v2650 = vsub.f32 %v2644, %v2649
    %v2651 = vmul.f32 %v2650, 1.442695
    %v2652 = vpow.pop %v2651
    %v2653 = vsel %vm209, %v2652, 0.0
    %2654 = vadd.xlane.f32.xlu0 %v2653
    %v2655 = vpop.xlane.xlu0 %2654
    %v2656 = vrcp.pop %v2655
    %v2657 = vmul.f32 %v2652, %v2656
    %2658 = vrot.lane.b32.xlu0 %v2067, 40
    %v2659 = vpop.permute.xlu0 %2658
    %v2662 = vsel %vm209, %v2657, 0
    %2664 = vmatprep.subr.mxu0 0.0
    %2665 = vmatpush1.msra.mxu0 0.0
    %2666 = vmatprep.subr.mxu0 0.0
    %2667 = vmatpush1.msra.mxu0 0.0
    %2668 = vmatprep.subr.mxu0 0.0
    %2669 = vmatpush1.msra.mxu0 0.0
    %2670 = vmatprep.subr.mxu0 0.0
    %2671 = vmatpush1.msra.mxu0 0.0
    %2672 = vmatprep.subr.mxu0 0.0
    %2673 = vmatpush1.msra.mxu0 0.0
    %2674 = vmatprep.subr.mxu0 0.0
    %2675 = vmatpush1.msra.mxu0 0.0
    %2676 = vmatprep.subr.mxu0 0.0
    %2677 = vmatpush1.msra.mxu0 0.0
    %2678 = vmatprep.subr.mxu0 0.0
    %2679 = vmatpush1.msra.mxu0 0.0
    %2680 = vmatprep.subr.mxu0 0.0
    %2681 = vmatpush1.msra.mxu0 0.0
    %2682 = vmatprep.subr.mxu0 0.0
    %2683 = vmatpush1.msra.mxu0 0.0
    %2684 = vmatprep.subr.mxu0 0.0
    %2685 = vmatpush1.msra.mxu0 0.0
    %2686 = vmatprep.subr.mxu0 0.0
    %2687 = vmatpush1.msra.mxu0 0.0
    %2688 = vmatprep.subr.mxu0 0.0
    %2689 = vmatpush1.msra.mxu0 0.0
    %2690 = vmatprep.subr.mxu0 0.0
    %2691 = vmatpush1.msra.mxu0 0.0
    %2692 = vmatprep.subr.mxu0 0.0
    %2693 = vmatpush1.msra.mxu0 0.0
    %2694 = vmatprep.subr.mxu0 0.0
    %2695 = vmatpush1.msra.mxu0 %v2659
    %2696 = vmatprep.subr.mxu0 0.0
    %2697 = vmatpush2.msra.mxu0 0.0
    %2698 = vmatprep.subr.mxu0 0.0
    %2699 = vmatpush2.msra.mxu0 0.0
    %2700 = vmatprep.subr.mxu0 0.0
    %2701 = vmatpush2.msra.mxu0 0.0
    %2702 = vmatprep.subr.mxu0 0.0
    %2703 = vmatpush2.msra.mxu0 0.0
    %2704 = vmatprep.subr.mxu0 0.0
    %2705 = vmatpush2.msra.mxu0 0.0
    %2706 = vmatprep.subr.mxu0 0.0
    %2707 = vmatpush2.msra.mxu0 0.0
    %2708 = vmatprep.subr.mxu0 0.0
    %2709 = vmatpush2.msra.mxu0 0.0
    %2710 = vmatprep.subr.mxu0 0.0
    %2711 = vmatpush2.msra.mxu0 0.0
    %2712 = vmatprep.subr.mxu0 0.0
    %2713 = vmatpush2.msra.mxu0 0.0
    %2714 = vmatprep.subr.mxu0 0.0
    %2715 = vmatpush2.msra.mxu0 0.0
    %2716 = vmatprep.subr.mxu0 0.0
    %2717 = vmatpush2.msra.mxu0 0.0
    %2718 = vmatprep.subr.mxu0 0.0
    %2719 = vmatpush2.msra.mxu0 0.0
    %2720 = vmatprep.subr.mxu0 0.0
    %2721 = vmatpush2.msra.mxu0 0.0
    %2722 = vmatprep.subr.mxu0 0.0
    %2723 = vmatpush2.msra.mxu0 0.0
    %2724 = vmatprep.subr.mxu0 0.0
    %2725 = vmatpush2.msra.mxu0 0.0
    %2726 = vmatprep.subr.mxu0 0.0
    %2727 = vmatpush2.msra.mxu0 0.0
    %2728 = vmatprep.mubr.f32.mxu0 0.0
    %2729 = vmatmul.mubr.f32.gmra.mxu0 %v2662
    %v2730 = vpop.f32.mrf.mxu0
    %v2731 = vadd.f32 0.0, %v2730
    %v2732 = vpop.f32.mrf.mxu0
    %2733 = vdwg.mxu0
    %2735 = vrot.lane.b32.xlu0 %v2401, 8
    %v2736 = vpop.permute.xlu0 %2735
    %2739 = vrot.lane.b32.xlu0 %v2566, 16
    %v2740 = vpop.permute.xlu0 %2739
    %2743 = vrot.lane.b32.xlu0 %v2731, 24
    %v2744 = vpop.permute.xlu0 %2743
    %v2746 = vsel %vm209, %v2236, %v2736
    %v2747 = vsel %vm879, %v2746, %v2740
    %v2748 = vsel %vm881, %v2747, %v2744
    %v2749 = vlaneseq
    %v2750 = vshrl.u32 %v2749, 7
    %v2751 = vsub.s32 2, %v2750
    %v2752 = vrot.slane %v1942, %v2751
    %v2754 = vsel %vm77, %v2748, 0
    %2756 = vmatprep.subr.mxu0 0.0
    %2757 = vmatpush1.msra.mxu0 0.0
    %2758 = vmatprep.subr.mxu0 0.0
    %2759 = vmatpush1.msra.mxu0 0.0
    %2760 = vmatprep.subr.mxu0 0.0
    %2761 = vmatpush1.msra.mxu0 0.0
    %2762 = vmatprep.subr.mxu0 0.0
    %2763 = vmatpush1.msra.mxu0 0.0
    %2764 = vmatprep.subr.mxu0 0.0
    %2765 = vmatpush1.msra.mxu0 0.0
    %2766 = vmatprep.subr.mxu0 0.0
    %2767 = vmatpush1.msra.mxu0 0.0
    %2768 = vmatprep.subr.mxu0 0.0
    %2769 = vmatpush1.msra.mxu0 0.0
    %2770 = vmatprep.subr.mxu0 0.0
    %2771 = vmatpush1.msra.mxu0 0.0
    %2772 = vmatprep.subr.mxu0 0.0
    %2773 = vmatpush1.msra.mxu0 0.0
    %2774 = vmatprep.subr.mxu0 0.0
    %2775 = vmatpush1.msra.mxu0 0.0
    %2776 = vmatprep.subr.mxu0 0.0
    %2777 = vmatpush1.msra.mxu0 0.0
    %2778 = vmatprep.subr.mxu0 0.0
    %2779 = vmatpush1.msra.mxu0 0.0
    %2780 = vmatprep.subr.mxu0 0.0
    %2781 = vmatpush1.msra.mxu0 %v1939
    %2782 = vmatprep.subr.mxu0 0.0
    %2783 = vmatpush1.msra.mxu0 %v1936
    %2784 = vmatprep.subr.mxu0 0.0
    %2785 = vmatpush1.msra.mxu0 %v1933
    %2786 = vmatprep.subr.mxu0 0.0
    %2787 = vmatpush1.msra.mxu0 %v1930
    %2788 = vmatprep.subr.mxu0 0.0
    %2789 = vmatpush2.msra.mxu0 0.0
    %2790 = vmatprep.subr.mxu0 0.0
    %2791 = vmatpush2.msra.mxu0 0.0
    %2792 = vmatprep.subr.mxu0 0.0
    %2793 = vmatpush2.msra.mxu0 0.0
    %2794 = vmatprep.subr.mxu0 0.0
    %2795 = vmatpush2.msra.mxu0 0.0
    %2796 = vmatprep.subr.mxu0 0.0
    %2797 = vmatpush2.msra.mxu0 0.0
    %2798 = vmatprep.subr.mxu0 0.0
    %2799 = vmatpush2.msra.mxu0 0.0
    %2800 = vmatprep.subr.mxu0 0.0
    %2801 = vmatpush2.msra.mxu0 0.0
    %2802 = vmatprep.subr.mxu0 0.0
    %2803 = vmatpush2.msra.mxu0 0.0
    %2804 = vmatprep.subr.mxu0 0.0
    %2805 = vmatpush2.msra.mxu0 0.0
    %2806 = vmatprep.subr.mxu0 0.0
    %2807 = vmatpush2.msra.mxu0 0.0
    %2808 = vmatprep.subr.mxu0 0.0
    %2809 = vmatpush2.msra.mxu0 0.0
    %2810 = vmatprep.subr.mxu0 0.0
    %2811 = vmatpush2.msra.mxu0 0.0
    %2812 = vmatprep.subr.mxu0 0.0
    %2813 = vmatpush2.msra.mxu0 0.0
    %2814 = vmatprep.subr.mxu0 0.0
    %2815 = vmatpush2.msra.mxu0 0.0
    %2816 = vmatprep.subr.mxu0 0.0
    %2817 = vmatpush2.msra.mxu0 0.0
    %2818 = vmatprep.subr.mxu0 0.0
    %2819 = vmatpush2.msra.mxu0 0.0
    %2820 = vmatprep.mubr.f32.mxu0 0.0
    %2821 = vmatmul.mubr.f32.gmra.mxu0 %v2754
    %v2822 = vpop.f32.mrf.mxu0
    %v2823 = vadd.f32 %v2752, %v2822
    %v2824 = vpop.f32.mrf.mxu0
    %2825 = vdwg.mxu0
    %v2826 = vadd.f32 %v1926, %v2823
    %2828 = vrot.lane.b32.xlu0 %v2072, 96
    %v2829 = vpop.permute.xlu0 %2828
    %v2830 = vsel %vm209, %v2072, 0
    %v2832 = vsel %vm209, %v2829, 0
    %2834 = vmatprep.subr.mxu0 0.0
    %2835 = vmatpush1.xpose.msra.mxu0 0.0
    %2836 = vmatprep.subr.mxu0 0.0
    %2837 = vmatpush1.xpose.msra.mxu0 0.0
    %2838 = vmatprep.subr.mxu0 0.0
    %2839 = vmatpush1.xpose.msra.mxu0 0.0
    %2840 = vmatprep.subr.mxu0 0.0
    %2841 = vmatpush1.xpose.msra.mxu0 0.0
    %2842 = vmatprep.subr.mxu0 0.0
    %2843 = vmatpush1.xpose.msra.mxu0 0.0
    %2844 = vmatprep.subr.mxu0 0.0
    %2845 = vmatpush1.xpose.msra.mxu0 0.0
    %2846 = vmatprep.subr.mxu0 0.0
    %2847 = vmatpush1.xpose.msra.mxu0 0.0
    %2848 = vmatprep.subr.mxu0 0.0
    %2849 = vmatpush1.xpose.msra.mxu0 0.0
    %2850 = vmatprep.subr.mxu0 0.0
    %2851 = vmatpush1.xpose.msra.mxu0 0.0
    %2852 = vmatprep.subr.mxu0 0.0
    %2853 = vmatpush1.xpose.msra.mxu0 0.0
    %2854 = vmatprep.subr.mxu0 0.0
    %2855 = vmatpush1.xpose.msra.mxu0 0.0
    %2856 = vmatprep.subr.mxu0 0.0
    %2857 = vmatpush1.xpose.msra.mxu0 0.0
    %2858 = vmatprep.subr.mxu0 0.0
    %2859 = vmatpush1.xpose.msra.mxu0 0.0
    %2860 = vmatprep.subr.mxu0 0.0
    %2861 = vmatpush1.xpose.msra.mxu0 0.0
    %2862 = vmatprep.subr.mxu0 0.0
    %2863 = vmatpush1.xpose.msra.mxu0 0.0
    %2864 = vmatprep.subr.mxu0 0.0
    %2865 = vmatpush1.xpose.msra.mxu0 %v2832
    %2866 = vmatprep.subr.mxu0 0.0
    %2867 = vmatpush2.xpose.msra.mxu0 0.0
    %2868 = vmatprep.subr.mxu0 0.0
    %2869 = vmatpush2.xpose.msra.mxu0 0.0
    %2870 = vmatprep.subr.mxu0 0.0
    %2871 = vmatpush2.xpose.msra.mxu0 0.0
    %2872 = vmatprep.subr.mxu0 0.0
    %2873 = vmatpush2.xpose.msra.mxu0 0.0
    %2874 = vmatprep.subr.mxu0 0.0
    %2875 = vmatpush2.xpose.msra.mxu0 0.0
    %2876 = vmatprep.subr.mxu0 0.0
    %2877 = vmatpush2.xpose.msra.mxu0 0.0
    %2878 = vmatprep.subr.mxu0 0.0
    %2879 = vmatpush2.xpose.msra.mxu0 0.0
    %2880 = vmatprep.subr.mxu0 0.0
    %2881 = vmatpush2.xpose.msra.mxu0 0.0
    %2882 = vmatprep.subr.mxu0 0.0
    %2883 = vmatpush2.xpose.msra.mxu0 0.0
    %2884 = vmatprep.subr.mxu0 0.0
    %2885 = vmatpush2.xpose.msra.mxu0 0.0
    %2886 = vmatprep.subr.mxu0 0.0
    %2887 = vmatpush2.xpose.msra.mxu0 0.0
    %2888 = vmatprep.subr.mxu0 0.0
    %2889 = vmatpush2.xpose.msra.mxu0 0.0
    %2890 = vmatprep.subr.mxu0 0.0
    %2891 = vmatpush2.xpose.msra.mxu0 0.0
    %2892 = vmatprep.subr.mxu0 0.0
    %2893 = vmatpush2.xpose.msra.mxu0 0.0
    %2894 = vmatprep.subr.mxu0 0.0
    %2895 = vmatpush2.xpose.msra.mxu0 0.0
    %2896 = vmatprep.subr.mxu0 0.0
    %2897 = vmatpush2.xpose.msra.mxu0 0.0
    %2898 = vmatprep.mubr.f32.mxu0 0.0
    %2899 = vmatmul.mubr.f32.gmra.mxu0 %v2830
    %v2900 = vpop.f32.mrf.mxu0
    %v2901 = vadd.f32 %v964, %v2900
    %v2902 = vpop.f32.mrf.mxu0
    %2903 = vdwg.mxu0
    %v2904 = vsel %vm209, %v2901, -inf
    %2905 = vmax.xlane.f32.xlu0 %v2904
    %v2906 = vpop.xlane.xlu0 %2905
    %v2907 = vsub.f32 %v2901, %v2906
    %v2908 = vmul.f32 %v2907, 1.442695
    %v2909 = vpow.pop %v2908
    %v2910 = vsel %vm209, %v2909, 0.0
    %2911 = vadd.xlane.f32.xlu0 %v2910
    %v2912 = vpop.xlane.xlu0 %2911
    %v2913 = vrcp.pop %v2912
    %v2914 = vmul.f32 %v2909, %v2913
    %2915 = vrot.lane.b32.xlu0 %v2072, 64
    %v2916 = vpop.permute.xlu0 %2915
    %v2919 = vsel %vm209, %v2914, 0
    %2921 = vmatprep.subr.mxu0 0.0
    %2922 = vmatpush1.msra.mxu0 0.0
    %2923 = vmatprep.subr.mxu0 0.0
    %2924 = vmatpush1.msra.mxu0 0.0
    %2925 = vmatprep.subr.mxu0 0.0
    %2926 = vmatpush1.msra.mxu0 0.0
    %2927 = vmatprep.subr.mxu0 0.0
    %2928 = vmatpush1.msra.mxu0 0.0
    %2929 = vmatprep.subr.mxu0 0.0
    %2930 = vmatpush1.msra.mxu0 0.0
    %2931 = vmatprep.subr.mxu0 0.0
    %2932 = vmatpush1.msra.mxu0 0.0
    %2933 = vmatprep.subr.mxu0 0.0
    %2934 = vmatpush1.msra.mxu0 0.0
    %2935 = vmatprep.subr.mxu0 0.0
    %2936 = vmatpush1.msra.mxu0 0.0
    %2937 = vmatprep.subr.mxu0 0.0
    %2938 = vmatpush1.msra.mxu0 0.0
    %2939 = vmatprep.subr.mxu0 0.0
    %2940 = vmatpush1.msra.mxu0 0.0
    %2941 = vmatprep.subr.mxu0 0.0
    %2942 = vmatpush1.msra.mxu0 0.0
    %2943 = vmatprep.subr.mxu0 0.0
    %2944 = vmatpush1.msra.mxu0 0.0
    %2945 = vmatprep.subr.mxu0 0.0
    %2946 = vmatpush1.msra.mxu0 0.0
    %2947 = vmatprep.subr.mxu0 0.0
    %2948 = vmatpush1.msra.mxu0 0.0
    %2949 = vmatprep.subr.mxu0 0.0
    %2950 = vmatpush1.msra.mxu0 0.0
    %2951 = vmatprep.subr.mxu0 0.0
    %2952 = vmatpush1.msra.mxu0 %v2916
    %2953 = vmatprep.subr.mxu0 0.0
    %2954 = vmatpush2.msra.mxu0 0.0
    %2955 = vmatprep.subr.mxu0 0.0
    %2956 = vmatpush2.msra.mxu0 0.0
    %2957 = vmatprep.subr.mxu0 0.0
    %2958 = vmatpush2.msra.mxu0 0.0
    %2959 = vmatprep.subr.mxu0 0.0
    %2960 = vmatpush2.msra.mxu0 0.0
    %2961 = vmatprep.subr.mxu0 0.0
    %2962 = vmatpush2.msra.mxu0 0.0
    %2963 = vmatprep.subr.mxu0 0.0
    %2964 = vmatpush2.msra.mxu0 0.0
    %2965 = vmatprep.subr.mxu0 0.0
    %2966 = vmatpush2.msra.mxu0 0.0
    %2967 = vmatprep.subr.mxu0 0.0
    %2968 = vmatpush2.msra.mxu0 0.0
    %2969 = vmatprep.subr.mxu0 0.0
    %2970 = vmatpush2.msra.mxu0 0.0
    %2971 = vmatprep.subr.mxu0 0.0
    %2972 = vmatpush2.msra.mxu0 0.0
    %2973 = vmatprep.subr.mxu0 0.0
    %2974 = vmatpush2.msra.mxu0 0.0
    %2975 = vmatprep.subr.mxu0 0.0
    %2976 = vmatpush2.msra.mxu0 0.0
    %2977 = vmatprep.subr.mxu0 0.0
    %2978 = vmatpush2.msra.mxu0 0.0
    %2979 = vmatprep.subr.mxu0 0.0
    %2980 = vmatpush2.msra.mxu0 0.0
    %2981 = vmatprep.subr.mxu0 0.0
    %2982 = vmatpush2.msra.mxu0 0.0
    %2983 = vmatprep.subr.mxu0 0.0
    %2984 = vmatpush2.msra.mxu0 0.0
    %2985 = vmatprep.mubr.f32.mxu0 0.0
    %2986 = vmatmul.mubr.f32.gmra.mxu0 %v2919
    %v2987 = vpop.f32.mrf.mxu0
    %v2988 = vadd.f32 0.0, %v2987
    %v2989 = vpop.f32.mrf.mxu0
    %2990 = vdwg.mxu0
    %2991 = vrot.lane.b32.xlu0 %v2072, 120
    %v2992 = vpop.permute.xlu0 %2991
    %2993 = vrot.lane.b32.xlu0 %v2072, 88
    %v2994 = vpop.permute.xlu0 %2993
    %v2995 = vsel %vm209, %v2992, 0
    %v2997 = vsel %vm209, %v2994, 0
    %2999 = vmatprep.subr.mxu0 0.0
    %3000 = vmatpush1.xpose.msra.mxu0 0.0
    %3001 = vmatprep.subr.mxu0 0.0
    %3002 = vmatpush1.xpose.msra.mxu0 0.0
    %3003 = vmatprep.subr.mxu0 0.0
    %3004 = vmatpush1.xpose.msra.mxu0 0.0
    %3005 = vmatprep.subr.mxu0 0.0
    %3006 = vmatpush1.xpose.msra.mxu0 0.0
    %3007 = vmatprep.subr.mxu0 0.0
    %3008 = vmatpush1.xpose.msra.mxu0 0.0
    %3009 = vmatprep.subr.mxu0 0.0
    %3010 = vmatpush1.xpose.msra.mxu0 0.0
    %3011 = vmatprep.subr.mxu0 0.0
    %3012 = vmatpush1.xpose.msra.mxu0 0.0
    %3013 = vmatprep.subr.mxu0 0.0
    %3014 = vmatpush1.xpose.msra.mxu0 0.0
    %3015 = vmatprep.subr.mxu0 0.0
    %3016 = vmatpush1.xpose.msra.mxu0 0.0
    %3017 = vmatprep.subr.mxu0 0.0
    %3018 = vmatpush1.xpose.msra.mxu0 0.0
    %3019 = vmatprep.subr.mxu0 0.0
    %3020 = vmatpush1.xpose.msra.mxu0 0.0
    %3021 = vmatprep.subr.mxu0 0.0
    %3022 = vmatpush1.xpose.msra.mxu0 0.0
    %3023 = vmatprep.subr.mxu0 0.0
    %3024 = vmatpush1.xpose.msra.mxu0 0.0
    %3025 = vmatprep.subr.mxu0 0.0
    %3026 = vmatpush1.xpose.msra.mxu0 0.0
    %3027 = vmatprep.subr.mxu0 0.0
    %3028 = vmatpush1.xpose.msra.mxu0 0.0
    %3029 = vmatprep.subr.mxu0 0.0
    %3030 = vmatpush1.xpose.msra.mxu0 %v2997
    %3031 = vmatprep.subr.mxu0 0.0
    %3032 = vmatpush2.xpose.msra.mxu0 0.0
    %3033 = vmatprep.subr.mxu0 0.0
    %3034 = vmatpush2.xpose.msra.mxu0 0.0
    %3035 = vmatprep.subr.mxu0 0.0
    %3036 = vmatpush2.xpose.msra.mxu0 0.0
    %3037 = vmatprep.subr.mxu0 0.0
    %3038 = vmatpush2.xpose.msra.mxu0 0.0
    %3039 = vmatprep.subr.mxu0 0.0
    %3040 = vmatpush2.xpose.msra.mxu0 0.0
    %3041 = vmatprep.subr.mxu0 0.0
    %3042 = vmatpush2.xpose.msra.mxu0 0.0
    %3043 = vmatprep.subr.mxu0 0.0
    %3044 = vmatpush2.xpose.msra.mxu0 0.0
    %3045 = vmatprep.subr.mxu0 0.0
    %3046 = vmatpush2.xpose.msra.mxu0 0.0
    %3047 = vmatprep.subr.mxu0 0.0
    %3048 = vmatpush2.xpose.msra.mxu0 0.0
    %3049 = vmatprep.subr.mxu0 0.0
    %3050 = vmatpush2.xpose.msra.mxu0 0.0
    %3051 = vmatprep.subr.mxu0 0.0
    %3052 = vmatpush2.xpose.msra.mxu0 0.0
    %3053 = vmatprep.subr.mxu0 0.0
    %3054 = vmatpush2.xpose.msra.mxu0 0.0
    %3055 = vmatprep.subr.mxu0 0.0
    %3056 = vmatpush2.xpose.msra.mxu0 0.0
    %3057 = vmatprep.subr.mxu0 0.0
    %3058 = vmatpush2.xpose.msra.mxu0 0.0
    %3059 = vmatprep.subr.mxu0 0.0
    %3060 = vmatpush2.xpose.msra.mxu0 0.0
    %3061 = vmatprep.subr.mxu0 0.0
    %3062 = vmatpush2.xpose.msra.mxu0 0.0
    %3063 = vmatprep.mubr.f32.mxu0 0.0
    %3064 = vmatmul.mubr.f32.gmra.mxu0 %v2995
    %v3065 = vpop.f32.mrf.mxu0
    %v3066 = vadd.f32 %v964, %v3065
    %v3067 = vpop.f32.mrf.mxu0
    %3068 = vdwg.mxu0
    %v3069 = vsel %vm209, %v3066, -inf
    %3070 = vmax.xlane.f32.xlu0 %v3069
    %v3071 = vpop.xlane.xlu0 %3070
    %v3072 = vsub.f32 %v3066, %v3071
    %v3073 = vmul.f32 %v3072, 1.442695
    %v3074 = vpow.pop %v3073
    %v3075 = vsel %vm209, %v3074, 0.0
    %3076 = vadd.xlane.f32.xlu0 %v3075
    %v3077 = vpop.xlane.xlu0 %3076
    %v3078 = vrcp.pop %v3077
    %v3079 = vmul.f32 %v3074, %v3078
    %3080 = vrot.lane.b32.xlu0 %v2072, 56
    %v3081 = vpop.permute.xlu0 %3080
    %v3084 = vsel %vm209, %v3079, 0
    %3086 = vmatprep.subr.mxu0 0.0
    %3087 = vmatpush1.msra.mxu0 0.0
    %3088 = vmatprep.subr.mxu0 0.0
    %3089 = vmatpush1.msra.mxu0 0.0
    %3090 = vmatprep.subr.mxu0 0.0
    %3091 = vmatpush1.msra.mxu0 0.0
    %3092 = vmatprep.subr.mxu0 0.0
    %3093 = vmatpush1.msra.mxu0 0.0
    %3094 = vmatprep.subr.mxu0 0.0
    %3095 = vmatpush1.msra.mxu0 0.0
    %3096 = vmatprep.subr.mxu0 0.0
    %3097 = vmatpush1.msra.mxu0 0.0
    %3098 = vmatprep.subr.mxu0 0.0
    %3099 = vmatpush1.msra.mxu0 0.0
    %3100 = vmatprep.subr.mxu0 0.0
    %3101 = vmatpush1.msra.mxu0 0.0
    %3102 = vmatprep.subr.mxu0 0.0
    %3103 = vmatpush1.msra.mxu0 0.0
    %3104 = vmatprep.subr.mxu0 0.0
    %3105 = vmatpush1.msra.mxu0 0.0
    %3106 = vmatprep.subr.mxu0 0.0
    %3107 = vmatpush1.msra.mxu0 0.0
    %3108 = vmatprep.subr.mxu0 0.0
    %3109 = vmatpush1.msra.mxu0 0.0
    %3110 = vmatprep.subr.mxu0 0.0
    %3111 = vmatpush1.msra.mxu0 0.0
    %3112 = vmatprep.subr.mxu0 0.0
    %3113 = vmatpush1.msra.mxu0 0.0
    %3114 = vmatprep.subr.mxu0 0.0
    %3115 = vmatpush1.msra.mxu0 0.0
    %3116 = vmatprep.subr.mxu0 0.0
    %3117 = vmatpush1.msra.mxu0 %v3081
    %3118 = vmatprep.subr.mxu0 0.0
    %3119 = vmatpush2.msra.mxu0 0.0
    %3120 = vmatprep.subr.mxu0 0.0
    %3121 = vmatpush2.msra.mxu0 0.0
    %3122 = vmatprep.subr.mxu0 0.0
    %3123 = vmatpush2.msra.mxu0 0.0
    %3124 = vmatprep.subr.mxu0 0.0
    %3125 = vmatpush2.msra.mxu0 0.0
    %3126 = vmatprep.subr.mxu0 0.0
    %3127 = vmatpush2.msra.mxu0 0.0
    %3128 = vmatprep.subr.mxu0 0.0
    %3129 = vmatpush2.msra.mxu0 0.0
    %3130 = vmatprep.subr.mxu0 0.0
    %3131 = vmatpush2.msra.mxu0 0.0
    %3132 = vmatprep.subr.mxu0 0.0
    %3133 = vmatpush2.msra.mxu0 0.0
    %3134 = vmatprep.subr.mxu0 0.0
    %3135 = vmatpush2.msra.mxu0 0.0
    %3136 = vmatprep.subr.mxu0 0.0
    %3137 = vmatpush2.msra.mxu0 0.0
    %3138 = vmatprep.subr.mxu0 0.0
    %3139 = vmatpush2.msra.mxu0 0.0
    %3140 = vmatprep.subr.mxu0 0.0
    %3141 = vmatpush2.msra.mxu0 0.0
    %3142 = vmatprep.subr.mxu0 0.0
    %3143 = vmatpush2.msra.mxu0 0.0
    %3144 = vmatprep.subr.mxu0 0.0
    %3145 = vmatpush2.msra.mxu0 0.0
    %3146 = vmatprep.subr.mxu0 0.0
    %3147 = vmatpush2.msra.mxu0 0.0
    %3148 = vmatprep.subr.mxu0 0.0
    %3149 = vmatpush2.msra.mxu0 0.0
    %3150 = vmatprep.mubr.f32.mxu0 0.0
    %3151 = vmatmul.mubr.f32.gmra.mxu0 %v3084
    %v3152 = vpop.f32.mrf.mxu0
    %v3153 = vadd.f32 0.0, %v3152
    %v3154 = vpop.f32.mrf.mxu0
    %3155 = vdwg.mxu0
    %3156 = vrot.lane.b32.xlu0 %v2072, 112
    %v3157 = vpop.permute.xlu0 %3156
    %3158 = vrot.lane.b32.xlu0 %v2072, 80
    %v3159 = vpop.permute.xlu0 %3158
    %v3160 = vsel %vm209, %v3157, 0
    %v3162 = vsel %vm209, %v3159, 0
    %3164 = vmatprep.subr.mxu0 0.0
    %3165 = vmatpush1.xpose.msra.mxu0 0.0
    %3166 = vmatprep.subr.mxu0 0.0
    %3167 = vmatpush1.xpose.msra.mxu0 0.0
    %3168 = vmatprep.subr.mxu0 0.0
    %3169 = vmatpush1.xpose.msra.mxu0 0.0
    %3170 = vmatprep.subr.mxu0 0.0
    %3171 = vmatpush1.xpose.msra.mxu0 0.0
    %3172 = vmatprep.subr.mxu0 0.0
    %3173 = vmatpush1.xpose.msra.mxu0 0.0
    %3174 = vmatprep.subr.mxu0 0.0
    %3175 = vmatpush1.xpose.msra.mxu0 0.0
    %3176 = vmatprep.subr.mxu0 0.0
    %3177 = vmatpush1.xpose.msra.mxu0 0.0
    %3178 = vmatprep.subr.mxu0 0.0
    %3179 = vmatpush1.xpose.msra.mxu0 0.0
    %3180 = vmatprep.subr.mxu0 0.0
    %3181 = vmatpush1.xpose.msra.mxu0 0.0
    %3182 = vmatprep.subr.mxu0 0.0
    %3183 = vmatpush1.xpose.msra.mxu0 0.0
    %3184 = vmatprep.subr.mxu0 0.0
    %3185 = vmatpush1.xpose.msra.mxu0 0.0
    %3186 = vmatprep.subr.mxu0 0.0
    %3187 = vmatpush1.xpose.msra.mxu0 0.0
    %3188 = vmatprep.subr.mxu0 0.0
    %3189 = vmatpush1.xpose.msra.mxu0 0.0
    %3190 = vmatprep.subr.mxu0 0.0
    %3191 = vmatpush1.xpose.msra.mxu0 0.0
    %3192 = vmatprep.subr.mxu0 0.0
    %3193 = vmatpush1.xpose.msra.mxu0 0.0
    %3194 = vmatprep.subr.mxu0 0.0
    %3195 = vmatpush1.xpose.msra.mxu0 %v3162
    %3196 = vmatprep.subr.mxu0 0.0
    %3197 = vmatpush2.xpose.msra.mxu0 0.0
    %3198 = vmatprep.subr.mxu0 0.0
    %3199 = vmatpush2.xpose.msra.mxu0 0.0
    %3200 = vmatprep.subr.mxu0 0.0
    %3201 = vmatpush2.xpose.msra.mxu0 0.0
    %3202 = vmatprep.subr.mxu0 0.0
    %3203 = vmatpush2.xpose.msra.mxu0 0.0
    %3204 = vmatprep.subr.mxu0 0.0
    %3205 = vmatpush2.xpose.msra.mxu0 0.0
    %3206 = vmatprep.subr.mxu0 0.0
    %3207 = vmatpush2.xpose.msra.mxu0 0.0
    %3208 = vmatprep.subr.mxu0 0.0
    %3209 = vmatpush2.xpose.msra.mxu0 0.0
    %3210 = vmatprep.subr.mxu0 0.0
    %3211 = vmatpush2.xpose.msra.mxu0 0.0
    %3212 = vmatprep.subr.mxu0 0.0
    %3213 = vmatpush2.xpose.msra.mxu0 0.0
    %3214 = vmatprep.subr.mxu0 0.0
    %3215 = vmatpush2.xpose.msra.mxu0 0.0
    %3216 = vmatprep.subr.mxu0 0.0
    %3217 = vmatpush2.xpose.msra.mxu0 0.0
    %3218 = vmatprep.subr.mxu0 0.0
    %3219 = vmatpush2.xpose.msra.mxu0 0.0
    %3220 = vmatprep.subr.mxu0 0.0
    %3221 = vmatpush2.xpose.msra.mxu0 0.0
    %3222 = vmatprep.subr.mxu0 0.0
    %3223 = vmatpush2.xpose.msra.mxu0 0.0
    %3224 = vmatprep.subr.mxu0 0.0
    %3225 = vmatpush2.xpose.msra.mxu0 0.0
    %3226 = vmatprep.subr.mxu0 0.0
    %3227 = vmatpush2.xpose.msra.mxu0 0.0
    %3228 = vmatprep.mubr.f32.mxu0 0.0
    %3229 = vmatmul.mubr.f32.gmra.mxu0 %v3160
    %v3230 = vpop.f32.mrf.mxu0
    %v3231 = vadd.f32 %v964, %v3230
    %v3232 = vpop.f32.mrf.mxu0
    %3233 = vdwg.mxu0
    %v3234 = vsel %vm209, %v3231, -inf
    %3235 = vmax.xlane.f32.xlu0 %v3234
    %v3236 = vpop.xlane.xlu0 %3235
    %v3237 = vsub.f32 %v3231, %v3236
    %v3238 = vmul.f32 %v3237, 1.442695
    %v3239 = vpow.pop %v3238
    %v3240 = vsel %vm209, %v3239, 0.0
    %3241 = vadd.xlane.f32.xlu0 %v3240
    %v3242 = vpop.xlane.xlu0 %3241
    %v3243 = vrcp.pop %v3242
    %v3244 = vmul.f32 %v3239, %v3243
    %3245 = vrot.lane.b32.xlu0 %v2072, 48
    %v3246 = vpop.permute.xlu0 %3245
    %v3249 = vsel %vm209, %v3244, 0
    %3251 = vmatprep.subr.mxu0 0.0
    %3252 = vmatpush1.msra.mxu0 0.0
    %3253 = vmatprep.subr.mxu0 0.0
    %3254 = vmatpush1.msra.mxu0 0.0
    %3255 = vmatprep.subr.mxu0 0.0
    %3256 = vmatpush1.msra.mxu0 0.0
    %3257 = vmatprep.subr.mxu0 0.0
    %3258 = vmatpush1.msra.mxu0 0.0
    %3259 = vmatprep.subr.mxu0 0.0
    %3260 = vmatpush1.msra.mxu0 0.0
    %3261 = vmatprep.subr.mxu0 0.0
    %3262 = vmatpush1.msra.mxu0 0.0
    %3263 = vmatprep.subr.mxu0 0.0
    %3264 = vmatpush1.msra.mxu0 0.0
    %3265 = vmatprep.subr.mxu0 0.0
    %3266 = vmatpush1.msra.mxu0 0.0
    %3267 = vmatprep.subr.mxu0 0.0
    %3268 = vmatpush1.msra.mxu0 0.0
    %3269 = vmatprep.subr.mxu0 0.0
    %3270 = vmatpush1.msra.mxu0 0.0
    %3271 = vmatprep.subr.mxu0 0.0
    %3272 = vmatpush1.msra.mxu0 0.0
    %3273 = vmatprep.subr.mxu0 0.0
    %3274 = vmatpush1.msra.mxu0 0.0
    %3275 = vmatprep.subr.mxu0 0.0
    %3276 = vmatpush1.msra.mxu0 0.0
    %3277 = vmatprep.subr.mxu0 0.0
    %3278 = vmatpush1.msra.mxu0 0.0
    %3279 = vmatprep.subr.mxu0 0.0
    %3280 = vmatpush1.msra.mxu0 0.0
    %3281 = vmatprep.subr.mxu0 0.0
    %3282 = vmatpush1.msra.mxu0 %v3246
    %3283 = vmatprep.subr.mxu0 0.0
    %3284 = vmatpush2.msra.mxu0 0.0
    %3285 = vmatprep.subr.mxu0 0.0
    %3286 = vmatpush2.msra.mxu0 0.0
    %3287 = vmatprep.subr.mxu0 0.0
    %3288 = vmatpush2.msra.mxu0 0.0
    %3289 = vmatprep.subr.mxu0 0.0
    %3290 = vmatpush2.msra.mxu0 0.0
    %3291 = vmatprep.subr.mxu0 0.0
    %3292 = vmatpush2.msra.mxu0 0.0
    %3293 = vmatprep.subr.mxu0 0.0
    %3294 = vmatpush2.msra.mxu0 0.0
    %3295 = vmatprep.subr.mxu0 0.0
    %3296 = vmatpush2.msra.mxu0 0.0
    %3297 = vmatprep.subr.mxu0 0.0
    %3298 = vmatpush2.msra.mxu0 0.0
    %3299 = vmatprep.subr.mxu0 0.0
    %3300 = vmatpush2.msra.mxu0 0.0
    %3301 = vmatprep.subr.mxu0 0.0
    %3302 = vmatpush2.msra.mxu0 0.0
    %3303 = vmatprep.subr.mxu0 0.0
    %3304 = vmatpush2.msra.mxu0 0.0
    %3305 = vmatprep.subr.mxu0 0.0
    %3306 = vmatpush2.msra.mxu0 0.0
    %3307 = vmatprep.subr.mxu0 0.0
    %3308 = vmatpush2.msra.mxu0 0.0
    %3309 = vmatprep.subr.mxu0 0.0
    %3310 = vmatpush2.msra.mxu0 0.0
    %3311 = vmatprep.subr.mxu0 0.0
    %3312 = vmatpush2.msra.mxu0 0.0
    %3313 = vmatprep.subr.mxu0 0.0
    %3314 = vmatpush2.msra.mxu0 0.0
    %3315 = vmatprep.mubr.f32.mxu0 0.0
    %3316 = vmatmul.mubr.f32.gmra.mxu0 %v3249
    %v3317 = vpop.f32.mrf.mxu0
    %v3318 = vadd.f32 0.0, %v3317
    %v3319 = vpop.f32.mrf.mxu0
    %3320 = vdwg.mxu0
    %3321 = vrot.lane.b32.xlu0 %v2072, 104
    %v3322 = vpop.permute.xlu0 %3321
    %3323 = vrot.lane.b32.xlu0 %v2072, 72
    %v3324 = vpop.permute.xlu0 %3323
    %v3325 = vsel %vm209, %v3322, 0
    %v3327 = vsel %vm209, %v3324, 0
    %3329 = vmatprep.subr.mxu0 0.0
    %3330 = vmatpush1.xpose.msra.mxu0 0.0
    %3331 = vmatprep.subr.mxu0 0.0
    %3332 = vmatpush1.xpose.msra.mxu0 0.0
    %3333 = vmatprep.subr.mxu0 0.0
    %3334 = vmatpush1.xpose.msra.mxu0 0.0
    %3335 = vmatprep.subr.mxu0 0.0
    %3336 = vmatpush1.xpose.msra.mxu0 0.0
    %3337 = vmatprep.subr.mxu0 0.0
    %3338 = vmatpush1.xpose.msra.mxu0 0.0
    %3339 = vmatprep.subr.mxu0 0.0
    %3340 = vmatpush1.xpose.msra.mxu0 0.0
    %3341 = vmatprep.subr.mxu0 0.0
    %3342 = vmatpush1.xpose.msra.mxu0 0.0
    %3343 = vmatprep.subr.mxu0 0.0
    %3344 = vmatpush1.xpose.msra.mxu0 0.0
    %3345 = vmatprep.subr.mxu0 0.0
    %3346 = vmatpush1.xpose.msra.mxu0 0.0
    %3347 = vmatprep.subr.mxu0 0.0
    %3348 = vmatpush1.xpose.msra.mxu0 0.0
    %3349 = vmatprep.subr.mxu0 0.0
    %3350 = vmatpush1.xpose.msra.mxu0 0.0
    %3351 = vmatprep.subr.mxu0 0.0
    %3352 = vmatpush1.xpose.msra.mxu0 0.0
    %3353 = vmatprep.subr.mxu0 0.0
    %3354 = vmatpush1.xpose.msra.mxu0 0.0
    %3355 = vmatprep.subr.mxu0 0.0
    %3356 = vmatpush1.xpose.msra.mxu0 0.0
    %3357 = vmatprep.subr.mxu0 0.0
    %3358 = vmatpush1.xpose.msra.mxu0 0.0
    %3359 = vmatprep.subr.mxu0 0.0
    %3360 = vmatpush1.xpose.msra.mxu0 %v3327
    %3361 = vmatprep.subr.mxu0 0.0
    %3362 = vmatpush2.xpose.msra.mxu0 0.0
    %3363 = vmatprep.subr.mxu0 0.0
    %3364 = vmatpush2.xpose.msra.mxu0 0.0
    %3365 = vmatprep.subr.mxu0 0.0
    %3366 = vmatpush2.xpose.msra.mxu0 0.0
    %3367 = vmatprep.subr.mxu0 0.0
    %3368 = vmatpush2.xpose.msra.mxu0 0.0
    %3369 = vmatprep.subr.mxu0 0.0
    %3370 = vmatpush2.xpose.msra.mxu0 0.0
    %3371 = vmatprep.subr.mxu0 0.0
    %3372 = vmatpush2.xpose.msra.mxu0 0.0
    %3373 = vmatprep.subr.mxu0 0.0
    %3374 = vmatpush2.xpose.msra.mxu0 0.0
    %3375 = vmatprep.subr.mxu0 0.0
    %3376 = vmatpush2.xpose.msra.mxu0 0.0
    %3377 = vmatprep.subr.mxu0 0.0
    %3378 = vmatpush2.xpose.msra.mxu0 0.0
    %3379 = vmatprep.subr.mxu0 0.0
    %3380 = vmatpush2.xpose.msra.mxu0 0.0
    %3381 = vmatprep.subr.mxu0 0.0
    %3382 = vmatpush2.xpose.msra.mxu0 0.0
    %3383 = vmatprep.subr.mxu0 0.0
    %3384 = vmatpush2.xpose.msra.mxu0 0.0
    %3385 = vmatprep.subr.mxu0 0.0
    %3386 = vmatpush2.xpose.msra.mxu0 0.0
    %3387 = vmatprep.subr.mxu0 0.0
    %3388 = vmatpush2.xpose.msra.mxu0 0.0
    %3389 = vmatprep.subr.mxu0 0.0
    %3390 = vmatpush2.xpose.msra.mxu0 0.0
    %3391 = vmatprep.subr.mxu0 0.0
    %3392 = vmatpush2.xpose.msra.mxu0 0.0
    %3393 = vmatprep.mubr.f32.mxu0 0.0
    %3394 = vmatmul.mubr.f32.gmra.mxu0 %v3325
    %v3395 = vpop.f32.mrf.mxu0
    %v3396 = vadd.f32 %v964, %v3395
    %v3397 = vpop.f32.mrf.mxu0
    %3398 = vdwg.mxu0
    %v3399 = vsel %vm209, %v3396, -inf
    %3400 = vmax.xlane.f32.xlu0 %v3399
    %v3401 = vpop.xlane.xlu0 %3400
    %v3402 = vsub.f32 %v3396, %v3401
    %v3403 = vmul.f32 %v3402, 1.442695
    %v3404 = vpow.pop %v3403
    %v3405 = vsel %vm209, %v3404, 0.0
    %3406 = vadd.xlane.f32.xlu0 %v3405
    %v3407 = vpop.xlane.xlu0 %3406
    %v3408 = vrcp.pop %v3407
    %v3409 = vmul.f32 %v3404, %v3408
    %3410 = vrot.lane.b32.xlu0 %v2072, 40
    %v3411 = vpop.permute.xlu0 %3410
    %v3414 = vsel %vm209, %v3409, 0
    %3416 = vmatprep.subr.mxu0 0.0
    %3417 = vmatpush1.msra.mxu0 0.0
    %3418 = vmatprep.subr.mxu0 0.0
    %3419 = vmatpush1.msra.mxu0 0.0
    %3420 = vmatprep.subr.mxu0 0.0
    %3421 = vmatpush1.msra.mxu0 0.0
    %3422 = vmatprep.subr.mxu0 0.0
    %3423 = vmatpush1.msra.mxu0 0.0
    %3424 = vmatprep.subr.mxu0 0.0
    %3425 = vmatpush1.msra.mxu0 0.0
    %3426 = vmatprep.subr.mxu0 0.0
    %3427 = vmatpush1.msra.mxu0 0.0
    %3428 = vmatprep.subr.mxu0 0.0
    %3429 = vmatpush1.msra.mxu0 0.0
    %3430 = vmatprep.subr.mxu0 0.0
    %3431 = vmatpush1.msra.mxu0 0.0
    %3432 = vmatprep.subr.mxu0 0.0
    %3433 = vmatpush1.msra.mxu0 0.0
    %3434 = vmatprep.subr.mxu0 0.0
    %3435 = vmatpush1.msra.mxu0 0.0
    %3436 = vmatprep.subr.mxu0 0.0
    %3437 = vmatpush1.msra.mxu0 0.0
    %3438 = vmatprep.subr.mxu0 0.0
    %3439 = vmatpush1.msra.mxu0 0.0
    %3440 = vmatprep.subr.mxu0 0.0
    %3441 = vmatpush1.msra.mxu0 0.0
    %3442 = vmatprep.subr.mxu0 0.0
    %3443 = vmatpush1.msra.mxu0 0.0
    %3444 = vmatprep.subr.mxu0 0.0
    %3445 = vmatpush1.msra.mxu0 0.0
    %3446 = vmatprep.subr.mxu0 0.0
    %3447 = vmatpush1.msra.mxu0 %v3411
    %3448 = vmatprep.subr.mxu0 0.0
    %3449 = vmatpush2.msra.mxu0 0.0
    %3450 = vmatprep.subr.mxu0 0.0
    %3451 = vmatpush2.msra.mxu0 0.0
    %3452 = vmatprep.subr.mxu0 0.0
    %3453 = vmatpush2.msra.mxu0 0.0
    %3454 = vmatprep.subr.mxu0 0.0
    %3455 = vmatpush2.msra.mxu0 0.0
    %3456 = vmatprep.subr.mxu0 0.0
    %3457 = vmatpush2.msra.mxu0 0.0
    %3458 = vmatprep.subr.mxu0 0.0
    %3459 = vmatpush2.msra.mxu0 0.0
    %3460 = vmatprep.subr.mxu0 0.0
    %3461 = vmatpush2.msra.mxu0 0.0
    %3462 = vmatprep.subr.mxu0 0.0
    %3463 = vmatpush2.msra.mxu0 0.0
    %3464 = vmatprep.subr.mxu0 0.0
    %3465 = vmatpush2.msra.mxu0 0.0
    %3466 = vmatprep.subr.mxu0 0.0
    %3467 = vmatpush2.msra.mxu0 0.0
    %3468 = vmatprep.subr.mxu0 0.0
    %3469 = vmatpush2.msra.mxu0 0.0
    %3470 = vmatprep.subr.mxu0 0.0
    %3471 = vmatpush2.msra.mxu0 0.0
    %3472 = vmatprep.subr.mxu0 0.0
    %3473 = vmatpush2.msra.mxu0 0.0
    %3474 = vmatprep.subr.mxu0 0.0
    %3475 = vmatpush2.msra.mxu0 0.0
    %3476 = vmatprep.subr.mxu0 0.0
    %3477 = vmatpush2.msra.mxu0 0.0
    %3478 = vmatprep.subr.mxu0 0.0
    %3479 = vmatpush2.msra.mxu0 0.0
    %3480 = vmatprep.mubr.f32.mxu0 0.0
    %3481 = vmatmul.mubr.f32.gmra.mxu0 %v3414
    %v3482 = vpop.f32.mrf.mxu0
    %v3483 = vadd.f32 0.0, %v3482
    %v3484 = vpop.f32.mrf.mxu0
    %3485 = vdwg.mxu0
    %3487 = vrot.lane.b32.xlu0 %v3153, 8
    %v3488 = vpop.permute.xlu0 %3487
    %3491 = vrot.lane.b32.xlu0 %v3318, 16
    %v3492 = vpop.permute.xlu0 %3491
    %3495 = vrot.lane.b32.xlu0 %v3483, 24
    %v3496 = vpop.permute.xlu0 %3495
    %v3498 = vsel %vm209, %v2988, %v3488
    %v3499 = vsel %vm879, %v3498, %v3492
    %v3500 = vsel %vm881, %v3499, %v3496
    %v3502 = vsel %vm77, %v3500, 0
    %3504 = vmatprep.subr.mxu0 0.0
    %3505 = vmatpush1.msra.mxu0 0.0
    %3506 = vmatprep.subr.mxu0 0.0
    %3507 = vmatpush1.msra.mxu0 0.0
    %3508 = vmatprep.subr.mxu0 0.0
    %3509 = vmatpush1.msra.mxu0 0.0
    %3510 = vmatprep.subr.mxu0 0.0
    %3511 = vmatpush1.msra.mxu0 0.0
    %3512 = vmatprep.subr.mxu0 0.0
    %3513 = vmatpush1.msra.mxu0 0.0
    %3514 = vmatprep.subr.mxu0 0.0
    %3515 = vmatpush1.msra.mxu0 0.0
    %3516 = vmatprep.subr.mxu0 0.0
    %3517 = vmatpush1.msra.mxu0 0.0
    %3518 = vmatprep.subr.mxu0 0.0
    %3519 = vmatpush1.msra.mxu0 0.0
    %3520 = vmatprep.subr.mxu0 0.0
    %3521 = vmatpush1.msra.mxu0 0.0
    %3522 = vmatprep.subr.mxu0 0.0
    %3523 = vmatpush1.msra.mxu0 0.0
    %3524 = vmatprep.subr.mxu0 0.0
    %3525 = vmatpush1.msra.mxu0 0.0
    %3526 = vmatprep.subr.mxu0 0.0
    %3527 = vmatpush1.msra.mxu0 0.0
    %3528 = vmatprep.subr.mxu0 0.0
    %3529 = vmatpush1.msra.mxu0 %v1939
    %3530 = vmatprep.subr.mxu0 0.0
    %3531 = vmatpush1.msra.mxu0 %v1936
    %3532 = vmatprep.subr.mxu0 0.0
    %3533 = vmatpush1.msra.mxu0 %v1933
    %3534 = vmatprep.subr.mxu0 0.0
    %3535 = vmatpush1.msra.mxu0 %v1930
    %3536 = vmatprep.subr.mxu0 0.0
    %3537 = vmatpush2.msra.mxu0 0.0
    %3538 = vmatprep.subr.mxu0 0.0
    %3539 = vmatpush2.msra.mxu0 0.0
    %3540 = vmatprep.subr.mxu0 0.0
    %3541 = vmatpush2.msra.mxu0 0.0
    %3542 = vmatprep.subr.mxu0 0.0
    %3543 = vmatpush2.msra.mxu0 0.0
    %3544 = vmatprep.subr.mxu0 0.0
    %3545 = vmatpush2.msra.mxu0 0.0
    %3546 = vmatprep.subr.mxu0 0.0
    %3547 = vmatpush2.msra.mxu0 0.0
    %3548 = vmatprep.subr.mxu0 0.0
    %3549 = vmatpush2.msra.mxu0 0.0
    %3550 = vmatprep.subr.mxu0 0.0
    %3551 = vmatpush2.msra.mxu0 0.0
    %3552 = vmatprep.subr.mxu0 0.0
    %3553 = vmatpush2.msra.mxu0 0.0
    %3554 = vmatprep.subr.mxu0 0.0
    %3555 = vmatpush2.msra.mxu0 0.0
    %3556 = vmatprep.subr.mxu0 0.0
    %3557 = vmatpush2.msra.mxu0 0.0
    %3558 = vmatprep.subr.mxu0 0.0
    %3559 = vmatpush2.msra.mxu0 0.0
    %3560 = vmatprep.subr.mxu0 0.0
    %3561 = vmatpush2.msra.mxu0 0.0
    %3562 = vmatprep.subr.mxu0 0.0
    %3563 = vmatpush2.msra.mxu0 0.0
    %3564 = vmatprep.subr.mxu0 0.0
    %3565 = vmatpush2.msra.mxu0 0.0
    %3566 = vmatprep.subr.mxu0 0.0
    %3567 = vmatpush2.msra.mxu0 0.0
    %3568 = vmatprep.mubr.f32.mxu0 0.0
    %3569 = vmatmul.mubr.f32.gmra.mxu0 %v3502
    %v3570 = vpop.f32.mrf.mxu0
    %v3571 = vadd.f32 %v2752, %v3570
    %v3572 = vpop.f32.mrf.mxu0
    %3573 = vdwg.mxu0
    %v3574 = vadd.f32 %v1927, %v3571
    %v3575 = vsel %vm77, %v2826, 0.0
    %3576 = vadd.xlane.f32.xlu0 %v3575
    %v3577 = vpop.xlane.xlu0 %3576
    %v3578 = vsel %vm77, %v3574, 0.0
    %3579 = vadd.xlane.f32.xlu0 %v3578
    %v3580 = vpop.xlane.xlu0 %3579
    %v3581 = vmul.f32 %v3577, %v84
    %v3582 = vmul.f32 %v3580, %v84
    %v3583 = vsub.f32 %v2826, %v3581
    %v3584 = vsub.f32 %v3574, %v3582
    %v3585 = vmul.f32 %v3583, %v3583
    %v3586 = vmul.f32 %v3584, %v3584
    %v3587 = vsel %vm77, %v3585, 0.0
    %3588 = vadd.xlane.f32.xlu0 %v3587
    %v3589 = vpop.xlane.xlu0 %3588
    %v3590 = vsel %vm77, %v3586, 0.0
    %3591 = vadd.xlane.f32.xlu0 %v3590
    %v3592 = vpop.xlane.xlu0 %3591
    %v3593 = vmul.f32 %v3589, 0.032258064
    %v3594 = vmul.f32 %v3592, 0.032258064
    %v3595 = vlaneseq
    %v3596 = vshrl.u32 %v3595, 7
    %v3597 = vsub.s32 3, %v3596
    %v3598 = vrot.slane %v1942, %v3597
    %v3599 = vmul.f32 %v3598, %v3583
    %v3600 = vmul.f32 %v3598, %v3584
    %v3601 = vadd.f32 %v3593, 1e-06
    %v3602 = vadd.f32 %v3594, 1e-06
    %v3603 = vrsqrt.pop %v3601
    %v3604 = vrsqrt.pop %v3602
    %v3605 = vmul.f32 %v3599, %v3603
    %v3606 = vmul.f32 %v3600, %v3604
    %v3607 = vlaneseq
    %v3608 = vshrl.u32 %v3607, 7
    %v3609 = vsub.s32 4, %v3608
    %v3610 = vrot.slane %v1942, %v3609
    %v3611 = vadd.f32 %v3605, %v3610
    %v3612 = vadd.f32 %v3606, %v3610
    %v3613 = vlaneseq
    %v3614 = vshrl.u32 %v3613, 7
    %v3615 = vsub.s32 6, %v3614
    %v3616 = vrot.slane %v1942, %v3615
    %v3618 = vsel %vm77, %v3611, 0
    %v3621 = vsel %vm77, %v3612, 0
    %3623 = vmatprep.subr.mxu0 0.0
    %3624 = vmatpush1.msra.mxu0 0.0
    %3625 = vmatprep.subr.mxu0 0.0
    %3626 = vmatpush1.msra.mxu0 0.0
    %3627 = vmatprep.subr.mxu0 0.0
    %3628 = vmatpush1.msra.mxu0 0.0
    %3629 = vmatprep.subr.mxu0 0.0
    %3630 = vmatpush1.msra.mxu0 0.0
    %3631 = vmatprep.subr.mxu0 0.0
    %3632 = vmatpush1.msra.mxu0 0.0
    %3633 = vmatprep.subr.mxu0 0.0
    %3634 = vmatpush1.msra.mxu0 0.0
    %3635 = vmatprep.subr.mxu0 0.0
    %3636 = vmatpush1.msra.mxu0 0.0
    %3637 = vmatprep.subr.mxu0 0.0
    %3638 = vmatpush1.msra.mxu0 0.0
    %3639 = vmatprep.subr.mxu0 0.0
    %3640 = vmatpush1.msra.mxu0 0.0
    %3641 = vmatprep.subr.mxu0 0.0
    %3642 = vmatpush1.msra.mxu0 0.0
    %3643 = vmatprep.subr.mxu0 0.0
    %3644 = vmatpush1.msra.mxu0 0.0
    %3645 = vmatprep.subr.mxu0 0.0
    %3646 = vmatpush1.msra.mxu0 0.0
    %3647 = vmatprep.subr.mxu0 0.0
    %3648 = vmatpush1.msra.mxu0 %v1940
    %3649 = vmatprep.subr.mxu0 0.0
    %3650 = vmatpush1.msra.mxu0 %v1937
    %3651 = vmatprep.subr.mxu0 0.0
    %3652 = vmatpush1.msra.mxu0 %v1934
    %3653 = vmatprep.subr.mxu0 0.0
    %3654 = vmatpush1.msra.mxu0 %v1931
    %3655 = vmatprep.subr.mxu0 0.0
    %3656 = vmatpush2.msra.mxu0 0.0
    %3657 = vmatprep.subr.mxu0 0.0
    %3658 = vmatpush2.msra.mxu0 0.0
    %3659 = vmatprep.subr.mxu0 0.0
    %3660 = vmatpush2.msra.mxu0 0.0
    %3661 = vmatprep.subr.mxu0 0.0
    %3662 = vmatpush2.msra.mxu0 0.0
    %3663 = vmatprep.subr.mxu0 0.0
    %3664 = vmatpush2.msra.mxu0 0.0
    %3665 = vmatprep.subr.mxu0 0.0
    %3666 = vmatpush2.msra.mxu0 0.0
    %3667 = vmatprep.subr.mxu0 0.0
    %3668 = vmatpush2.msra.mxu0 0.0
    %3669 = vmatprep.subr.mxu0 0.0
    %3670 = vmatpush2.msra.mxu0 0.0
    %3671 = vmatprep.subr.mxu0 0.0
    %3672 = vmatpush2.msra.mxu0 0.0
    %3673 = vmatprep.subr.mxu0 0.0
    %3674 = vmatpush2.msra.mxu0 0.0
    %3675 = vmatprep.subr.mxu0 0.0
    %3676 = vmatpush2.msra.mxu0 0.0
    %3677 = vmatprep.subr.mxu0 0.0
    %3678 = vmatpush2.msra.mxu0 0.0
    %3679 = vmatprep.subr.mxu0 0.0
    %3680 = vmatpush2.msra.mxu0 0.0
    %3681 = vmatprep.subr.mxu0 0.0
    %3682 = vmatpush2.msra.mxu0 0.0
    %3683 = vmatprep.subr.mxu0 0.0
    %3684 = vmatpush2.msra.mxu0 0.0
    %3685 = vmatprep.subr.mxu0 0.0
    %3686 = vmatpush2.msra.mxu0 0.0
    %3687 = vmatprep.mubr.f32.mxu0 0.0
    %3688 = vmatmul.mubr.f32.gmra.mxu0 %v3618
    %v3689 = vpop.f32.mrf.mxu0
    %v3690 = vadd.f32 %v3616, %v3689
    %v3691 = vpop.f32.mrf.mxu0
    %3692 = vmatprep.mubr.f32.mxu0 0.0
    %3693 = vmatmul.mubr.f32.gmra.mxu0 %v3621
    %v3694 = vpop.f32.mrf.mxu0
    %v3695 = vadd.f32 %v3616, %v3694
    %v3696 = vpop.f32.mrf.mxu0
    %3697 = vdwg.mxu0
    %v3698 = vmax.f32 %v3690, 0.0
    %v3699 = vmax.f32 %v3695, 0.0
    %v3701 = vsel %vm1838, %v3698, 0
    %v3704 = vsel %vm1838, %v3699, 0
    %3706 = vmatprep.subr.mxu0 0.0
    %3707 = vmatpush1.msra.mxu0 0.0
    %3708 = vmatprep.subr.mxu0 0.0
    %3709 = vmatpush1.msra.mxu0 0.0
    %3710 = vmatprep.subr.mxu0 0.0
    %3711 = vmatpush1.msra.mxu0 0.0
    %3712 = vmatprep.subr.mxu0 0.0
    %3713 = vmatpush1.msra.mxu0 0.0
    %3714 = vmatprep.subr.mxu0 0.0
    %3715 = vmatpush1.msra.mxu0 0.0
    %3716 = vmatprep.subr.mxu0 0.0
    %3717 = vmatpush1.msra.mxu0 0.0
    %3718 = vmatprep.subr.mxu0 0.0
    %3719 = vmatpush1.msra.mxu0 0.0
    %3720 = vmatprep.subr.mxu0 0.0
    %3721 = vmatpush1.msra.mxu0 0.0
    %3722 = vmatprep.subr.mxu0 0.0
    %3723 = vmatpush1.msra.mxu0 %v1951
    %3724 = vmatprep.subr.mxu0 0.0
    %3725 = vmatpush1.msra.mxu0 %v1950
    %3726 = vmatprep.subr.mxu0 0.0
    %3727 = vmatpush1.msra.mxu0 %v1949
    %3728 = vmatprep.subr.mxu0 0.0
    %3729 = vmatpush1.msra.mxu0 %v1948
    %3730 = vmatprep.subr.mxu0 0.0
    %3731 = vmatpush1.msra.mxu0 %v1947
    %3732 = vmatprep.subr.mxu0 0.0
    %3733 = vmatpush1.msra.mxu0 %v1946
    %3734 = vmatprep.subr.mxu0 0.0
    %3735 = vmatpush1.msra.mxu0 %v1945
    %3736 = vmatprep.subr.mxu0 0.0
    %3737 = vmatpush1.msra.mxu0 %v1944
    %3738 = vmatprep.subr.mxu0 0.0
    %3739 = vmatpush2.msra.mxu0 0.0
    %3740 = vmatprep.subr.mxu0 0.0
    %3741 = vmatpush2.msra.mxu0 0.0
    %3742 = vmatprep.subr.mxu0 0.0
    %3743 = vmatpush2.msra.mxu0 0.0
    %3744 = vmatprep.subr.mxu0 0.0
    %3745 = vmatpush2.msra.mxu0 0.0
    %3746 = vmatprep.subr.mxu0 0.0
    %3747 = vmatpush2.msra.mxu0 0.0
    %3748 = vmatprep.subr.mxu0 0.0
    %3749 = vmatpush2.msra.mxu0 0.0
    %3750 = vmatprep.subr.mxu0 0.0
    %3751 = vmatpush2.msra.mxu0 0.0
    %3752 = vmatprep.subr.mxu0 0.0
    %3753 = vmatpush2.msra.mxu0 0.0
    %3754 = vmatprep.subr.mxu0 0.0
    %3755 = vmatpush2.msra.mxu0 0.0
    %3756 = vmatprep.subr.mxu0 0.0
    %3757 = vmatpush2.msra.mxu0 0.0
    %3758 = vmatprep.subr.mxu0 0.0
    %3759 = vmatpush2.msra.mxu0 0.0
    %3760 = vmatprep.subr.mxu0 0.0
    %3761 = vmatpush2.msra.mxu0 0.0
    %3762 = vmatprep.subr.mxu0 0.0
    %3763 = vmatpush2.msra.mxu0 0.0
    %3764 = vmatprep.subr.mxu0 0.0
    %3765 = vmatpush2.msra.mxu0 0.0
    %3766 = vmatprep.subr.mxu0 0.0
    %3767 = vmatpush2.msra.mxu0 0.0
    %3768 = vmatprep.subr.mxu0 0.0
    %3769 = vmatpush2.msra.mxu0 0.0
    %3770 = vmatprep.mubr.f32.mxu0 0.0
    %3771 = vmatmul.mubr.f32.gmra.mxu0 %v3701
    %v3772 = vpop.f32.mrf.mxu0
    %v3773 = vadd.f32 0.0, %v3772
    %v3774 = vpop.f32.mrf.mxu0
    %3775 = vmatprep.mubr.f32.mxu0 0.0
    %3776 = vmatmul.mubr.f32.gmra.mxu0 %v3704
    %v3777 = vpop.f32.mrf.mxu0
    %v3778 = vadd.f32 0.0, %v3777
    %v3779 = vpop.f32.mrf.mxu0
    %3780 = vdwg.mxu0
    %v3781 = vadd.f32 %v2826, %v3773
    %v3782 = vadd.f32 %v3574, %v3778
    %v3783 = vlaneseq
    %v3784 = vshrl.u32 %v3783, 7
    %v3785 = vsub.s32 5, %v3784
    %v3786 = vrot.slane %v1942, %v3785
    %v3787 = vadd.f32 %v3781, %v3786
    %v3788 = vadd.f32 %v3782, %v3786
    %v3789 = vsel %vm77, %v3787, 0.0
    %3790 = vadd.xlane.f32.xlu0 %v3789
    %v3791 = vpop.xlane.xlu0 %3790
    %v3792 = vsel %vm77, %v3788, 0.0
    %3793 = vadd.xlane.f32.xlu0 %v3792
    %v3794 = vpop.xlane.xlu0 %3793
    %v3795 = vmul.f32 %v3791, %v84
    %v3796 = vmul.f32 %v3794, %v84
    %v3797 = vsub.f32 %v3787, %v3795
    %v3798 = vsub.f32 %v3788, %v3796
    %v3799 = vmul.f32 %v3797, %v3797
    %v3800 = vmul.f32 %v3798, %v3798
    %v3801 = vsel %vm77, %v3799, 0.0
    %3802 = vadd.xlane.f32.xlu0 %v3801
    %v3803 = vpop.xlane.xlu0 %3802
    %v3804 = vsel %vm77, %v3800, 0.0
    %3805 = vadd.xlane.f32.xlu0 %v3804
    %v3806 = vpop.xlane.xlu0 %3805
    %v3807 = vmul.f32 %v3803, 0.032258064
    %v3808 = vmul.f32 %v3806, 0.032258064
    %v3809 = vlaneseq
    %v3810 = vshrl.u32 %v3809, 7
    %v3811 = vsub.s32 0, %v3810
    %v3812 = vrot.slane %v55, %v3811
    %v3813 = vmul.f32 %v3812, %v3797
    %v3814 = vmul.f32 %v3812, %v3798
    %v3815 = vadd.f32 %v3807, 1e-06
    %v3816 = vadd.f32 %v3808, 1e-06
    %v3817 = vrsqrt.pop %v3815
    %v3818 = vrsqrt.pop %v3816
    %v3819 = vmul.f32 %v3813, %v3817
    %v3820 = vmul.f32 %v3814, %v3818
    %v3821 = vlaneseq
    %v3822 = vshrl.u32 %v3821, 7
    %v3823 = vsub.s32 1, %v3822
    %v3824 = vrot.slane %v55, %v3823
    %v3825 = vadd.f32 %v3819, %v3824
    %v3826 = vadd.f32 %v3820, %v3824
    %3827 = vst.msk [vmem:[#allocation7] sm:$0xff] %vm77, %v3825
    %3828 = vst.msk [vmem:[#allocation7 + $0x8] sm:$0xff] %vm77, %v3826
    // Predicated region
    $region34: #{encoder_forward.1} parent=1 // pred_check
      _
    $region35: #{encoder_forward.1} parent=1 // pred_check_branch
      %3830 = sbr.rel (0) target = $region37
    $region36: #{encoder_forward.1} parent=1 // pred_region
      %s3832 = ssub.s32 256, 256
      %3833 = vsyncadd [#allocation4], %s3832
      %s3834 = sshll.u32 [#allocation7], 4
      %s3835 = int_to_ptr.vmem [resolvable:$true] %s3834
      %3840 = dma.vmem_to_hbm [thread:$0]  %s3835, 256, %s6, [#allocation4], 128, 128, 8
    $region37: #{encoder_forward.1} parent=1 // pred_fallthru
      _
    // Predicated region
    $region38: #{encoder_forward.1} parent=1 // pred_check
      _
    $region39: #{encoder_forward.1} parent=1 // pred_check_branch
      %3842 = sbr.rel (0) target = $region41
    $region40: #{encoder_forward.1} parent=1 // pred_region
      %3843 = dma.done [#allocation4], 256
    $region41: #{encoder_forward.1} parent=1 // pred_fallthru
      _
    %3844 = vsyncpa [#allocation3], 1
    %3845 = vsyncpa [#allocation6], 1
    %3846 = vsyncpa [#allocation4], 1

</llo_original>
